<compile_context>
chip_gen: v7x
topology: tpu7x:2x2x1
jax: 0.10.0
libtpu: 0.0.40
codegen_flags: <defaults>
</compile_context>

<pallas_src>
import math
from functools import partial

import numpy as np
import jax
import jax.numpy as jnp
from jax.experimental import pallas as pl
from jax.experimental.pallas import tpu as pltpu


def decoder_layer_kernel(x_ref, maskhs_ref, hm_ref, cos_ref, sin_ref,
                         g1_ref, be1_ref,
                         w5_ref, b5_ref,
                         wout_ref, bout_ref,
                         g2_ref, be2_ref,
                         w1_ref, bf1_ref,
                         w2_ref, bf2_ref,
                         o_ref, *, num_heads, seq_len):
    f32 = jnp.float32
    bf16 = jnp.bfloat16
    N, D = x_ref.shape                 # N = batch_block * seq_len
    H = num_heads
    S = seq_len
    BB = N // S
    hd = D // H
    eps = 1e-5

    x = x_ref[...]                     # (N, D) f32

    def layernorm(v, g, b):
        mu = jnp.mean(v, axis=-1, keepdims=True)
        c = v - mu
        var = jnp.mean(c * c, axis=-1, keepdims=True)
        return c * jax.lax.rsqrt(var + eps) * g + b

    # ---- attention: x + out_proj(softmax(rope(q) rope(k)^T / sqrt(hd)) v) ----
    y = layernorm(x, g1_ref[...], be1_ref[...])
    yb = y.astype(bf16)                # bf16 only at MXU inputs; accumulate f32

    def proj(i):                       # (N, D) bf16 x (D, D) bf16 -> (N, D) f32
        return jnp.dot(yb, w5_ref[i], preferred_element_type=f32) + b5_ref[i]

    q, k, v = proj(0), proj(1), proj(2)
    q_rot, k_rot = proj(3), proj(4)    # projections through Wq@R / Wk@R (rotate-half folded)

    cos_b = cos_ref[...][None]         # (1, S, D) head-major, broadcast over batch
    sin_b = sin_ref[...][None]
    q3 = q.reshape(BB, S, D) * cos_b + q_rot.reshape(BB, S, D) * sin_b
    k3 = k.reshape(BB, S, D) * cos_b + k_rot.reshape(BB, S, D) * sin_b
    v3 = v.reshape(BB, S, D)

    # Block-diagonal head-masked scores: row block h of qm has only head h's
    # columns alive, so the full-D contraction yields per-head scores while D
    # stays on lanes (no per-head lane slicing / relayout).
    hm = hm_ref[...]                                   # (H*S, D) 0/1 head mask
    q_rep = jnp.concatenate([q3] * H, axis=1)          # (BB, H*S, D) sublane copies
    qm = q_rep * hm[None]

    scale = 1.0 / math.sqrt(hd)
    s = jnp.einsum('bmd,bkd->bmk', qm, k3,
                   preferred_element_type=f32) * scale     # (BB, H*S, S)
    # large finite negative (not -inf): avoids NaN for fully-masked rows
    s = jnp.where(maskhs_ref[...][None] != 0, -1e30, s)
    s = s - jnp.max(s, axis=-1, keepdims=True)
    p = jnp.exp(s)
    p = p * pl.reciprocal(jnp.sum(p, axis=-1, keepdims=True), approx=True)

    c = jnp.einsum('bmk,bkd->bmd', p, v3,
                   preferred_element_type=f32)              # (BB, H*S, D)
    cm = c * hm[None]                                       # keep head h's columns only
    ctx3 = cm[:, 0:S, :]                                    # sum head blocks back into (BB, S, D)
    for h in range(1, H):
        ctx3 = ctx3 + cm[:, h * S:(h + 1) * S, :]
    ctx = ctx3.reshape(N, D)                                # head-major columns = 'b s (h d)'

    attn = jnp.dot(ctx.astype(bf16), wout_ref[...],
                   preferred_element_type=f32) + bout_ref[...]
    x1 = x + attn

    # ---- feed-forward: x1 + fc2(gelu(fc1(norm2(x1)))) ----
    y2 = layernorm(x1, g2_ref[...], be2_ref[...])
    h1 = jnp.dot(y2.astype(bf16), w1_ref[...],
                 preferred_element_type=f32) + bf1_ref[...]
    # exact GELU (erf), matching nn.GELU() default
    h1 = 0.5 * h1 * (1.0 + jax.lax.erf(h1 * (1.0 / math.sqrt(2.0))))
    ff = jnp.dot(h1.astype(bf16), w2_ref[...],
                 preferred_element_type=f32) + bf2_ref[...]

    o_ref[...] = x1 + ff


def transformer_decoder_layer(x, attn_mask, params, cos, sin,
                              *, batch_block=None, weight_dtype=jnp.bfloat16):
    f32 = jnp.float32
    B, S, D = x.shape
    hd = cos.shape[-1]
    H = D // hd
    half = hd // 2

    # At small M the layer is weight-DMA bound: keep the whole batch in one grid
    # step (grid=(1,)).  Set batch_block=B//2 to shard across v7x's 2 TCs only
    # when per-core matmul work exceeds the duplicated weight DMA.
    BB = B if batch_block is None else batch_block
    assert B % BB == 0

    # head-major (S, D) rotary tables (tiled over heads once, not over batch)
    cos_hd = jnp.tile(cos.astype(f32), (1, H))      # (S, D)
    sin_hd = jnp.tile(sin.astype(f32), (1, H))

    # rotate-half folded into the projection: rope(t) = t*cos + (t @ R)*sin, and
    # t = y@W + b  =>  t@R = y@(W@R) + b@R.  Stack W@R into the bf16 weight stack.
    R = np.zeros((D, D), np.float32)
    for h in range(H):
        b0 = h * hd
        for j in range(half):
            R[b0 + j + half, b0 + j] = -1.0          # out[:, j]      = -t[:, j+half]
            R[b0 + j, b0 + j + half] = 1.0           # out[:, j+half] =  t[:, j]
    R = jnp.asarray(R)

    wqkv = params['wqkv'].astype(f32)
    bqkv = params['bqkv'].astype(f32)
    Wq, Wk, Wv = wqkv[:, :D], wqkv[:, D:2 * D], wqkv[:, 2 * D:]
    bq, bk, bv = bqkv[:, :D], bqkv[:, D:2 * D], bqkv[:, 2 * D:]
    w5 = jnp.stack([Wq, Wk, Wv, Wq @ R, Wk @ R], axis=0).astype(weight_dtype)  # (5, D, D)
    b5 = jnp.stack([bq, bk, bv, bq @ R, bk @ R], axis=0).astype(f32)           # (5, 1, D)

    wout = params['wout'].astype(weight_dtype)
    w1 = params['w1'].astype(weight_dtype)
    w2 = params['w2'].astype(weight_dtype)

    # per-head column masks in score-row layout (H*S, D)
    hm = np.zeros((H * S, D), np.float32)
    for h in range(H):
        hm[h * S:(h + 1) * S, h * hd:(h + 1) * hd] = 1.0
    hm = jnp.asarray(hm)

    # causal/user mask tiled over head blocks
    mask_hs = jnp.tile(attn_mask.astype(jnp.int32), (H, 1))   # (H*S, S)

    x2 = x.reshape(B * S, D).astype(f32)                        # fold batch into M

    inputs = (x2, mask_hs, hm, cos_hd, sin_hd,
              params['g1'], params['b1'],
              w5, b5,
              wout, params['bout'],
              params['g2'], params['b2'],
              w1, params['bf1'],
              w2, params['bf2'])

    def full_spec(a):
        n = a.ndim
        return pl.BlockSpec(a.shape, lambda b, n=n: (0,) * n)

    in_specs = [pl.BlockSpec((BB * S, D), lambda b: (b, 0))]
    in_specs += [full_spec(a) for a in inputs[1:]]

    kernel = partial(decoder_layer_kernel, num_heads=H, seq_len=S)

    out2 = pl.pallas_call(
        kernel,
        out_shape=jax.ShapeDtypeStruct((B * S, D), f32),
        grid=(B // BB,),
        in_specs=in_specs,
        out_specs=pl.BlockSpec((BB * S, D), lambda b: (b, 0)),
        compiler_params=pltpu.CompilerParams(
            # "parallel": a multi-block batch grid can shard across v7x's 2 TCs.
            dimension_semantics=("parallel",),
            vmem_limit_bytes=32 * 1024 * 1024),
    )(*inputs)
    return out2.reshape(B, S, D)


# ------------------------- pure-JAX reference -------------------------
def reference_forward(x, attn_mask, params, cos, sin):
    def layernorm(v, g, b):
        mu = jnp.mean(v, axis=-1, keepdims=True)
        var = jnp.mean((v - mu) ** 2, axis=-1, keepdims=True)
        return (v - mu) / jnp.sqrt(var + 1e-5) * g + b

    B, S, D = x.shape
    hd = cos.shape[-1]
    H = D // hd

    y = layernorm(x, params['g1'], params['b1'])
    qkv = y @ params['wqkv'] + params['bqkv']
    q, k, v = qkv[..., :D], qkv[..., D:2 * D], qkv[..., 2 * D:]
    q = q.reshape(B, S, H, hd)
    k = k.reshape(B, S, H, hd)
    v = v.reshape(B, S, H, hd)

    def rope(t):
        half = hd // 2
        t1, t2 = t[..., :half], t[..., half:]
        rotated = jnp.concatenate([-t2, t1], axis=-1)
        c = cos[None, :, None, :]
        s_ = sin[None, :, None, :]
        return t * c + rotated * s_

    q, k = rope(q), rope(k)
    s = jnp.einsum('bqhd,bkhd->bhqk', q, k) / math.sqrt(hd)
    s = jnp.where(attn_mask[None, None] != 0, -jnp.inf, s)
    p = jax.nn.softmax(s, axis=-1)
    ctx = jnp.einsum('bhqk,bkhd->bqhd', p, v).reshape(B, S, D)
    attn_out = ctx @ params['wout'] + params['bout']
    x1 = x + attn_out
    y2 = layernorm(x1, params['g2'], params['b2'])
    h1 = y2 @ params['w1'] + params['bf1']
    h1 = 0.5 * h1 * (1.0 + jax.lax.erf(h1 / math.sqrt(2.0)))
    return x1 + h1 @ params['w2'] + params['bf2']


if __name__ == "__main__":
    B, S, D = 2, 8, 64          # batch, seq, d_model
    H = 8                       # num_heads (fixed by the module)
    hd = D // H                 # head_dim
    DFF = 3072                  # fixed FF hidden size in FeedForwardBlock

    key = jax.random.PRNGKey(0)
    ks = jax.random.split(key, 16)

    def w(k_, shape, std=0.02):
        return (std * jax.random.normal(k_, shape)).astype(jnp.float32)

    params = {
        'g1':   1.0 + w(ks[0], (1, D), 0.01),
        'b1':   w(ks[1], (1, D), 0.01),
        'wqkv': w(ks[2], (D, 3 * D)),
        'bqkv': w(ks[3], (1, 3 * D), 0.01),
        'wout': w(ks[4], (D, D)),
        'bout': w(ks[5], (1, D), 0.01),
        'g2':   1.0 + w(ks[6], (1, D), 0.01),
        'b2':   w(ks[7], (1, D), 0.01),
        'w1':   w(ks[8], (D, DFF)),
        'bf1':  w(ks[9], (1, DFF), 0.01),
        'w2':   w(ks[10], (DFF, D)),
        'bf2':  w(ks[11], (1, D), 0.01),
    }

    x = jax.random.normal(ks[12], (B, S, D), dtype=jnp.float32)

    # causal mask: 1 where attention is disallowed (j > i)
    row = jnp.arange(S)[:, None]
    col = jnp.arange(S)[None, :]
    attn_mask = (col > row).astype(jnp.int32)

    # rotary tables (non-interleaved / rotate-half convention), duplicated halves
    inv_freq = 1.0 / (10000.0 ** (jnp.arange(0, hd, 2, dtype=jnp.float32) / hd))
    t = jnp.arange(S, dtype=jnp.float32)
    freqs = jnp.outer(t, inv_freq)                        # (S, hd/2)
    cos = jnp.concatenate([jnp.cos(freqs)] * 2, axis=-1)  # (S, hd)
    sin = jnp.concatenate([jnp.sin(freqs)] * 2, axis=-1)  # (S, hd)

    out = transformer_decoder_layer(x, attn_mask, params, cos, sin)
    out = jax.block_until_ready(out)
    assert out.shape == (B, S, D)

    # exact f32 module semantics (kernel uses bf16 weights + bf16 MXU inputs,
    # so compare with a tolerance that covers that quantization)
    ref_f32 = reference_forward(x, attn_mask, params, cos, sin)
    err = float(jnp.max(jnp.abs(out - ref_f32)))
    assert jnp.allclose(out, ref_f32, rtol=2e-2, atol=2e-2), \
        f"max abs err vs f32 reference {err}"

    print("KERNEL_OK")
</pallas_src>

<mosaic_0001>
module attributes {stable_mosaic.version = 11 : i64} {
  func.func @decoder_layer_kernel(%arg0: i32, %arg1: memref<16x64xf32, #tpu.memory_space<vmem>>, %arg2: memref<64x8xi32, #tpu.memory_space<vmem>>, %arg3: memref<64x64xf32, #tpu.memory_space<vmem>>, %arg4: memref<8x64xf32, #tpu.memory_space<vmem>>, %arg5: memref<8x64xf32, #tpu.memory_space<vmem>>, %arg6: memref<1x64xf32, #tpu.memory_space<vmem>>, %arg7: memref<1x64xf32, #tpu.memory_space<vmem>>, %arg8: memref<5x64x64xbf16, #tpu.memory_space<vmem>>, %arg9: memref<5x1x64xf32, #tpu.memory_space<vmem>>, %arg10: memref<64x64xbf16, #tpu.memory_space<vmem>>, %arg11: memref<1x64xf32, #tpu.memory_space<vmem>>, %arg12: memref<1x64xf32, #tpu.memory_space<vmem>>, %arg13: memref<1x64xf32, #tpu.memory_space<vmem>>, %arg14: memref<64x3072xbf16, #tpu.memory_space<vmem>>, %arg15: memref<1x3072xf32, #tpu.memory_space<vmem>>, %arg16: memref<3072x64xbf16, #tpu.memory_space<vmem>>, %arg17: memref<1x64xf32, #tpu.memory_space<vmem>>, %arg18: memref<16x64xf32, #tpu.memory_space<vmem>>) attributes {dimension_semantics = [#tpu.dimension_semantics<parallel>], iteration_bounds = array<i64: 1>, scalar_prefetch = 0 : i64, scratch_operands = 0 : i64, tpu.core_type = #tpu.core_type<tc>, window_params = [{transform_indices = @transform_0, window_bounds = array<i64: 16, 64>}, {pipeline_mode = #tpu.pipeline_mode<synchronous>, transform_indices = @transform_1, window_bounds = array<i64: 64, 8>}, {pipeline_mode = #tpu.pipeline_mode<synchronous>, transform_indices = @transform_2, window_bounds = array<i64: 64, 64>}, {pipeline_mode = #tpu.pipeline_mode<synchronous>, transform_indices = @transform_3, window_bounds = array<i64: 8, 64>}, {pipeline_mode = #tpu.pipeline_mode<synchronous>, transform_indices = @transform_4, window_bounds = array<i64: 8, 64>}, {pipeline_mode = #tpu.pipeline_mode<synchronous>, transform_indices = @transform_5, window_bounds = array<i64: 1, 64>}, {pipeline_mode = #tpu.pipeline_mode<synchronous>, transform_indices = @transform_6, window_bounds = array<i64: 1, 64>}, {pipeline_mode = #tpu.pipeline_mode<synchronous>, transform_indices = @transform_7, window_bounds = array<i64: 5, 64, 64>}, {pipeline_mode = #tpu.pipeline_mode<synchronous>, transform_indices = @transform_8, window_bounds = array<i64: 5, 1, 64>}, {pipeline_mode = #tpu.pipeline_mode<synchronous>, transform_indices = @transform_9, window_bounds = array<i64: 64, 64>}, {pipeline_mode = #tpu.pipeline_mode<synchronous>, transform_indices = @transform_10, window_bounds = array<i64: 1, 64>}, {pipeline_mode = #tpu.pipeline_mode<synchronous>, transform_indices = @transform_11, window_bounds = array<i64: 1, 64>}, {pipeline_mode = #tpu.pipeline_mode<synchronous>, transform_indices = @transform_12, window_bounds = array<i64: 1, 64>}, {pipeline_mode = #tpu.pipeline_mode<synchronous>, transform_indices = @transform_13, window_bounds = array<i64: 64, 3072>}, {pipeline_mode = #tpu.pipeline_mode<synchronous>, transform_indices = @transform_14, window_bounds = array<i64: 1, 3072>}, {pipeline_mode = #tpu.pipeline_mode<synchronous>, transform_indices = @transform_15, window_bounds = array<i64: 3072, 64>}, {pipeline_mode = #tpu.pipeline_mode<synchronous>, transform_indices = @transform_16, window_bounds = array<i64: 1, 64>}, {transform_indices = @transform_17, window_bounds = array<i64: 16, 64>}]} {
    %c0 = arith.constant 0 : index
    %c0_0 = arith.constant 0 : index
    %0 = vector.load %arg1[%c0, %c0_0] : memref<16x64xf32, #tpu.memory_space<vmem>>, vector<16x64xf32>
    %c0_1 = arith.constant 0 : index
    %c0_2 = arith.constant 0 : index
    %1 = vector.load %arg6[%c0_1, %c0_2] : memref<1x64xf32, #tpu.memory_space<vmem>>, vector<1x64xf32>
    %c0_3 = arith.constant 0 : index
    %c0_4 = arith.constant 0 : index
    %2 = vector.load %arg7[%c0_3, %c0_4] : memref<1x64xf32, #tpu.memory_space<vmem>>, vector<1x64xf32>
    %cst = arith.constant dense<0.000000e+00> : vector<16xf32>
    %3 = vector.multi_reduction <add>, %0, %cst [1] : vector<16x64xf32> to vector<16xf32>
    %4 = vector.shape_cast %3 : vector<16xf32> to vector<16x1xf32>
    %cst_5 = arith.constant 6.400000e+01 : f32
    %5 = vector.broadcast %cst_5 : f32 to vector<16x1xf32>
    %6 = arith.divf %4, %5 : vector<16x1xf32>
    %7 = vector.broadcast %6 : vector<16x1xf32> to vector<16x64xf32>
    %8 = arith.subf %0, %7 : vector<16x64xf32>
    %9 = arith.mulf %8, %8 : vector<16x64xf32>
    %cst_6 = arith.constant dense<0.000000e+00> : vector<16xf32>
    %10 = vector.multi_reduction <add>, %9, %cst_6 [1] : vector<16x64xf32> to vector<16xf32>
    %11 = vector.shape_cast %10 : vector<16xf32> to vector<16x1xf32>
    %cst_7 = arith.constant 6.400000e+01 : f32
    %12 = vector.broadcast %cst_7 : f32 to vector<16x1xf32>
    %13 = arith.divf %11, %12 : vector<16x1xf32>
    %cst_8 = arith.constant 9.99999974E-6 : f32
    %14 = vector.broadcast %cst_8 : f32 to vector<16x1xf32>
    %15 = arith.addf %13, %14 : vector<16x1xf32>
    %16 = math.rsqrt %15 : vector<16x1xf32>
    %17 = vector.broadcast %16 : vector<16x1xf32> to vector<16x64xf32>
    %18 = arith.mulf %8, %17 : vector<16x64xf32>
    %19 = vector.broadcast %1 : vector<1x64xf32> to vector<16x64xf32>
    %20 = arith.mulf %18, %19 : vector<16x64xf32>
    %21 = vector.broadcast %2 : vector<1x64xf32> to vector<16x64xf32>
    %22 = arith.addf %20, %21 : vector<16x64xf32>
    %23 = arith.truncf %22 : vector<16x64xf32> to vector<16x64xbf16>
    %c0_9 = arith.constant 0 : index
    %c0_10 = arith.constant 0 : index
    %c0_11 = arith.constant 0 : index
    %24 = vector.load %arg8[%c0_9, %c0_10, %c0_11] : memref<5x64x64xbf16, #tpu.memory_space<vmem>>, vector<1x64x64xbf16>
    %25 = vector.shape_cast %24 : vector<1x64x64xbf16> to vector<64x64xbf16>
    %cst_12 = arith.constant dense<0.000000e+00> : vector<16x64xf32>
    %26 = tpu.matmul %23, %25, %cst_12 {dimension_numbers = #tpu.dot_dimension_numbers<[1], [0], [0], [1], [0, 0, 1, 1], [], []>} : vector<16x64xbf16>, vector<64x64xbf16>, vector<16x64xf32> -> vector<16x64xf32>
    %c0_13 = arith.constant 0 : index
    %c0_14 = arith.constant 0 : index
    %c0_15 = arith.constant 0 : index
    %27 = vector.load %arg9[%c0_13, %c0_14, %c0_15] : memref<5x1x64xf32, #tpu.memory_space<vmem>>, vector<1x1x64xf32>
    %28 = vector.shape_cast %27 : vector<1x1x64xf32> to vector<1x64xf32>
    %29 = vector.broadcast %28 : vector<1x64xf32> to vector<16x64xf32>
    %30 = arith.addf %26, %29 : vector<16x64xf32>
    %c1 = arith.constant 1 : index
    %c0_16 = arith.constant 0 : index
    %c0_17 = arith.constant 0 : index
    %31 = vector.load %arg8[%c1, %c0_16, %c0_17] : memref<5x64x64xbf16, #tpu.memory_space<vmem>>, vector<1x64x64xbf16>
    %32 = vector.shape_cast %31 : vector<1x64x64xbf16> to vector<64x64xbf16>
    %cst_18 = arith.constant dense<0.000000e+00> : vector<16x64xf32>
    %33 = tpu.matmul %23, %32, %cst_18 {dimension_numbers = #tpu.dot_dimension_numbers<[1], [0], [0], [1], [0, 0, 1, 1], [], []>} : vector<16x64xbf16>, vector<64x64xbf16>, vector<16x64xf32> -> vector<16x64xf32>
    %c1_19 = arith.constant 1 : index
    %c0_20 = arith.constant 0 : index
    %c0_21 = arith.constant 0 : index
    %34 = vector.load %arg9[%c1_19, %c0_20, %c0_21] : memref<5x1x64xf32, #tpu.memory_space<vmem>>, vector<1x1x64xf32>
    %35 = vector.shape_cast %34 : vector<1x1x64xf32> to vector<1x64xf32>
    %36 = vector.broadcast %35 : vector<1x64xf32> to vector<16x64xf32>
    %37 = arith.addf %33, %36 : vector<16x64xf32>
    %c2 = arith.constant 2 : index
    %c0_22 = arith.constant 0 : index
    %c0_23 = arith.constant 0 : index
    %38 = vector.load %arg8[%c2, %c0_22, %c0_23] : memref<5x64x64xbf16, #tpu.memory_space<vmem>>, vector<1x64x64xbf16>
    %39 = vector.shape_cast %38 : vector<1x64x64xbf16> to vector<64x64xbf16>
    %cst_24 = arith.constant dense<0.000000e+00> : vector<16x64xf32>
    %40 = tpu.matmul %23, %39, %cst_24 {dimension_numbers = #tpu.dot_dimension_numbers<[1], [0], [0], [1], [0, 0, 1, 1], [], []>} : vector<16x64xbf16>, vector<64x64xbf16>, vector<16x64xf32> -> vector<16x64xf32>
    %c2_25 = arith.constant 2 : index
    %c0_26 = arith.constant 0 : index
    %c0_27 = arith.constant 0 : index
    %41 = vector.load %arg9[%c2_25, %c0_26, %c0_27] : memref<5x1x64xf32, #tpu.memory_space<vmem>>, vector<1x1x64xf32>
    %42 = vector.shape_cast %41 : vector<1x1x64xf32> to vector<1x64xf32>
    %43 = vector.broadcast %42 : vector<1x64xf32> to vector<16x64xf32>
    %44 = arith.addf %40, %43 : vector<16x64xf32>
    %c3 = arith.constant 3 : index
    %c0_28 = arith.constant 0 : index
    %c0_29 = arith.constant 0 : index
    %45 = vector.load %arg8[%c3, %c0_28, %c0_29] : memref<5x64x64xbf16, #tpu.memory_space<vmem>>, vector<1x64x64xbf16>
    %46 = vector.shape_cast %45 : vector<1x64x64xbf16> to vector<64x64xbf16>
    %cst_30 = arith.constant dense<0.000000e+00> : vector<16x64xf32>
    %47 = tpu.matmul %23, %46, %cst_30 {dimension_numbers = #tpu.dot_dimension_numbers<[1], [0], [0], [1], [0, 0, 1, 1], [], []>} : vector<16x64xbf16>, vector<64x64xbf16>, vector<16x64xf32> -> vector<16x64xf32>
    %c3_31 = arith.constant 3 : index
    %c0_32 = arith.constant 0 : index
    %c0_33 = arith.constant 0 : index
    %48 = vector.load %arg9[%c3_31, %c0_32, %c0_33] : memref<5x1x64xf32, #tpu.memory_space<vmem>>, vector<1x1x64xf32>
    %49 = vector.shape_cast %48 : vector<1x1x64xf32> to vector<1x64xf32>
    %50 = vector.broadcast %49 : vector<1x64xf32> to vector<16x64xf32>
    %51 = arith.addf %47, %50 : vector<16x64xf32>
    %c4 = arith.constant 4 : index
    %c0_34 = arith.constant 0 : index
    %c0_35 = arith.constant 0 : index
    %52 = vector.load %arg8[%c4, %c0_34, %c0_35] : memref<5x64x64xbf16, #tpu.memory_space<vmem>>, vector<1x64x64xbf16>
    %53 = vector.shape_cast %52 : vector<1x64x64xbf16> to vector<64x64xbf16>
    %cst_36 = arith.constant dense<0.000000e+00> : vector<16x64xf32>
    %54 = tpu.matmul %23, %53, %cst_36 {dimension_numbers = #tpu.dot_dimension_numbers<[1], [0], [0], [1], [0, 0, 1, 1], [], []>} : vector<16x64xbf16>, vector<64x64xbf16>, vector<16x64xf32> -> vector<16x64xf32>
    %c4_37 = arith.constant 4 : index
    %c0_38 = arith.constant 0 : index
    %c0_39 = arith.constant 0 : index
    %55 = vector.load %arg9[%c4_37, %c0_38, %c0_39] : memref<5x1x64xf32, #tpu.memory_space<vmem>>, vector<1x1x64xf32>
    %56 = vector.shape_cast %55 : vector<1x1x64xf32> to vector<1x64xf32>
    %57 = vector.broadcast %56 : vector<1x64xf32> to vector<16x64xf32>
    %58 = arith.addf %54, %57 : vector<16x64xf32>
    %c0_40 = arith.constant 0 : index
    %c0_41 = arith.constant 0 : index
    %59 = vector.load %arg4[%c0_40, %c0_41] : memref<8x64xf32, #tpu.memory_space<vmem>>, vector<8x64xf32>
    %60 = vector.shape_cast %59 : vector<8x64xf32> to vector<1x8x64xf32>
    %c0_42 = arith.constant 0 : index
    %c0_43 = arith.constant 0 : index
    %61 = vector.load %arg5[%c0_42, %c0_43] : memref<8x64xf32, #tpu.memory_space<vmem>>, vector<8x64xf32>
    %62 = vector.shape_cast %61 : vector<8x64xf32> to vector<1x8x64xf32>
    %63 = vector.shape_cast %30 : vector<16x64xf32> to vector<2x8x64xf32>
    %64 = vector.broadcast %60 : vector<1x8x64xf32> to vector<2x8x64xf32>
    %65 = arith.mulf %63, %64 : vector<2x8x64xf32>
    %66 = vector.shape_cast %51 : vector<16x64xf32> to vector<2x8x64xf32>
    %67 = vector.broadcast %62 : vector<1x8x64xf32> to vector<2x8x64xf32>
    %68 = arith.mulf %66, %67 : vector<2x8x64xf32>
    %69 = arith.addf %65, %68 : vector<2x8x64xf32>
    %70 = vector.shape_cast %37 : vector<16x64xf32> to vector<2x8x64xf32>
    %71 = vector.broadcast %60 : vector<1x8x64xf32> to vector<2x8x64xf32>
    %72 = arith.mulf %70, %71 : vector<2x8x64xf32>
    %73 = vector.shape_cast %58 : vector<16x64xf32> to vector<2x8x64xf32>
    %74 = vector.broadcast %62 : vector<1x8x64xf32> to vector<2x8x64xf32>
    %75 = arith.mulf %73, %74 : vector<2x8x64xf32>
    %76 = arith.addf %72, %75 : vector<2x8x64xf32>
    %77 = vector.shape_cast %44 : vector<16x64xf32> to vector<2x8x64xf32>
    %c0_44 = arith.constant 0 : index
    %c0_45 = arith.constant 0 : index
    %78 = vector.load %arg3[%c0_44, %c0_45] : memref<64x64xf32, #tpu.memory_space<vmem>>, vector<64x64xf32>
    %79 = tpu.concatenate %69, %69, %69, %69, %69, %69, %69, %69 in 1 : vector<2x8x64xf32>, vector<2x8x64xf32>, vector<2x8x64xf32>, vector<2x8x64xf32>, vector<2x8x64xf32>, vector<2x8x64xf32>, vector<2x8x64xf32>, vector<2x8x64xf32> -> vector<2x64x64xf32>
    %80 = vector.shape_cast %78 : vector<64x64xf32> to vector<1x64x64xf32>
    %81 = vector.broadcast %80 : vector<1x64x64xf32> to vector<2x64x64xf32>
    %82 = arith.mulf %79, %81 : vector<2x64x64xf32>
    "tpu.trace_start"() <{level = 10 : i32, message = "bmd,bkd->bmk"}> : () -> ()
    %cst_46 = arith.constant dense<0.000000e+00> : vector<2x64x8xf32>
    %83 = tpu.matmul %82, %76, %cst_46 {dimension_numbers = #tpu.dot_dimension_numbers<[2], [2], [1], [1], [0, 0, 0, 1, 1, 1], [0], [0]>} : vector<2x64x64xf32>, vector<2x8x64xf32>, vector<2x64x8xf32> -> vector<2x64x8xf32>
    "tpu.trace_stop"() : () -> ()
    %cst_47 = arith.constant 0.353553385 : f32
    %84 = vector.broadcast %cst_47 : f32 to vector<2x64x8xf32>
    %85 = arith.mulf %83, %84 : vector<2x64x8xf32>
    %c0_48 = arith.constant 0 : index
    %c0_49 = arith.constant 0 : index
    %86 = vector.load %arg2[%c0_48, %c0_49] : memref<64x8xi32, #tpu.memory_space<vmem>>, vector<64x8xi32>
    %87 = vector.shape_cast %86 : vector<64x8xi32> to vector<1x64x8xi32>
    %c0_i32 = arith.constant 0 : i32
    %88 = vector.broadcast %c0_i32 : i32 to vector<1x64x8xi32>
    %89 = arith.cmpi ne, %87, %88 : vector<1x64x8xi32>
    %cst_50 = arith.constant -1.000000e+30 : f32
    %90 = vector.shape_cast %89 : vector<1x64x8xi1> to vector<1x64x8xi1>
    %91 = vector.broadcast %90 : vector<1x64x8xi1> to vector<2x64x8xi1>
    %92 = vector.broadcast %cst_50 : f32 to vector<2x64x8xf32>
    %93 = arith.select %91, %92, %85 : vector<2x64x8xi1>, vector<2x64x8xf32>
    %cst_51 = arith.constant dense<0xFF800000> : vector<2x64xf32>
    %94 = vector.multi_reduction <maximumf>, %93, %cst_51 [2] : vector<2x64x8xf32> to vector<2x64xf32>
    %95 = vector.shape_cast %94 : vector<2x64xf32> to vector<2x64x1xf32>
    %96 = vector.broadcast %95 : vector<2x64x1xf32> to vector<2x64x8xf32>
    %97 = arith.subf %93, %96 : vector<2x64x8xf32>
    %98 = math.exp %97 : vector<2x64x8xf32>
    %cst_52 = arith.constant dense<0.000000e+00> : vector<2x64xf32>
    %99 = vector.multi_reduction <add>, %98, %cst_52 [2] : vector<2x64x8xf32> to vector<2x64xf32>
    %100 = vector.shape_cast %99 : vector<2x64xf32> to vector<2x64x1xf32>
    %101 = tpu.reciprocal %100 {approx = true} : vector<2x64x1xf32> -> vector<2x64x1xf32>
    %102 = vector.broadcast %101 : vector<2x64x1xf32> to vector<2x64x8xf32>
    %103 = arith.mulf %98, %102 : vector<2x64x8xf32>
    "tpu.trace_start"() <{level = 10 : i32, message = "bmk,bkd->bmd"}> : () -> ()
    %cst_53 = arith.constant dense<0.000000e+00> : vector<2x64x64xf32>
    %104 = tpu.matmul %103, %77, %cst_53 {dimension_numbers = #tpu.dot_dimension_numbers<[2], [1], [1], [2], [0, 0, 0, 1, 1, 2], [0], [0]>} : vector<2x64x8xf32>, vector<2x8x64xf32>, vector<2x64x64xf32> -> vector<2x64x64xf32>
    "tpu.trace_stop"() : () -> ()
    %105 = vector.shape_cast %78 : vector<64x64xf32> to vector<1x64x64xf32>
    %106 = vector.broadcast %105 : vector<1x64x64xf32> to vector<2x64x64xf32>
    %107 = arith.mulf %104, %106 : vector<2x64x64xf32>
    %108 = vector.extract_strided_slice %107 {offsets = [0, 0, 0], sizes = [2, 8, 64], strides = [1, 1, 1]} : vector<2x64x64xf32> to vector<2x8x64xf32>
    %109 = vector.extract_strided_slice %107 {offsets = [0, 8, 0], sizes = [2, 8, 64], strides = [1, 1, 1]} : vector<2x64x64xf32> to vector<2x8x64xf32>
    %110 = arith.addf %108, %109 : vector<2x8x64xf32>
    %111 = vector.extract_strided_slice %107 {offsets = [0, 16, 0], sizes = [2, 8, 64], strides = [1, 1, 1]} : vector<2x64x64xf32> to vector<2x8x64xf32>
    %112 = arith.addf %110, %111 : vector<2x8x64xf32>
    %113 = vector.extract_strided_slice %107 {offsets = [0, 24, 0], sizes = [2, 8, 64], strides = [1, 1, 1]} : vector<2x64x64xf32> to vector<2x8x64xf32>
    %114 = arith.addf %112, %113 : vector<2x8x64xf32>
    %115 = vector.extract_strided_slice %107 {offsets = [0, 32, 0], sizes = [2, 8, 64], strides = [1, 1, 1]} : vector<2x64x64xf32> to vector<2x8x64xf32>
    %116 = arith.addf %114, %115 : vector<2x8x64xf32>
    %117 = vector.extract_strided_slice %107 {offsets = [0, 40, 0], sizes = [2, 8, 64], strides = [1, 1, 1]} : vector<2x64x64xf32> to vector<2x8x64xf32>
    %118 = arith.addf %116, %117 : vector<2x8x64xf32>
    %119 = vector.extract_strided_slice %107 {offsets = [0, 48, 0], sizes = [2, 8, 64], strides = [1, 1, 1]} : vector<2x64x64xf32> to vector<2x8x64xf32>
    %120 = arith.addf %118, %119 : vector<2x8x64xf32>
    %121 = vector.extract_strided_slice %107 {offsets = [0, 56, 0], sizes = [2, 8, 64], strides = [1, 1, 1]} : vector<2x64x64xf32> to vector<2x8x64xf32>
    %122 = arith.addf %120, %121 : vector<2x8x64xf32>
    %123 = vector.shape_cast %122 : vector<2x8x64xf32> to vector<16x64xf32>
    %124 = arith.truncf %123 : vector<16x64xf32> to vector<16x64xbf16>
    %c0_54 = arith.constant 0 : index
    %c0_55 = arith.constant 0 : index
    %125 = vector.load %arg10[%c0_54, %c0_55] : memref<64x64xbf16, #tpu.memory_space<vmem>>, vector<64x64xbf16>
    %cst_56 = arith.constant dense<0.000000e+00> : vector<16x64xf32>
    %126 = tpu.matmul %124, %125, %cst_56 {dimension_numbers = #tpu.dot_dimension_numbers<[1], [0], [0], [1], [0, 0, 1, 1], [], []>} : vector<16x64xbf16>, vector<64x64xbf16>, vector<16x64xf32> -> vector<16x64xf32>
    %c0_57 = arith.constant 0 : index
    %c0_58 = arith.constant 0 : index
    %127 = vector.load %arg11[%c0_57, %c0_58] : memref<1x64xf32, #tpu.memory_space<vmem>>, vector<1x64xf32>
    %128 = vector.broadcast %127 : vector<1x64xf32> to vector<16x64xf32>
    %129 = arith.addf %126, %128 : vector<16x64xf32>
    %130 = arith.addf %0, %129 : vector<16x64xf32>
    %c0_59 = arith.constant 0 : index
    %c0_60 = arith.constant 0 : index
    %131 = vector.load %arg12[%c0_59, %c0_60] : memref<1x64xf32, #tpu.memory_space<vmem>>, vector<1x64xf32>
    %c0_61 = arith.constant 0 : index
    %c0_62 = arith.constant 0 : index
    %132 = vector.load %arg13[%c0_61, %c0_62] : memref<1x64xf32, #tpu.memory_space<vmem>>, vector<1x64xf32>
    %cst_63 = arith.constant dense<0.000000e+00> : vector<16xf32>
    %133 = vector.multi_reduction <add>, %130, %cst_63 [1] : vector<16x64xf32> to vector<16xf32>
    %134 = vector.shape_cast %133 : vector<16xf32> to vector<16x1xf32>
    %cst_64 = arith.constant 6.400000e+01 : f32
    %135 = vector.broadcast %cst_64 : f32 to vector<16x1xf32>
    %136 = arith.divf %134, %135 : vector<16x1xf32>
    %137 = vector.broadcast %136 : vector<16x1xf32> to vector<16x64xf32>
    %138 = arith.subf %130, %137 : vector<16x64xf32>
    %139 = arith.mulf %138, %138 : vector<16x64xf32>
    %cst_65 = arith.constant dense<0.000000e+00> : vector<16xf32>
    %140 = vector.multi_reduction <add>, %139, %cst_65 [1] : vector<16x64xf32> to vector<16xf32>
    %141 = vector.shape_cast %140 : vector<16xf32> to vector<16x1xf32>
    %cst_66 = arith.constant 6.400000e+01 : f32
    %142 = vector.broadcast %cst_66 : f32 to vector<16x1xf32>
    %143 = arith.divf %141, %142 : vector<16x1xf32>
    %cst_67 = arith.constant 9.99999974E-6 : f32
    %144 = vector.broadcast %cst_67 : f32 to vector<16x1xf32>
    %145 = arith.addf %143, %144 : vector<16x1xf32>
    %146 = math.rsqrt %145 : vector<16x1xf32>
    %147 = vector.broadcast %146 : vector<16x1xf32> to vector<16x64xf32>
    %148 = arith.mulf %138, %147 : vector<16x64xf32>
    %149 = vector.broadcast %131 : vector<1x64xf32> to vector<16x64xf32>
    %150 = arith.mulf %148, %149 : vector<16x64xf32>
    %151 = vector.broadcast %132 : vector<1x64xf32> to vector<16x64xf32>
    %152 = arith.addf %150, %151 : vector<16x64xf32>
    %153 = arith.truncf %152 : vector<16x64xf32> to vector<16x64xbf16>
    %c0_68 = arith.constant 0 : index
    %c0_69 = arith.constant 0 : index
    %154 = vector.load %arg14[%c0_68, %c0_69] : memref<64x3072xbf16, #tpu.memory_space<vmem>>, vector<64x3072xbf16>
    %cst_70 = arith.constant dense<0.000000e+00> : vector<16x3072xf32>
    %155 = tpu.matmul %153, %154, %cst_70 {dimension_numbers = #tpu.dot_dimension_numbers<[1], [0], [0], [1], [0, 0, 1, 1], [], []>} : vector<16x64xbf16>, vector<64x3072xbf16>, vector<16x3072xf32> -> vector<16x3072xf32>
    %c0_71 = arith.constant 0 : index
    %c0_72 = arith.constant 0 : index
    %156 = vector.load %arg15[%c0_71, %c0_72] : memref<1x3072xf32, #tpu.memory_space<vmem>>, vector<1x3072xf32>
    %157 = vector.broadcast %156 : vector<1x3072xf32> to vector<16x3072xf32>
    %158 = arith.addf %155, %157 : vector<16x3072xf32>
    %cst_73 = arith.constant 5.000000e-01 : f32
    %159 = vector.broadcast %cst_73 : f32 to vector<16x3072xf32>
    %160 = arith.mulf %159, %158 : vector<16x3072xf32>
    %cst_74 = arith.constant 0.707106769 : f32
    %161 = vector.broadcast %cst_74 : f32 to vector<16x3072xf32>
    %162 = arith.mulf %158, %161 : vector<16x3072xf32>
    %163 = math.erf %162 : vector<16x3072xf32>
    %cst_75 = arith.constant 1.000000e+00 : f32
    %164 = vector.broadcast %cst_75 : f32 to vector<16x3072xf32>
    %165 = arith.addf %164, %163 : vector<16x3072xf32>
    %166 = arith.mulf %160, %165 : vector<16x3072xf32>
    %167 = arith.truncf %166 : vector<16x3072xf32> to vector<16x3072xbf16>
    %c0_76 = arith.constant 0 : index
    %c0_77 = arith.constant 0 : index
    %168 = vector.load %arg16[%c0_76, %c0_77] : memref<3072x64xbf16, #tpu.memory_space<vmem>>, vector<3072x64xbf16>
    %cst_78 = arith.constant dense<0.000000e+00> : vector<16x64xf32>
    %169 = tpu.matmul %167, %168, %cst_78 {dimension_numbers = #tpu.dot_dimension_numbers<[1], [0], [0], [1], [0, 0, 1, 1], [], []>} : vector<16x3072xbf16>, vector<3072x64xbf16>, vector<16x64xf32> -> vector<16x64xf32>
    %c0_79 = arith.constant 0 : index
    %c0_80 = arith.constant 0 : index
    %170 = vector.load %arg17[%c0_79, %c0_80] : memref<1x64xf32, #tpu.memory_space<vmem>>, vector<1x64xf32>
    %171 = vector.broadcast %170 : vector<1x64xf32> to vector<16x64xf32>
    %172 = arith.addf %169, %171 : vector<16x64xf32>
    %173 = arith.addf %130, %172 : vector<16x64xf32>
    %c0_81 = arith.constant 0 : index
    %c0_82 = arith.constant 0 : index
    %174 = vector.load %arg18[%c0_81, %c0_82] : memref<16x64xf32, #tpu.memory_space<vmem>>, vector<16x64xf32>
    tpu.vector_store %arg18[%c0_81, %c0_82], %173 {strides = array<i32>} : memref<16x64xf32, #tpu.memory_space<vmem>>, vector<16x64xf32>,
    return
  }
  func.func @transform_0(%arg0: i32) -> (i32, i32) {
    %c0_i32 = arith.constant 0 : i32
    %c0_i32_0 = arith.constant 0 : i32
    return %arg0, %c0_i32 : i32, i32
  }
  func.func @transform_1(%arg0: i32) -> (i32, i32) {
    %c0_i32 = arith.constant 0 : i32
    %c0_i32_0 = arith.constant 0 : i32
    %c0_i32_1 = arith.constant 0 : i32
    return %c0_i32, %c0_i32_0 : i32, i32
  }
  func.func @transform_2(%arg0: i32) -> (i32, i32) {
    %c0_i32 = arith.constant 0 : i32
    %c0_i32_0 = arith.constant 0 : i32
    %c0_i32_1 = arith.constant 0 : i32
    return %c0_i32, %c0_i32_0 : i32, i32
  }
  func.func @transform_3(%arg0: i32) -> (i32, i32) {
    %c0_i32 = arith.constant 0 : i32
    %c0_i32_0 = arith.constant 0 : i32
    %c0_i32_1 = arith.constant 0 : i32
    return %c0_i32, %c0_i32_0 : i32, i32
  }
  func.func @transform_4(%arg0: i32) -> (i32, i32) {
    %c0_i32 = arith.constant 0 : i32
    %c0_i32_0 = arith.constant 0 : i32
    %c0_i32_1 = arith.constant 0 : i32
    return %c0_i32, %c0_i32_0 : i32, i32
  }
  func.func @transform_5(%arg0: i32) -> (i32, i32) {
    %c0_i32 = arith.constant 0 : i32
    %c0_i32_0 = arith.constant 0 : i32
    %c0_i32_1 = arith.constant 0 : i32
    return %c0_i32, %c0_i32_0 : i32, i32
  }
  func.func @transform_6(%arg0: i32) -> (i32, i32) {
    %c0_i32 = arith.constant 0 : i32
    %c0_i32_0 = arith.constant 0 : i32
    %c0_i32_1 = arith.constant 0 : i32
    return %c0_i32, %c0_i32_0 : i32, i32
  }
  func.func @transform_7(%arg0: i32) -> (i32, i32, i32) {
    %c0_i32 = arith.constant 0 : i32
    %c0_i32_0 = arith.constant 0 : i32
    %c0_i32_1 = arith.constant 0 : i32
    %c0_i32_2 = arith.constant 0 : i32
    return %c0_i32, %c0_i32_0, %c0_i32_1 : i32, i32, i32
  }
  func.func @transform_8(%arg0: i32) -> (i32, i32, i32) {
    %c0_i32 = arith.constant 0 : i32
    %c0_i32_0 = arith.constant 0 : i32
    %c0_i32_1 = arith.constant 0 : i32
    %c0_i32_2 = arith.constant 0 : i32
    return %c0_i32, %c0_i32_0, %c0_i32_1 : i32, i32, i32
  }
  func.func @transform_9(%arg0: i32) -> (i32, i32) {
    %c0_i32 = arith.constant 0 : i32
    %c0_i32_0 = arith.constant 0 : i32
    %c0_i32_1 = arith.constant 0 : i32
    return %c0_i32, %c0_i32_0 : i32, i32
  }
  func.func @transform_10(%arg0: i32) -> (i32, i32) {
    %c0_i32 = arith.constant 0 : i32
    %c0_i32_0 = arith.constant 0 : i32
    %c0_i32_1 = arith.constant 0 : i32
    return %c0_i32, %c0_i32_0 : i32, i32
  }
  func.func @transform_11(%arg0: i32) -> (i32, i32) {
    %c0_i32 = arith.constant 0 : i32
    %c0_i32_0 = arith.constant 0 : i32
    %c0_i32_1 = arith.constant 0 : i32
    return %c0_i32, %c0_i32_0 : i32, i32
  }
  func.func @transform_12(%arg0: i32) -> (i32, i32) {
    %c0_i32 = arith.constant 0 : i32
    %c0_i32_0 = arith.constant 0 : i32
    %c0_i32_1 = arith.constant 0 : i32
    return %c0_i32, %c0_i32_0 : i32, i32
  }
  func.func @transform_13(%arg0: i32) -> (i32, i32) {
    %c0_i32 = arith.constant 0 : i32
    %c0_i32_0 = arith.constant 0 : i32
    %c0_i32_1 = arith.constant 0 : i32
    return %c0_i32, %c0_i32_0 : i32, i32
  }
  func.func @transform_14(%arg0: i32) -> (i32, i32) {
    %c0_i32 = arith.constant 0 : i32
    %c0_i32_0 = arith.constant 0 : i32
    %c0_i32_1 = arith.constant 0 : i32
    return %c0_i32, %c0_i32_0 : i32, i32
  }
  func.func @transform_15(%arg0: i32) -> (i32, i32) {
    %c0_i32 = arith.constant 0 : i32
    %c0_i32_0 = arith.constant 0 : i32
    %c0_i32_1 = arith.constant 0 : i32
    return %c0_i32, %c0_i32_0 : i32, i32
  }
  func.func @transform_16(%arg0: i32) -> (i32, i32) {
    %c0_i32 = arith.constant 0 : i32
    %c0_i32_0 = arith.constant 0 : i32
    %c0_i32_1 = arith.constant 0 : i32
    return %c0_i32, %c0_i32_0 : i32, i32
  }
  func.func @transform_17(%arg0: i32) -> (i32, i32) {
    %c0_i32 = arith.constant 0 : i32
    %c0_i32_0 = arith.constant 0 : i32
    return %arg0, %c0_i32 : i32, i32
  }
}

</mosaic_0001>

<llo_original>
// kernel: tpu_custom_call.1
$region0: #{tpu_custom_call.1}
  #allocation0 [shape = 'u32[]', space=smem, size = 0x4, offset = 0x4, fixed_abs, tag = 'smem constant byte address 0x4 - core index']
  #allocation1 [shape = 'u32[144,128]{1,0:T(1,128)}', space=vmem, size = 0x12000, scoped, tag = 'internal scratch']
  %s0 = inlined_call_operand.vmem [shape: f32[16,64], index: 0, kind: input, shape index: {}]
  %s1 = inlined_call_operand.vmem [shape: s32[64,8], index: 1, kind: input, shape index: {}]
  %s2 = inlined_call_operand.vmem [shape: f32[64,64], index: 2, kind: input, shape index: {}]
  %s3 = inlined_call_operand.vmem [shape: f32[8,64], index: 3, kind: input, shape index: {}]
  %s4 = inlined_call_operand.vmem [shape: f32[8,64], index: 4, kind: input, shape index: {}]
  %s5 = inlined_call_operand.vmem [shape: f32[1,64], index: 5, kind: input, shape index: {}]
  %s6 = inlined_call_operand.vmem [shape: f32[1,64], index: 6, kind: input, shape index: {}]
  %s7 = inlined_call_operand.vmem [shape: bf16[5,64,64], index: 7, kind: input, shape index: {}]
  %s8 = inlined_call_operand.vmem [shape: f32[5,1,64], index: 8, kind: input, shape index: {}]
  %s9 = inlined_call_operand.vmem [shape: bf16[64,64], index: 9, kind: input, shape index: {}]
  %s10 = inlined_call_operand.vmem [shape: f32[1,64], index: 10, kind: input, shape index: {}]
  %s11 = inlined_call_operand.vmem [shape: f32[1,64], index: 11, kind: input, shape index: {}]
  %s12 = inlined_call_operand.vmem [shape: f32[1,64], index: 12, kind: input, shape index: {}]
  %s13 = inlined_call_operand.vmem [shape: bf16[64,3072], index: 13, kind: input, shape index: {}]
  %s14 = inlined_call_operand.vmem [shape: f32[1,3072], index: 14, kind: input, shape index: {}]
  %s15 = inlined_call_operand.vmem [shape: bf16[3072,64], index: 15, kind: input, shape index: {}]
  %s16 = inlined_call_operand.vmem [shape: f32[1,64], index: 16, kind: input, shape index: {}]
  %s17 = inlined_call_operand.hbm [shape: f32[16,64], index: 17, kind: output, shape index: {}]
  %s18 = sld [smem:[#allocation0]]
  $region78: #{tpu_custom_call.1} parent=0
    _
  %s20 = ssub.s32 1, %s18
  %s21 = scalar_select 0, %s20, %s18
  $region1: #{tpu_custom_call.1} parent=0
    #allocation2 [shape = 'u8[8192]{0}', space=vmem, size = 0x2000, scoped, tag = 'output window, operand 0, single buffered']
    #allocation3 [shape = 's32[1]{0}', space=sflag, size = 0x4, scoped, tag = 'scoped memory for tpu_custom_call.1']
    %22 = vsyncpa [#allocation3], 0
    // Predicated region
    $region2: #{tpu_custom_call.1} parent=1 // pred_check
      _
    $region3: #{tpu_custom_call.1} parent=1 // pred_check_branch
      %24 = sbr.rel (0) target = $region5
    $region4: #{tpu_custom_call.1} parent=1 // pred_region
      _
    $region5: #{tpu_custom_call.1} parent=1 // pred_fallthru
      _
    // Predicated region
    $region6: #{tpu_custom_call.1} parent=1 // pred_check
      _
    $region7: #{tpu_custom_call.1} parent=1 // pred_check_branch
      %26 = sbr.rel (0) target = $region9
    $region8: #{tpu_custom_call.1} parent=1 // pred_region
      _
    $region9: #{tpu_custom_call.1} parent=1 // pred_fallthru
      _
    // Predicated region
    $region10: #{tpu_custom_call.1} parent=1 // pred_check
      _
    $region11: #{tpu_custom_call.1} parent=1 // pred_check_branch
      %28 = sbr.rel (0) target = $region13
    $region12: #{tpu_custom_call.1} parent=1 // pred_region
      _
    $region13: #{tpu_custom_call.1} parent=1 // pred_fallthru
      _
    // Predicated region
    $region14: #{tpu_custom_call.1} parent=1 // pred_check
      _
    $region15: #{tpu_custom_call.1} parent=1 // pred_check_branch
      %30 = sbr.rel (0) target = $region17
    $region16: #{tpu_custom_call.1} parent=1 // pred_region
      _
    $region17: #{tpu_custom_call.1} parent=1 // pred_fallthru
      _
    // Predicated region
    $region18: #{tpu_custom_call.1} parent=1 // pred_check
      _
    $region19: #{tpu_custom_call.1} parent=1 // pred_check_branch
      %32 = sbr.rel (0) target = $region21
    $region20: #{tpu_custom_call.1} parent=1 // pred_region
      _
    $region21: #{tpu_custom_call.1} parent=1 // pred_fallthru
      _
    // Predicated region
    $region22: #{tpu_custom_call.1} parent=1 // pred_check
      _
    $region23: #{tpu_custom_call.1} parent=1 // pred_check_branch
      %34 = sbr.rel (0) target = $region25
    $region24: #{tpu_custom_call.1} parent=1 // pred_region
      _
    $region25: #{tpu_custom_call.1} parent=1 // pred_fallthru
      _
    // Predicated region
    $region26: #{tpu_custom_call.1} parent=1 // pred_check
      _
    $region27: #{tpu_custom_call.1} parent=1 // pred_check_branch
      %36 = sbr.rel (0) target = $region29
    $region28: #{tpu_custom_call.1} parent=1 // pred_region
      _
    $region29: #{tpu_custom_call.1} parent=1 // pred_fallthru
      _
    // Predicated region
    $region30: #{tpu_custom_call.1} parent=1 // pred_check
      _
    $region31: #{tpu_custom_call.1} parent=1 // pred_check_branch
      %38 = sbr.rel (0) target = $region33
    $region32: #{tpu_custom_call.1} parent=1 // pred_region
      _
    $region33: #{tpu_custom_call.1} parent=1 // pred_fallthru
      _
    // Predicated region
    $region34: #{tpu_custom_call.1} parent=1 // pred_check
      _
    $region35: #{tpu_custom_call.1} parent=1 // pred_check_branch
      %40 = sbr.rel (0) target = $region37
    $region36: #{tpu_custom_call.1} parent=1 // pred_region
      _
    $region37: #{tpu_custom_call.1} parent=1 // pred_fallthru
      _
    // Predicated region
    $region38: #{tpu_custom_call.1} parent=1 // pred_check
      _
    $region39: #{tpu_custom_call.1} parent=1 // pred_check_branch
      %42 = sbr.rel (0) target = $region41
    $region40: #{tpu_custom_call.1} parent=1 // pred_region
      _
    $region41: #{tpu_custom_call.1} parent=1 // pred_fallthru
      _
    // Predicated region
    $region42: #{tpu_custom_call.1} parent=1 // pred_check
      _
    $region43: #{tpu_custom_call.1} parent=1 // pred_check_branch
      %44 = sbr.rel (0) target = $region45
    $region44: #{tpu_custom_call.1} parent=1 // pred_region
      _
    $region45: #{tpu_custom_call.1} parent=1 // pred_fallthru
      _
    // Predicated region
    $region46: #{tpu_custom_call.1} parent=1 // pred_check
      _
    $region47: #{tpu_custom_call.1} parent=1 // pred_check_branch
      %46 = sbr.rel (0) target = $region49
    $region48: #{tpu_custom_call.1} parent=1 // pred_region
      _
    $region49: #{tpu_custom_call.1} parent=1 // pred_fallthru
      _
    // Predicated region
    $region50: #{tpu_custom_call.1} parent=1 // pred_check
      _
    $region51: #{tpu_custom_call.1} parent=1 // pred_check_branch
      %48 = sbr.rel (0) target = $region53
    $region52: #{tpu_custom_call.1} parent=1 // pred_region
      _
    $region53: #{tpu_custom_call.1} parent=1 // pred_fallthru
      _
    // Predicated region
    $region54: #{tpu_custom_call.1} parent=1 // pred_check
      _
    $region55: #{tpu_custom_call.1} parent=1 // pred_check_branch
      %50 = sbr.rel (0) target = $region57
    $region56: #{tpu_custom_call.1} parent=1 // pred_region
      _
    $region57: #{tpu_custom_call.1} parent=1 // pred_fallthru
      _
    // Predicated region
    $region58: #{tpu_custom_call.1} parent=1 // pred_check
      _
    $region59: #{tpu_custom_call.1} parent=1 // pred_check_branch
      %52 = sbr.rel (0) target = $region61
    $region60: #{tpu_custom_call.1} parent=1 // pred_region
      _
    $region61: #{tpu_custom_call.1} parent=1 // pred_fallthru
      _
    // Predicated region
    $region62: #{tpu_custom_call.1} parent=1 // pred_check
      _
    $region63: #{tpu_custom_call.1} parent=1 // pred_check_branch
      %54 = sbr.rel (0) target = $region65
    $region64: #{tpu_custom_call.1} parent=1 // pred_region
      _
    $region65: #{tpu_custom_call.1} parent=1 // pred_fallthru
      _
    // Predicated region
    $region66: #{tpu_custom_call.1} parent=1 // pred_check
      _
    $region67: #{tpu_custom_call.1} parent=1 // pred_check_branch
      %56 = sbr.rel (0) target = $region69
    $region68: #{tpu_custom_call.1} parent=1 // pred_region
      _
    $region69: #{tpu_custom_call.1} parent=1 // pred_fallthru
      _
    %v58 = vld [vmem:[%s0] sm:$0xff]
    %v59 = vld [vmem:[%s0 + $0x8] sm:$0xff]
    %v60 = vld [vmem:[%s5] sm:$0x1]
    %v61 = vld [vmem:[%s6] sm:$0x1]
    %vm62 = vcmask 523264
    %v63 = vsel %vm62, %v58, 0.0
    %64 = vadd.xlane.f32.xlu0 %v63
    %v65 = vpop.xlane.xlu0 %64
    %v66 = vsel %vm62, %v59, 0.0
    %67 = vadd.xlane.f32.xlu0 %v66
    %v68 = vpop.xlane.xlu0 %67
    %v69 = vrcp.pop 64.0
    %v70 = vmul.f32 %v65, %v69
    %v71 = vmul.f32 %v68, %v69
    %v72 = vsub.f32 %v58, %v70
    %v73 = vsub.f32 %v59, %v71
    %v74 = vmul.f32 %v72, %v72
    %v75 = vmul.f32 %v73, %v73
    %v76 = vsel %vm62, %v74, 0.0
    %77 = vadd.xlane.f32.xlu0 %v76
    %v78 = vpop.xlane.xlu0 %77
    %v79 = vsel %vm62, %v75, 0.0
    %80 = vadd.xlane.f32.xlu0 %v79
    %v81 = vpop.xlane.xlu0 %80
    %v82 = vmul.f32 %v78, %v69
    %v83 = vmul.f32 %v81, %v69
    %v84 = vadd.f32 %v82, 1e-05
    %v85 = vadd.f32 %v83, 1e-05
    %v86 = vrsqrt.pop %v84
    %v87 = vrsqrt.pop %v85
    %v88 = vmul.f32 %v72, %v86
    %v89 = vmul.f32 %v73, %v87
    %v91 = vlaneseq
    %v92 = vshrl.u32 %v91, 7
    %v93 = vsub.s32 0, %v92
    %v94 = vrot.slane %v60, %v93
    %v96 = vmul.f32 %v88, %v94
    %v97 = vmul.f32 %v89, %v94
    %v99 = vlaneseq
    %v100 = vshrl.u32 %v99, 7
    %v101 = vsub.s32 0, %v100
    %v102 = vrot.slane %v61, %v101
    %v104 = vadd.f32 %v96, %v102
    %v105 = vadd.f32 %v97, %v102
    %v106 = vpack.c.bf16 %v105, %v104
    %v107 = vld [vmem:[%s7] sm:$0xf]
    %v108 = vld [vmem:[%s7 + $0x4] sm:$0xf]
    %v109 = vld [vmem:[%s7 + $0x8] sm:$0xf]
    %v110 = vld [vmem:[%s7 + $0xc] sm:$0xf]
    %v111 = vld [vmem:[%s7 + $0x10] sm:$0xf]
    %v112 = vld [vmem:[%s7 + $0x14] sm:$0xf]
    %v113 = vld [vmem:[%s7 + $0x18] sm:$0xf]
    %v114 = vld [vmem:[%s7 + $0x1c] sm:$0xf]
    %v115 = vld [vmem:[%s8] sm:$0x1]
    %v117 = vlaneseq
    %v118 = vshrl.u32 %v117, 7
    %v119 = vsub.s32 0, %v118
    %v120 = vrot.slane %v115, %v119
    %v130 = vunpack.c.l.b16 %v107
    %v131 = vunpack.c.l.b16 %v108
    %v132 = vunpack.c.l.b16 %v109
    %v133 = vunpack.c.l.b16 %v110
    %v134 = vunpack.c.l.b16 %v111
    %v135 = vunpack.c.l.b16 %v112
    %v136 = vunpack.c.l.b16 %v113
    %v137 = vunpack.c.l.b16 %v114
    %v138 = vpack.c.b16 %v131, %v130
    %v139 = vpack.c.b16 %v133, %v132
    %v140 = vpack.c.b16 %v135, %v134
    %v141 = vpack.c.b16 %v137, %v136
    %v147 = vsel %vm62, %v106, 0
    %149 = vmatprep.subr.bf16.mxu0 0
    %150 = vmatpush1.bf16.msra.mxu0 %v138
    %151 = vmatprep.subr.bf16.mxu0 0
    %152 = vmatpush1.bf16.msra.mxu0 %v139
    %153 = vmatprep.subr.bf16.mxu0 0
    %154 = vmatpush1.bf16.msra.mxu0 %v140
    %155 = vmatprep.subr.bf16.mxu0 0
    %156 = vmatpush1.bf16.msra.mxu0 %v141
    %157 = vmatprep.subr.bf16.mxu0 0
    %158 = vmatpush1.bf16.msra.mxu0 0
    %159 = vmatprep.subr.bf16.mxu0 0
    %160 = vmatpush1.bf16.msra.mxu0 0
    %161 = vmatprep.subr.bf16.mxu0 0
    %162 = vmatpush1.bf16.msra.mxu0 0
    %163 = vmatprep.subr.bf16.mxu0 0
    %164 = vmatpush1.bf16.msra.mxu0 0
    %165 = vmatprep.subr.bf16.mxu0 0
    %166 = vmatpush1.bf16.msra.mxu0 0
    %167 = vmatprep.subr.bf16.mxu0 0
    %168 = vmatpush1.bf16.msra.mxu0 0
    %169 = vmatprep.subr.bf16.mxu0 0
    %170 = vmatpush1.bf16.msra.mxu0 0
    %171 = vmatprep.subr.bf16.mxu0 0
    %172 = vmatpush1.bf16.msra.mxu0 0
    %173 = vmatprep.subr.bf16.mxu0 0
    %174 = vmatpush1.bf16.msra.mxu0 0
    %175 = vmatprep.subr.bf16.mxu0 0
    %176 = vmatpush1.bf16.msra.mxu0 0
    %177 = vmatprep.subr.bf16.mxu0 0
    %178 = vmatpush1.bf16.msra.mxu0 0
    %179 = vmatprep.subr.bf16.mxu0 0
    %180 = vmatpush1.bf16.msra.mxu0 0
    %181 = vmatprep.mubr.bf16.mxu0 0
    %182 = vmatmul.mubr.bf16.gmra.mrb[0].mxu0 %v147
    %v183 = vpop.f32.mrb[0].mxu0
    %v184 = vadd.f32 %v120, %v183
    %v185 = vpop.f32.mrb[0].mxu0
    %v186 = vpop.f32.mrb[0].mxu0
    %v187 = vadd.f32 %v120, %v186
    %v188 = vpop.f32.mrb[0].mxu0
    %189 = vdwg.mxu0
    %s190 = scalar_lea.vmem %s7, 32
    %v191 = vld [vmem:[%s190] sm:$0xf]
    %v192 = vld [vmem:[%s190 + $0x4] sm:$0xf]
    %v193 = vld [vmem:[%s190 + $0x8] sm:$0xf]
    %v194 = vld [vmem:[%s190 + $0xc] sm:$0xf]
    %v195 = vld [vmem:[%s190 + $0x10] sm:$0xf]
    %v196 = vld [vmem:[%s190 + $0x14] sm:$0xf]
    %v197 = vld [vmem:[%s190 + $0x18] sm:$0xf]
    %v198 = vld [vmem:[%s190 + $0x1c] sm:$0xf]
    %s199 = scalar_lea.vmem %s8, 1
    %v200 = vld [vmem:[%s199] sm:$0x1]
    %v202 = vlaneseq
    %v203 = vshrl.u32 %v202, 7
    %v204 = vsub.s32 0, %v203
    %v205 = vrot.slane %v200, %v204
    %v215 = vunpack.c.l.b16 %v191
    %v216 = vunpack.c.l.b16 %v192
    %v217 = vunpack.c.l.b16 %v193
    %v218 = vunpack.c.l.b16 %v194
    %v219 = vunpack.c.l.b16 %v195
    %v220 = vunpack.c.l.b16 %v196
    %v221 = vunpack.c.l.b16 %v197
    %v222 = vunpack.c.l.b16 %v198
    %v223 = vpack.c.b16 %v216, %v215
    %v224 = vpack.c.b16 %v218, %v217
    %v225 = vpack.c.b16 %v220, %v219
    %v226 = vpack.c.b16 %v222, %v221
    %231 = vmatprep.subr.bf16.mxu0 0
    %232 = vmatpush1.bf16.msra.mxu0 %v223
    %233 = vmatprep.subr.bf16.mxu0 0
    %234 = vmatpush1.bf16.msra.mxu0 %v224
    %235 = vmatprep.subr.bf16.mxu0 0
    %236 = vmatpush1.bf16.msra.mxu0 %v225
    %237 = vmatprep.subr.bf16.mxu0 0
    %238 = vmatpush1.bf16.msra.mxu0 %v226
    %239 = vmatprep.subr.bf16.mxu0 0
    %240 = vmatpush1.bf16.msra.mxu0 0
    %241 = vmatprep.subr.bf16.mxu0 0
    %242 = vmatpush1.bf16.msra.mxu0 0
    %243 = vmatprep.subr.bf16.mxu0 0
    %244 = vmatpush1.bf16.msra.mxu0 0
    %245 = vmatprep.subr.bf16.mxu0 0
    %246 = vmatpush1.bf16.msra.mxu0 0
    %247 = vmatprep.subr.bf16.mxu0 0
    %248 = vmatpush1.bf16.msra.mxu0 0
    %249 = vmatprep.subr.bf16.mxu0 0
    %250 = vmatpush1.bf16.msra.mxu0 0
    %251 = vmatprep.subr.bf16.mxu0 0
    %252 = vmatpush1.bf16.msra.mxu0 0
    %253 = vmatprep.subr.bf16.mxu0 0
    %254 = vmatpush1.bf16.msra.mxu0 0
    %255 = vmatprep.subr.bf16.mxu0 0
    %256 = vmatpush1.bf16.msra.mxu0 0
    %257 = vmatprep.subr.bf16.mxu0 0
    %258 = vmatpush1.bf16.msra.mxu0 0
    %259 = vmatprep.subr.bf16.mxu0 0
    %260 = vmatpush1.bf16.msra.mxu0 0
    %261 = vmatprep.subr.bf16.mxu0 0
    %262 = vmatpush1.bf16.msra.mxu0 0
    %263 = vmatprep.mubr.bf16.mxu0 0
    %264 = vmatmul.mubr.bf16.gmra.mrb[0].mxu0 %v147
    %v265 = vpop.f32.mrb[0].mxu0
    %v266 = vadd.f32 %v205, %v265
    %v267 = vpop.f32.mrb[0].mxu0
    %v268 = vpop.f32.mrb[0].mxu0
    %v269 = vadd.f32 %v205, %v268
    %v270 = vpop.f32.mrb[0].mxu0
    %271 = vdwg.mxu0
    %s272 = scalar_lea.vmem %s7, 64
    %v273 = vld [vmem:[%s272] sm:$0xf]
    %v274 = vld [vmem:[%s272 + $0x4] sm:$0xf]
    %v275 = vld [vmem:[%s272 + $0x8] sm:$0xf]
    %v276 = vld [vmem:[%s272 + $0xc] sm:$0xf]
    %v277 = vld [vmem:[%s272 + $0x10] sm:$0xf]
    %v278 = vld [vmem:[%s272 + $0x14] sm:$0xf]
    %v279 = vld [vmem:[%s272 + $0x18] sm:$0xf]
    %v280 = vld [vmem:[%s272 + $0x1c] sm:$0xf]
    %s281 = scalar_lea.vmem %s8, 2
    %v282 = vld [vmem:[%s281] sm:$0x1]
    %v284 = vlaneseq
    %v285 = vshrl.u32 %v284, 7
    %v286 = vsub.s32 0, %v285
    %v287 = vrot.slane %v282, %v286
    %v297 = vunpack.c.l.b16 %v273
    %v298 = vunpack.c.l.b16 %v274
    %v299 = vunpack.c.l.b16 %v275
    %v300 = vunpack.c.l.b16 %v276
    %v301 = vunpack.c.l.b16 %v277
    %v302 = vunpack.c.l.b16 %v278
    %v303 = vunpack.c.l.b16 %v279
    %v304 = vunpack.c.l.b16 %v280
    %v305 = vpack.c.b16 %v298, %v297
    %v306 = vpack.c.b16 %v300, %v299
    %v307 = vpack.c.b16 %v302, %v301
    %v308 = vpack.c.b16 %v304, %v303
    %313 = vmatprep.subr.bf16.mxu0 0
    %314 = vmatpush1.bf16.msra.mxu0 %v305
    %315 = vmatprep.subr.bf16.mxu0 0
    %316 = vmatpush1.bf16.msra.mxu0 %v306
    %317 = vmatprep.subr.bf16.mxu0 0
    %318 = vmatpush1.bf16.msra.mxu0 %v307
    %319 = vmatprep.subr.bf16.mxu0 0
    %320 = vmatpush1.bf16.msra.mxu0 %v308
    %321 = vmatprep.subr.bf16.mxu0 0
    %322 = vmatpush1.bf16.msra.mxu0 0
    %323 = vmatprep.subr.bf16.mxu0 0
    %324 = vmatpush1.bf16.msra.mxu0 0
    %325 = vmatprep.subr.bf16.mxu0 0
    %326 = vmatpush1.bf16.msra.mxu0 0
    %327 = vmatprep.subr.bf16.mxu0 0
    %328 = vmatpush1.bf16.msra.mxu0 0
    %329 = vmatprep.subr.bf16.mxu0 0
    %330 = vmatpush1.bf16.msra.mxu0 0
    %331 = vmatprep.subr.bf16.mxu0 0
    %332 = vmatpush1.bf16.msra.mxu0 0
    %333 = vmatprep.subr.bf16.mxu0 0
    %334 = vmatpush1.bf16.msra.mxu0 0
    %335 = vmatprep.subr.bf16.mxu0 0
    %336 = vmatpush1.bf16.msra.mxu0 0
    %337 = vmatprep.subr.bf16.mxu0 0
    %338 = vmatpush1.bf16.msra.mxu0 0
    %339 = vmatprep.subr.bf16.mxu0 0
    %340 = vmatpush1.bf16.msra.mxu0 0
    %341 = vmatprep.subr.bf16.mxu0 0
    %342 = vmatpush1.bf16.msra.mxu0 0
    %343 = vmatprep.subr.bf16.mxu0 0
    %344 = vmatpush1.bf16.msra.mxu0 0
    %345 = vmatprep.mubr.bf16.mxu0 0
    %346 = vmatmul.mubr.bf16.gmra.mrb[0].mxu0 %v147
    %v347 = vpop.f32.mrb[0].mxu0
    %v348 = vadd.f32 %v287, %v347
    %v349 = vpop.f32.mrb[0].mxu0
    %v350 = vpop.f32.mrb[0].mxu0
    %v351 = vadd.f32 %v287, %v350
    %v352 = vpop.f32.mrb[0].mxu0
    %353 = vdwg.mxu0
    %s354 = scalar_lea.vmem %s7, 96
    %v355 = vld [vmem:[%s354] sm:$0xf]
    %v356 = vld [vmem:[%s354 + $0x4] sm:$0xf]
    %v357 = vld [vmem:[%s354 + $0x8] sm:$0xf]
    %v358 = vld [vmem:[%s354 + $0xc] sm:$0xf]
    %v359 = vld [vmem:[%s354 + $0x10] sm:$0xf]
    %v360 = vld [vmem:[%s354 + $0x14] sm:$0xf]
    %v361 = vld [vmem:[%s354 + $0x18] sm:$0xf]
    %v362 = vld [vmem:[%s354 + $0x1c] sm:$0xf]
    %s363 = scalar_lea.vmem %s8, 3
    %v364 = vld [vmem:[%s363] sm:$0x1]
    %v366 = vlaneseq
    %v367 = vshrl.u32 %v366, 7
    %v368 = vsub.s32 0, %v367
    %v369 = vrot.slane %v364, %v368
    %v379 = vunpack.c.l.b16 %v355
    %v380 = vunpack.c.l.b16 %v356
    %v381 = vunpack.c.l.b16 %v357
    %v382 = vunpack.c.l.b16 %v358
    %v383 = vunpack.c.l.b16 %v359
    %v384 = vunpack.c.l.b16 %v360
    %v385 = vunpack.c.l.b16 %v361
    %v386 = vunpack.c.l.b16 %v362
    %v387 = vpack.c.b16 %v380, %v379
    %v388 = vpack.c.b16 %v382, %v381
    %v389 = vpack.c.b16 %v384, %v383
    %v390 = vpack.c.b16 %v386, %v385
    %395 = vmatprep.subr.bf16.mxu0 0
    %396 = vmatpush1.bf16.msra.mxu0 %v387
    %397 = vmatprep.subr.bf16.mxu0 0
    %398 = vmatpush1.bf16.msra.mxu0 %v388
    %399 = vmatprep.subr.bf16.mxu0 0
    %400 = vmatpush1.bf16.msra.mxu0 %v389
    %401 = vmatprep.subr.bf16.mxu0 0
    %402 = vmatpush1.bf16.msra.mxu0 %v390
    %403 = vmatprep.subr.bf16.mxu0 0
    %404 = vmatpush1.bf16.msra.mxu0 0
    %405 = vmatprep.subr.bf16.mxu0 0
    %406 = vmatpush1.bf16.msra.mxu0 0
    %407 = vmatprep.subr.bf16.mxu0 0
    %408 = vmatpush1.bf16.msra.mxu0 0
    %409 = vmatprep.subr.bf16.mxu0 0
    %410 = vmatpush1.bf16.msra.mxu0 0
    %411 = vmatprep.subr.bf16.mxu0 0
    %412 = vmatpush1.bf16.msra.mxu0 0
    %413 = vmatprep.subr.bf16.mxu0 0
    %414 = vmatpush1.bf16.msra.mxu0 0
    %415 = vmatprep.subr.bf16.mxu0 0
    %416 = vmatpush1.bf16.msra.mxu0 0
    %417 = vmatprep.subr.bf16.mxu0 0
    %418 = vmatpush1.bf16.msra.mxu0 0
    %419 = vmatprep.subr.bf16.mxu0 0
    %420 = vmatpush1.bf16.msra.mxu0 0
    %421 = vmatprep.subr.bf16.mxu0 0
    %422 = vmatpush1.bf16.msra.mxu0 0
    %423 = vmatprep.subr.bf16.mxu0 0
    %424 = vmatpush1.bf16.msra.mxu0 0
    %425 = vmatprep.subr.bf16.mxu0 0
    %426 = vmatpush1.bf16.msra.mxu0 0
    %427 = vmatprep.mubr.bf16.mxu0 0
    %428 = vmatmul.mubr.bf16.gmra.mrb[0].mxu0 %v147
    %v429 = vpop.f32.mrb[0].mxu0
    %v430 = vadd.f32 %v369, %v429
    %v431 = vpop.f32.mrb[0].mxu0
    %v432 = vpop.f32.mrb[0].mxu0
    %v433 = vadd.f32 %v369, %v432
    %v434 = vpop.f32.mrb[0].mxu0
    %435 = vdwg.mxu0
    %s436 = scalar_lea.vmem %s7, 128
    %v437 = vld [vmem:[%s436] sm:$0xf]
    %v438 = vld [vmem:[%s436 + $0x4] sm:$0xf]
    %v439 = vld [vmem:[%s436 + $0x8] sm:$0xf]
    %v440 = vld [vmem:[%s436 + $0xc] sm:$0xf]
    %v441 = vld [vmem:[%s436 + $0x10] sm:$0xf]
    %v442 = vld [vmem:[%s436 + $0x14] sm:$0xf]
    %v443 = vld [vmem:[%s436 + $0x18] sm:$0xf]
    %v444 = vld [vmem:[%s436 + $0x1c] sm:$0xf]
    %s445 = scalar_lea.vmem %s8, 4
    %v446 = vld [vmem:[%s445] sm:$0x1]
    %v448 = vlaneseq
    %v449 = vshrl.u32 %v448, 7
    %v450 = vsub.s32 0, %v449
    %v451 = vrot.slane %v446, %v450
    %v461 = vunpack.c.l.b16 %v437
    %v462 = vunpack.c.l.b16 %v438
    %v463 = vunpack.c.l.b16 %v439
    %v464 = vunpack.c.l.b16 %v440
    %v465 = vunpack.c.l.b16 %v441
    %v466 = vunpack.c.l.b16 %v442
    %v467 = vunpack.c.l.b16 %v443
    %v468 = vunpack.c.l.b16 %v444
    %v469 = vpack.c.b16 %v462, %v461
    %v470 = vpack.c.b16 %v464, %v463
    %v471 = vpack.c.b16 %v466, %v465
    %v472 = vpack.c.b16 %v468, %v467
    %477 = vmatprep.subr.bf16.mxu0 0
    %478 = vmatpush1.bf16.msra.mxu0 %v469
    %479 = vmatprep.subr.bf16.mxu0 0
    %480 = vmatpush1.bf16.msra.mxu0 %v470
    %481 = vmatprep.subr.bf16.mxu0 0
    %482 = vmatpush1.bf16.msra.mxu0 %v471
    %483 = vmatprep.subr.bf16.mxu0 0
    %484 = vmatpush1.bf16.msra.mxu0 %v472
    %485 = vmatprep.subr.bf16.mxu0 0
    %486 = vmatpush1.bf16.msra.mxu0 0
    %487 = vmatprep.subr.bf16.mxu0 0
    %488 = vmatpush1.bf16.msra.mxu0 0
    %489 = vmatprep.subr.bf16.mxu0 0
    %490 = vmatpush1.bf16.msra.mxu0 0
    %491 = vmatprep.subr.bf16.mxu0 0
    %492 = vmatpush1.bf16.msra.mxu0 0
    %493 = vmatprep.subr.bf16.mxu0 0
    %494 = vmatpush1.bf16.msra.mxu0 0
    %495 = vmatprep.subr.bf16.mxu0 0
    %496 = vmatpush1.bf16.msra.mxu0 0
    %497 = vmatprep.subr.bf16.mxu0 0
    %498 = vmatpush1.bf16.msra.mxu0 0
    %499 = vmatprep.subr.bf16.mxu0 0
    %500 = vmatpush1.bf16.msra.mxu0 0
    %501 = vmatprep.subr.bf16.mxu0 0
    %502 = vmatpush1.bf16.msra.mxu0 0
    %503 = vmatprep.subr.bf16.mxu0 0
    %504 = vmatpush1.bf16.msra.mxu0 0
    %505 = vmatprep.subr.bf16.mxu0 0
    %506 = vmatpush1.bf16.msra.mxu0 0
    %507 = vmatprep.subr.bf16.mxu0 0
    %508 = vmatpush1.bf16.msra.mxu0 0
    %509 = vmatprep.mubr.bf16.mxu0 0
    %510 = vmatmul.mubr.bf16.gmra.mrb[0].mxu0 %v147
    %v511 = vpop.f32.mrb[0].mxu0
    %v512 = vadd.f32 %v451, %v511
    %v513 = vpop.f32.mrb[0].mxu0
    %v514 = vpop.f32.mrb[0].mxu0
    %v515 = vadd.f32 %v451, %v514
    %v516 = vpop.f32.mrb[0].mxu0
    %517 = vdwg.mxu0
    %v518 = vld [vmem:[%s3] sm:$0xff]
    %v519 = vld [vmem:[%s4] sm:$0xff]
    %v520 = vmul.f32 %v184, %v518
    %v521 = vmul.f32 %v187, %v518
    %v522 = vmul.f32 %v430, %v519
    %v523 = vmul.f32 %v433, %v519
    %v524 = vadd.f32 %v520, %v522
    %v525 = vadd.f32 %v521, %v523
    %v526 = vmul.f32 %v266, %v518
    %v527 = vmul.f32 %v269, %v518
    %v528 = vmul.f32 %v512, %v519
    %v529 = vmul.f32 %v515, %v519
    %v530 = vadd.f32 %v526, %v528
    %v531 = vadd.f32 %v527, %v529
    %v532 = vld [vmem:[%s2] sm:$0xff]
    %v533 = vld [vmem:[%s2 + $0x8] sm:$0xff]
    %v534 = vld [vmem:[%s2 + $0x10] sm:$0xff]
    %v535 = vld [vmem:[%s2 + $0x18] sm:$0xff]
    %v536 = vld [vmem:[%s2 + $0x20] sm:$0xff]
    %v537 = vld [vmem:[%s2 + $0x28] sm:$0xff]
    %v538 = vld [vmem:[%s2 + $0x30] sm:$0xff]
    %v539 = vld [vmem:[%s2 + $0x38] sm:$0xff]
    %v540 = vmul.f32 %v524, %v532
    %v541 = vmul.f32 %v524, %v533
    %v542 = vmul.f32 %v524, %v534
    %v543 = vmul.f32 %v524, %v535
    %v544 = vmul.f32 %v524, %v536
    %v545 = vmul.f32 %v524, %v537
    %v546 = vmul.f32 %v524, %v538
    %v547 = vmul.f32 %v524, %v539
    %v548 = vmul.f32 %v525, %v532
    %v549 = vmul.f32 %v525, %v533
    %v550 = vmul.f32 %v525, %v534
    %v551 = vmul.f32 %v525, %v535
    %v552 = vmul.f32 %v525, %v536
    %v553 = vmul.f32 %v525, %v537
    %v554 = vmul.f32 %v525, %v538
    %v555 = vmul.f32 %v525, %v539
    %v557 = vsel %vm62, %v540, 0
    %v560 = vsel %vm62, %v541, 0
    %v563 = vsel %vm62, %v542, 0
    %v566 = vsel %vm62, %v543, 0
    %v569 = vsel %vm62, %v544, 0
    %v572 = vsel %vm62, %v545, 0
    %v575 = vsel %vm62, %v546, 0
    %v578 = vsel %vm62, %v547, 0
    %v581 = vsel %vm62, %v530, 0
    %583 = vmatprep.subr.mxu0 0.0
    %584 = vmatpush1.xpose.msra.mxu0 %v581
    %585 = vmatprep.subr.mxu0 0.0
    %586 = vmatpush1.xpose.msra.mxu0 0.0
    %587 = vmatprep.subr.mxu0 0.0
    %588 = vmatpush1.xpose.msra.mxu0 0.0
    %589 = vmatprep.subr.mxu0 0.0
    %590 = vmatpush1.xpose.msra.mxu0 0.0
    %591 = vmatprep.subr.mxu0 0.0
    %592 = vmatpush1.xpose.msra.mxu0 0.0
    %593 = vmatprep.subr.mxu0 0.0
    %594 = vmatpush1.xpose.msra.mxu0 0.0
    %595 = vmatprep.subr.mxu0 0.0
    %596 = vmatpush1.xpose.msra.mxu0 0.0
    %597 = vmatprep.subr.mxu0 0.0
    %598 = vmatpush1.xpose.msra.mxu0 0.0
    %599 = vmatprep.subr.mxu0 0.0
    %600 = vmatpush1.xpose.msra.mxu0 0.0
    %601 = vmatprep.subr.mxu0 0.0
    %602 = vmatpush1.xpose.msra.mxu0 0.0
    %603 = vmatprep.subr.mxu0 0.0
    %604 = vmatpush1.xpose.msra.mxu0 0.0
    %605 = vmatprep.subr.mxu0 0.0
    %606 = vmatpush1.xpose.msra.mxu0 0.0
    %607 = vmatprep.subr.mxu0 0.0
    %608 = vmatpush1.xpose.msra.mxu0 0.0
    %609 = vmatprep.subr.mxu0 0.0
    %610 = vmatpush1.xpose.msra.mxu0 0.0
    %611 = vmatprep.subr.mxu0 0.0
    %612 = vmatpush1.xpose.msra.mxu0 0.0
    %613 = vmatprep.subr.mxu0 0.0
    %614 = vmatpush1.xpose.msra.mxu0 0.0
    %615 = vmatprep.subr.mxu0 0.0
    %616 = vmatpush1.xpose.msra.mxu0 0.0
    %617 = vmatprep.subr.mxu0 0.0
    %618 = vmatpush1.xpose.msra.mxu0 0.0
    %619 = vmatprep.subr.mxu0 0.0
    %620 = vmatpush1.xpose.msra.mxu0 0.0
    %621 = vmatprep.subr.mxu0 0.0
    %622 = vmatpush1.xpose.msra.mxu0 0.0
    %623 = vmatprep.subr.mxu0 0.0
    %624 = vmatpush1.xpose.msra.mxu0 0.0
    %625 = vmatprep.subr.mxu0 0.0
    %626 = vmatpush1.xpose.msra.mxu0 0.0
    %627 = vmatprep.subr.mxu0 0.0
    %628 = vmatpush1.xpose.msra.mxu0 0.0
    %629 = vmatprep.subr.mxu0 0.0
    %630 = vmatpush1.xpose.msra.mxu0 0.0
    %631 = vmatprep.subr.mxu0 0.0
    %632 = vmatpush1.xpose.msra.mxu0 0.0
    %633 = vmatprep.subr.mxu0 0.0
    %634 = vmatpush1.xpose.msra.mxu0 0.0
    %635 = vmatprep.subr.mxu0 0.0
    %636 = vmatpush1.xpose.msra.mxu0 0.0
    %637 = vmatprep.subr.mxu0 0.0
    %638 = vmatpush1.xpose.msra.mxu0 0.0
    %639 = vmatprep.subr.mxu0 0.0
    %640 = vmatpush1.xpose.msra.mxu0 0.0
    %641 = vmatprep.subr.mxu0 0.0
    %642 = vmatpush1.xpose.msra.mxu0 0.0
    %643 = vmatprep.subr.mxu0 0.0
    %644 = vmatpush1.xpose.msra.mxu0 0.0
    %645 = vmatprep.subr.mxu0 0.0
    %646 = vmatpush1.xpose.msra.mxu0 0.0
    %647 = vmatprep.mubr.f32.mxu0 0.0
    %648 = vmatmul.mubr.f32.gmra.mrb[0].mxu0 %v557
    %v649 = vpop.f32.mrb[0].mxu0
    %v650 = vadd.f32 0.0, %v649
    %v651 = vpop.f32.mrb[0].mxu0
    %652 = vmatprep.mubr.f32.mxu0 0.0
    %653 = vmatmul.mubr.f32.gmra.mrb[0].mxu0 %v560
    %v654 = vpop.f32.mrb[0].mxu0
    %v655 = vadd.f32 0.0, %v654
    %v656 = vpop.f32.mrb[0].mxu0
    %657 = vmatprep.mubr.f32.mxu0 0.0
    %658 = vmatmul.mubr.f32.gmra.mrb[0].mxu0 %v563
    %v659 = vpop.f32.mrb[0].mxu0
    %v660 = vadd.f32 0.0, %v659
    %v661 = vpop.f32.mrb[0].mxu0
    %662 = vmatprep.mubr.f32.mxu0 0.0
    %663 = vmatmul.mubr.f32.gmra.mrb[0].mxu0 %v566
    %v664 = vpop.f32.mrb[0].mxu0
    %v665 = vadd.f32 0.0, %v664
    %v666 = vpop.f32.mrb[0].mxu0
    %667 = vmatprep.mubr.f32.mxu0 0.0
    %668 = vmatmul.mubr.f32.gmra.mrb[0].mxu0 %v569
    %v669 = vpop.f32.mrb[0].mxu0
    %v670 = vadd.f32 0.0, %v669
    %v671 = vpop.f32.mrb[0].mxu0
    %672 = vmatprep.mubr.f32.mxu0 0.0
    %673 = vmatmul.mubr.f32.gmra.mrb[0].mxu0 %v572
    %v674 = vpop.f32.mrb[0].mxu0
    %v675 = vadd.f32 0.0, %v674
    %v676 = vpop.f32.mrb[0].mxu0
    %677 = vmatprep.mubr.f32.mxu0 0.0
    %678 = vmatmul.mubr.f32.gmra.mrb[0].mxu0 %v575
    %v679 = vpop.f32.mrb[0].mxu0
    %v680 = vadd.f32 0.0, %v679
    %v681 = vpop.f32.mrb[0].mxu0
    %682 = vmatprep.mubr.f32.mxu0 0.0
    %683 = vmatmul.mubr.f32.gmra.mrb[0].mxu0 %v578
    %v684 = vpop.f32.mrb[0].mxu0
    %v685 = vadd.f32 0.0, %v684
    %v686 = vpop.f32.mrb[0].mxu0
    %687 = vdwg.mxu0
    %v689 = vsel %vm62, %v548, 0
    %v692 = vsel %vm62, %v549, 0
    %v695 = vsel %vm62, %v550, 0
    %v698 = vsel %vm62, %v551, 0
    %v701 = vsel %vm62, %v552, 0
    %v704 = vsel %vm62, %v553, 0
    %v707 = vsel %vm62, %v554, 0
    %v710 = vsel %vm62, %v555, 0
    %v713 = vsel %vm62, %v531, 0
    %715 = vmatprep.subr.mxu0 0.0
    %716 = vmatpush1.xpose.msra.mxu0 %v713
    %717 = vmatprep.subr.mxu0 0.0
    %718 = vmatpush1.xpose.msra.mxu0 0.0
    %719 = vmatprep.subr.mxu0 0.0
    %720 = vmatpush1.xpose.msra.mxu0 0.0
    %721 = vmatprep.subr.mxu0 0.0
    %722 = vmatpush1.xpose.msra.mxu0 0.0
    %723 = vmatprep.subr.mxu0 0.0
    %724 = vmatpush1.xpose.msra.mxu0 0.0
    %725 = vmatprep.subr.mxu0 0.0
    %726 = vmatpush1.xpose.msra.mxu0 0.0
    %727 = vmatprep.subr.mxu0 0.0
    %728 = vmatpush1.xpose.msra.mxu0 0.0
    %729 = vmatprep.subr.mxu0 0.0
    %730 = vmatpush1.xpose.msra.mxu0 0.0
    %731 = vmatprep.subr.mxu0 0.0
    %732 = vmatpush1.xpose.msra.mxu0 0.0
    %733 = vmatprep.subr.mxu0 0.0
    %734 = vmatpush1.xpose.msra.mxu0 0.0
    %735 = vmatprep.subr.mxu0 0.0
    %736 = vmatpush1.xpose.msra.mxu0 0.0
    %737 = vmatprep.subr.mxu0 0.0
    %738 = vmatpush1.xpose.msra.mxu0 0.0
    %739 = vmatprep.subr.mxu0 0.0
    %740 = vmatpush1.xpose.msra.mxu0 0.0
    %741 = vmatprep.subr.mxu0 0.0
    %742 = vmatpush1.xpose.msra.mxu0 0.0
    %743 = vmatprep.subr.mxu0 0.0
    %744 = vmatpush1.xpose.msra.mxu0 0.0
    %745 = vmatprep.subr.mxu0 0.0
    %746 = vmatpush1.xpose.msra.mxu0 0.0
    %747 = vmatprep.subr.mxu0 0.0
    %748 = vmatpush1.xpose.msra.mxu0 0.0
    %749 = vmatprep.subr.mxu0 0.0
    %750 = vmatpush1.xpose.msra.mxu0 0.0
    %751 = vmatprep.subr.mxu0 0.0
    %752 = vmatpush1.xpose.msra.mxu0 0.0
    %753 = vmatprep.subr.mxu0 0.0
    %754 = vmatpush1.xpose.msra.mxu0 0.0
    %755 = vmatprep.subr.mxu0 0.0
    %756 = vmatpush1.xpose.msra.mxu0 0.0
    %757 = vmatprep.subr.mxu0 0.0
    %758 = vmatpush1.xpose.msra.mxu0 0.0
    %759 = vmatprep.subr.mxu0 0.0
    %760 = vmatpush1.xpose.msra.mxu0 0.0
    %761 = vmatprep.subr.mxu0 0.0
    %762 = vmatpush1.xpose.msra.mxu0 0.0
    %763 = vmatprep.subr.mxu0 0.0
    %764 = vmatpush1.xpose.msra.mxu0 0.0
    %765 = vmatprep.subr.mxu0 0.0
    %766 = vmatpush1.xpose.msra.mxu0 0.0
    %767 = vmatprep.subr.mxu0 0.0
    %768 = vmatpush1.xpose.msra.mxu0 0.0
    %769 = vmatprep.subr.mxu0 0.0
    %770 = vmatpush1.xpose.msra.mxu0 0.0
    %771 = vmatprep.subr.mxu0 0.0
    %772 = vmatpush1.xpose.msra.mxu0 0.0
    %773 = vmatprep.subr.mxu0 0.0
    %774 = vmatpush1.xpose.msra.mxu0 0.0
    %775 = vmatprep.subr.mxu0 0.0
    %776 = vmatpush1.xpose.msra.mxu0 0.0
    %777 = vmatprep.subr.mxu0 0.0
    %778 = vmatpush1.xpose.msra.mxu0 0.0
    %779 = vmatprep.mubr.f32.mxu0 0.0
    %780 = vmatmul.mubr.f32.gmra.mrb[0].mxu0 %v689
    %v781 = vpop.f32.mrb[0].mxu0
    %v782 = vadd.f32 0.0, %v781
    %v783 = vpop.f32.mrb[0].mxu0
    %784 = vmatprep.mubr.f32.mxu0 0.0
    %785 = vmatmul.mubr.f32.gmra.mrb[0].mxu0 %v692
    %v786 = vpop.f32.mrb[0].mxu0
    %v787 = vadd.f32 0.0, %v786
    %v788 = vpop.f32.mrb[0].mxu0
    %789 = vmatprep.mubr.f32.mxu0 0.0
    %790 = vmatmul.mubr.f32.gmra.mrb[0].mxu0 %v695
    %v791 = vpop.f32.mrb[0].mxu0
    %v792 = vadd.f32 0.0, %v791
    %v793 = vpop.f32.mrb[0].mxu0
    %794 = vmatprep.mubr.f32.mxu0 0.0
    %795 = vmatmul.mubr.f32.gmra.mrb[0].mxu0 %v698
    %v796 = vpop.f32.mrb[0].mxu0
    %v797 = vadd.f32 0.0, %v796
    %v798 = vpop.f32.mrb[0].mxu0
    %799 = vmatprep.mubr.f32.mxu0 0.0
    %800 = vmatmul.mubr.f32.gmra.mrb[0].mxu0 %v701
    %v801 = vpop.f32.mrb[0].mxu0
    %v802 = vadd.f32 0.0, %v801
    %v803 = vpop.f32.mrb[0].mxu0
    %804 = vmatprep.mubr.f32.mxu0 0.0
    %805 = vmatmul.mubr.f32.gmra.mrb[0].mxu0 %v704
    %v806 = vpop.f32.mrb[0].mxu0
    %v807 = vadd.f32 0.0, %v806
    %v808 = vpop.f32.mrb[0].mxu0
    %809 = vmatprep.mubr.f32.mxu0 0.0
    %810 = vmatmul.mubr.f32.gmra.mrb[0].mxu0 %v707
    %v811 = vpop.f32.mrb[0].mxu0
    %v812 = vadd.f32 0.0, %v811
    %v813 = vpop.f32.mrb[0].mxu0
    %814 = vmatprep.mubr.f32.mxu0 0.0
    %815 = vmatmul.mubr.f32.gmra.mrb[0].mxu0 %v710
    %v816 = vpop.f32.mrb[0].mxu0
    %v817 = vadd.f32 0.0, %v816
    %v818 = vpop.f32.mrb[0].mxu0
    %819 = vdwg.mxu0
    %v820 = vmul.f32 %v650, 0.35355338
    %v821 = vmul.f32 %v655, 0.35355338
    %v822 = vmul.f32 %v660, 0.35355338
    %v823 = vmul.f32 %v665, 0.35355338
    %v824 = vmul.f32 %v670, 0.35355338
    %v825 = vmul.f32 %v675, 0.35355338
    %v826 = vmul.f32 %v680, 0.35355338
    %v827 = vmul.f32 %v685, 0.35355338
    %v828 = vmul.f32 %v782, 0.35355338
    %v829 = vmul.f32 %v787, 0.35355338
    %v830 = vmul.f32 %v792, 0.35355338
    %v831 = vmul.f32 %v797, 0.35355338
    %v832 = vmul.f32 %v802, 0.35355338
    %v833 = vmul.f32 %v807, 0.35355338
    %v834 = vmul.f32 %v812, 0.35355338
    %v835 = vmul.f32 %v817, 0.35355338
    %v836 = vld [vmem:[%s1] sm:$0xff]
    %v837 = vld [vmem:[%s1 + $0x8] sm:$0xff]
    %v838 = vld [vmem:[%s1 + $0x10] sm:$0xff]
    %v839 = vld [vmem:[%s1 + $0x18] sm:$0xff]
    %v840 = vld [vmem:[%s1 + $0x20] sm:$0xff]
    %v841 = vld [vmem:[%s1 + $0x28] sm:$0xff]
    %v842 = vld [vmem:[%s1 + $0x30] sm:$0xff]
    %v843 = vld [vmem:[%s1 + $0x38] sm:$0xff]
    %vm844 = vcmp.ne.s32.totalorder %v836, 0
    %vm845 = vcmp.ne.s32.totalorder %v837, 0
    %vm846 = vcmp.ne.s32.totalorder %v838, 0
    %vm847 = vcmp.ne.s32.totalorder %v839, 0
    %vm848 = vcmp.ne.s32.totalorder %v840, 0
    %vm849 = vcmp.ne.s32.totalorder %v841, 0
    %vm850 = vcmp.ne.s32.totalorder %v842, 0
    %vm851 = vcmp.ne.s32.totalorder %v843, 0
    %v852 = vsel %vm844, 1, 0
    %v853 = vsel %vm845, 1, 0
    %v854 = vsel %vm846, 1, 0
    %v855 = vsel %vm847, 1, 0
    %v856 = vsel %vm848, 1, 0
    %v857 = vsel %vm849, 1, 0
    %v858 = vsel %vm850, 1, 0
    %v859 = vsel %vm851, 1, 0
    %vm860 = vcmp.eq.s32.totalorder %v852, 1
    %vm861 = vcmp.eq.s32.totalorder %v853, 1
    %vm862 = vcmp.eq.s32.totalorder %v854, 1
    %vm863 = vcmp.eq.s32.totalorder %v855, 1
    %vm864 = vcmp.eq.s32.totalorder %v856, 1
    %vm865 = vcmp.eq.s32.totalorder %v857, 1
    %vm866 = vcmp.eq.s32.totalorder %v858, 1
    %vm867 = vcmp.eq.s32.totalorder %v859, 1
    %v868 = vsel %vm860, -1e+30, %v820
    %v869 = vsel %vm861, -1e+30, %v821
    %v870 = vsel %vm862, -1e+30, %v822
    %v871 = vsel %vm863, -1e+30, %v823
    %v872 = vsel %vm864, -1e+30, %v824
    %v873 = vsel %vm865, -1e+30, %v825
    %v874 = vsel %vm866, -1e+30, %v826
    %v875 = vsel %vm867, -1e+30, %v827
    %v876 = vsel %vm860, -1e+30, %v828
    %v877 = vsel %vm861, -1e+30, %v829
    %v878 = vsel %vm862, -1e+30, %v830
    %v879 = vsel %vm863, -1e+30, %v831
    %v880 = vsel %vm864, -1e+30, %v832
    %v881 = vsel %vm865, -1e+30, %v833
    %v882 = vsel %vm866, -1e+30, %v834
    %v883 = vsel %vm867, -1e+30, %v835
    %vm884 = vcmask 64512
    %v885 = vsel %vm884, %v868, -inf
    %886 = vmax.xlane.f32.xlu0 %v885
    %v887 = vpop.xlane.xlu0 %886
    %v888 = vsel %vm884, %v869, -inf
    %889 = vmax.xlane.f32.xlu0 %v888
    %v890 = vpop.xlane.xlu0 %889
    %v891 = vsel %vm884, %v870, -inf
    %892 = vmax.xlane.f32.xlu0 %v891
    %v893 = vpop.xlane.xlu0 %892
    %v894 = vsel %vm884, %v871, -inf
    %895 = vmax.xlane.f32.xlu0 %v894
    %v896 = vpop.xlane.xlu0 %895
    %v897 = vsel %vm884, %v872, -inf
    %898 = vmax.xlane.f32.xlu0 %v897
    %v899 = vpop.xlane.xlu0 %898
    %v900 = vsel %vm884, %v873, -inf
    %901 = vmax.xlane.f32.xlu0 %v900
    %v902 = vpop.xlane.xlu0 %901
    %v903 = vsel %vm884, %v874, -inf
    %904 = vmax.xlane.f32.xlu0 %v903
    %v905 = vpop.xlane.xlu0 %904
    %v906 = vsel %vm884, %v875, -inf
    %907 = vmax.xlane.f32.xlu0 %v906
    %v908 = vpop.xlane.xlu0 %907
    %v909 = vsel %vm884, %v876, -inf
    %910 = vmax.xlane.f32.xlu0 %v909
    %v911 = vpop.xlane.xlu0 %910
    %v912 = vsel %vm884, %v877, -inf
    %913 = vmax.xlane.f32.xlu0 %v912
    %v914 = vpop.xlane.xlu0 %913
    %v915 = vsel %vm884, %v878, -inf
    %916 = vmax.xlane.f32.xlu0 %v915
    %v917 = vpop.xlane.xlu0 %916
    %v918 = vsel %vm884, %v879, -inf
    %919 = vmax.xlane.f32.xlu0 %v918
    %v920 = vpop.xlane.xlu0 %919
    %v921 = vsel %vm884, %v880, -inf
    %922 = vmax.xlane.f32.xlu0 %v921
    %v923 = vpop.xlane.xlu0 %922
    %v924 = vsel %vm884, %v881, -inf
    %925 = vmax.xlane.f32.xlu0 %v924
    %v926 = vpop.xlane.xlu0 %925
    %v927 = vsel %vm884, %v882, -inf
    %928 = vmax.xlane.f32.xlu0 %v927
    %v929 = vpop.xlane.xlu0 %928
    %v930 = vsel %vm884, %v883, -inf
    %931 = vmax.xlane.f32.xlu0 %v930
    %v932 = vpop.xlane.xlu0 %931
    %v933 = vsub.f32 %v868, %v887
    %v934 = vsub.f32 %v869, %v890
    %v935 = vsub.f32 %v870, %v893
    %v936 = vsub.f32 %v871, %v896
    %v937 = vsub.f32 %v872, %v899
    %v938 = vsub.f32 %v873, %v902
    %v939 = vsub.f32 %v874, %v905
    %v940 = vsub.f32 %v875, %v908
    %v941 = vsub.f32 %v876, %v911
    %v942 = vsub.f32 %v877, %v914
    %v943 = vsub.f32 %v878, %v917
    %v944 = vsub.f32 %v879, %v920
    %v945 = vsub.f32 %v880, %v923
    %v946 = vsub.f32 %v881, %v926
    %v947 = vsub.f32 %v882, %v929
    %v948 = vsub.f32 %v883, %v932
    %v949 = vmul.f32 %v933, 1.442695
    %v950 = vpow.pop %v949
    %v951 = vmul.f32 %v934, 1.442695
    %v952 = vpow.pop %v951
    %v953 = vmul.f32 %v935, 1.442695
    %v954 = vpow.pop %v953
    %v955 = vmul.f32 %v936, 1.442695
    %v956 = vpow.pop %v955
    %v957 = vmul.f32 %v937, 1.442695
    %v958 = vpow.pop %v957
    %v959 = vmul.f32 %v938, 1.442695
    %v960 = vpow.pop %v959
    %v961 = vmul.f32 %v939, 1.442695
    %v962 = vpow.pop %v961
    %v963 = vmul.f32 %v940, 1.442695
    %v964 = vpow.pop %v963
    %v965 = vmul.f32 %v941, 1.442695
    %v966 = vpow.pop %v965
    %v967 = vmul.f32 %v942, 1.442695
    %v968 = vpow.pop %v967
    %v969 = vmul.f32 %v943, 1.442695
    %v970 = vpow.pop %v969
    %v971 = vmul.f32 %v944, 1.442695
    %v972 = vpow.pop %v971
    %v973 = vmul.f32 %v945, 1.442695
    %v974 = vpow.pop %v973
    %v975 = vmul.f32 %v946, 1.442695
    %v976 = vpow.pop %v975
    %v977 = vmul.f32 %v947, 1.442695
    %v978 = vpow.pop %v977
    %v979 = vmul.f32 %v948, 1.442695
    %v980 = vpow.pop %v979
    %v981 = vsel %vm884, %v950, 0.0
    %982 = vadd.xlane.f32.xlu0 %v981
    %v983 = vpop.xlane.xlu0 %982
    %v984 = vsel %vm884, %v952, 0.0
    %985 = vadd.xlane.f32.xlu0 %v984
    %v986 = vpop.xlane.xlu0 %985
    %v987 = vsel %vm884, %v954, 0.0
    %988 = vadd.xlane.f32.xlu0 %v987
    %v989 = vpop.xlane.xlu0 %988
    %v990 = vsel %vm884, %v956, 0.0
    %991 = vadd.xlane.f32.xlu0 %v990
    %v992 = vpop.xlane.xlu0 %991
    %v993 = vsel %vm884, %v958, 0.0
    %994 = vadd.xlane.f32.xlu0 %v993
    %v995 = vpop.xlane.xlu0 %994
    %v996 = vsel %vm884, %v960, 0.0
    %997 = vadd.xlane.f32.xlu0 %v996
    %v998 = vpop.xlane.xlu0 %997
    %v999 = vsel %vm884, %v962, 0.0
    %1000 = vadd.xlane.f32.xlu0 %v999
    %v1001 = vpop.xlane.xlu0 %1000
    %v1002 = vsel %vm884, %v964, 0.0
    %1003 = vadd.xlane.f32.xlu0 %v1002
    %v1004 = vpop.xlane.xlu0 %1003
    %v1005 = vsel %vm884, %v966, 0.0
    %1006 = vadd.xlane.f32.xlu0 %v1005
    %v1007 = vpop.xlane.xlu0 %1006
    %v1008 = vsel %vm884, %v968, 0.0
    %1009 = vadd.xlane.f32.xlu0 %v1008
    %v1010 = vpop.xlane.xlu0 %1009
    %v1011 = vsel %vm884, %v970, 0.0
    %1012 = vadd.xlane.f32.xlu0 %v1011
    %v1013 = vpop.xlane.xlu0 %1012
    %v1014 = vsel %vm884, %v972, 0.0
    %1015 = vadd.xlane.f32.xlu0 %v1014
    %v1016 = vpop.xlane.xlu0 %1015
    %v1017 = vsel %vm884, %v974, 0.0
    %1018 = vadd.xlane.f32.xlu0 %v1017
    %v1019 = vpop.xlane.xlu0 %1018
    %v1020 = vsel %vm884, %v976, 0.0
    %1021 = vadd.xlane.f32.xlu0 %v1020
    %v1022 = vpop.xlane.xlu0 %1021
    %v1023 = vsel %vm884, %v978, 0.0
    %1024 = vadd.xlane.f32.xlu0 %v1023
    %v1025 = vpop.xlane.xlu0 %1024
    %v1026 = vsel %vm884, %v980, 0.0
    %1027 = vadd.xlane.f32.xlu0 %v1026
    %v1028 = vpop.xlane.xlu0 %1027
    %v1029 = vrcp.pop %v983
    %v1030 = vrcp.pop %v986
    %v1031 = vrcp.pop %v989
    %v1032 = vrcp.pop %v992
    %v1033 = vrcp.pop %v995
    %v1034 = vrcp.pop %v998
    %v1035 = vrcp.pop %v1001
    %v1036 = vrcp.pop %v1004
    %v1037 = vrcp.pop %v1007
    %v1038 = vrcp.pop %v1010
    %v1039 = vrcp.pop %v1013
    %v1040 = vrcp.pop %v1016
    %v1041 = vrcp.pop %v1019
    %v1042 = vrcp.pop %v1022
    %v1043 = vrcp.pop %v1025
    %v1044 = vrcp.pop %v1028
    %v1045 = vmul.f32 %v950, %v1029
    %v1046 = vmul.f32 %v952, %v1030
    %v1047 = vmul.f32 %v954, %v1031
    %v1048 = vmul.f32 %v956, %v1032
    %v1049 = vmul.f32 %v958, %v1033
    %v1050 = vmul.f32 %v960, %v1034
    %v1051 = vmul.f32 %v962, %v1035
    %v1052 = vmul.f32 %v964, %v1036
    %v1053 = vmul.f32 %v966, %v1037
    %v1054 = vmul.f32 %v968, %v1038
    %v1055 = vmul.f32 %v970, %v1039
    %v1056 = vmul.f32 %v972, %v1040
    %v1057 = vmul.f32 %v974, %v1041
    %v1058 = vmul.f32 %v976, %v1042
    %v1059 = vmul.f32 %v978, %v1043
    %v1060 = vmul.f32 %v980, %v1044
    %v1062 = vsel %vm884, %v1045, 0
    %v1065 = vsel %vm884, %v1046, 0
    %v1068 = vsel %vm884, %v1047, 0
    %v1071 = vsel %vm884, %v1048, 0
    %v1074 = vsel %vm884, %v1049, 0
    %v1077 = vsel %vm884, %v1050, 0
    %v1080 = vsel %vm884, %v1051, 0
    %v1083 = vsel %vm884, %v1052, 0
    %1085 = vmatprep.subr.mxu0 0.0
    %1086 = vmatpush1.msra.mxu0 %v348
    %1087 = vmatprep.subr.mxu0 0.0
    %1088 = vmatpush1.msra.mxu0 0.0
    %1089 = vmatprep.subr.mxu0 0.0
    %1090 = vmatpush1.msra.mxu0 0.0
    %1091 = vmatprep.subr.mxu0 0.0
    %1092 = vmatpush1.msra.mxu0 0.0
    %1093 = vmatprep.subr.mxu0 0.0
    %1094 = vmatpush1.msra.mxu0 0.0
    %1095 = vmatprep.subr.mxu0 0.0
    %1096 = vmatpush1.msra.mxu0 0.0
    %1097 = vmatprep.subr.mxu0 0.0
    %1098 = vmatpush1.msra.mxu0 0.0
    %1099 = vmatprep.subr.mxu0 0.0
    %1100 = vmatpush1.msra.mxu0 0.0
    %1101 = vmatprep.subr.mxu0 0.0
    %1102 = vmatpush1.msra.mxu0 0.0
    %1103 = vmatprep.subr.mxu0 0.0
    %1104 = vmatpush1.msra.mxu0 0.0
    %1105 = vmatprep.subr.mxu0 0.0
    %1106 = vmatpush1.msra.mxu0 0.0
    %1107 = vmatprep.subr.mxu0 0.0
    %1108 = vmatpush1.msra.mxu0 0.0
    %1109 = vmatprep.subr.mxu0 0.0
    %1110 = vmatpush1.msra.mxu0 0.0
    %1111 = vmatprep.subr.mxu0 0.0
    %1112 = vmatpush1.msra.mxu0 0.0
    %1113 = vmatprep.subr.mxu0 0.0
    %1114 = vmatpush1.msra.mxu0 0.0
    %1115 = vmatprep.subr.mxu0 0.0
    %1116 = vmatpush1.msra.mxu0 0.0
    %1117 = vmatprep.subr.mxu0 0.0
    %1118 = vmatpush1.msra.mxu0 0.0
    %1119 = vmatprep.subr.mxu0 0.0
    %1120 = vmatpush1.msra.mxu0 0.0
    %1121 = vmatprep.subr.mxu0 0.0
    %1122 = vmatpush1.msra.mxu0 0.0
    %1123 = vmatprep.subr.mxu0 0.0
    %1124 = vmatpush1.msra.mxu0 0.0
    %1125 = vmatprep.subr.mxu0 0.0
    %1126 = vmatpush1.msra.mxu0 0.0
    %1127 = vmatprep.subr.mxu0 0.0
    %1128 = vmatpush1.msra.mxu0 0.0
    %1129 = vmatprep.subr.mxu0 0.0
    %1130 = vmatpush1.msra.mxu0 0.0
    %1131 = vmatprep.subr.mxu0 0.0
    %1132 = vmatpush1.msra.mxu0 0.0
    %1133 = vmatprep.subr.mxu0 0.0
    %1134 = vmatpush1.msra.mxu0 0.0
    %1135 = vmatprep.subr.mxu0 0.0
    %1136 = vmatpush1.msra.mxu0 0.0
    %1137 = vmatprep.subr.mxu0 0.0
    %1138 = vmatpush1.msra.mxu0 0.0
    %1139 = vmatprep.subr.mxu0 0.0
    %1140 = vmatpush1.msra.mxu0 0.0
    %1141 = vmatprep.subr.mxu0 0.0
    %1142 = vmatpush1.msra.mxu0 0.0
    %1143 = vmatprep.subr.mxu0 0.0
    %1144 = vmatpush1.msra.mxu0 0.0
    %1145 = vmatprep.subr.mxu0 0.0
    %1146 = vmatpush1.msra.mxu0 0.0
    %1147 = vmatprep.subr.mxu0 0.0
    %1148 = vmatpush1.msra.mxu0 0.0
    %1149 = vmatprep.mubr.f32.mxu0 0.0
    %1150 = vmatmul.mubr.f32.gmra.mrb[0].mxu0 %v1062
    %v1151 = vpop.f32.mrb[0].mxu0
    %v1152 = vadd.f32 0.0, %v1151
    %v1153 = vpop.f32.mrb[0].mxu0
    %1154 = vmatprep.mubr.f32.mxu0 0.0
    %1155 = vmatmul.mubr.f32.gmra.mrb[0].mxu0 %v1065
    %v1156 = vpop.f32.mrb[0].mxu0
    %v1157 = vadd.f32 0.0, %v1156
    %v1158 = vpop.f32.mrb[0].mxu0
    %1159 = vmatprep.mubr.f32.mxu0 0.0
    %1160 = vmatmul.mubr.f32.gmra.mrb[0].mxu0 %v1068
    %v1161 = vpop.f32.mrb[0].mxu0
    %v1162 = vadd.f32 0.0, %v1161
    %v1163 = vpop.f32.mrb[0].mxu0
    %1164 = vmatprep.mubr.f32.mxu0 0.0
    %1165 = vmatmul.mubr.f32.gmra.mrb[0].mxu0 %v1071
    %v1166 = vpop.f32.mrb[0].mxu0
    %v1167 = vadd.f32 0.0, %v1166
    %v1168 = vpop.f32.mrb[0].mxu0
    %1169 = vmatprep.mubr.f32.mxu0 0.0
    %1170 = vmatmul.mubr.f32.gmra.mrb[0].mxu0 %v1074
    %v1171 = vpop.f32.mrb[0].mxu0
    %v1172 = vadd.f32 0.0, %v1171
    %v1173 = vpop.f32.mrb[0].mxu0
    %1174 = vmatprep.mubr.f32.mxu0 0.0
    %1175 = vmatmul.mubr.f32.gmra.mrb[0].mxu0 %v1077
    %v1176 = vpop.f32.mrb[0].mxu0
    %v1177 = vadd.f32 0.0, %v1176
    %v1178 = vpop.f32.mrb[0].mxu0
    %1179 = vmatprep.mubr.f32.mxu0 0.0
    %1180 = vmatmul.mubr.f32.gmra.mrb[0].mxu0 %v1080
    %v1181 = vpop.f32.mrb[0].mxu0
    %v1182 = vadd.f32 0.0, %v1181
    %v1183 = vpop.f32.mrb[0].mxu0
    %1184 = vmatprep.mubr.f32.mxu0 0.0
    %1185 = vmatmul.mubr.f32.gmra.mrb[0].mxu0 %v1083
    %v1186 = vpop.f32.mrb[0].mxu0
    %v1187 = vadd.f32 0.0, %v1186
    %v1188 = vpop.f32.mrb[0].mxu0
    %1189 = vdwg.mxu0
    %v1191 = vsel %vm884, %v1053, 0
    %v1194 = vsel %vm884, %v1054, 0
    %v1197 = vsel %vm884, %v1055, 0
    %v1200 = vsel %vm884, %v1056, 0
    %v1203 = vsel %vm884, %v1057, 0
    %v1206 = vsel %vm884, %v1058, 0
    %v1209 = vsel %vm884, %v1059, 0
    %v1212 = vsel %vm884, %v1060, 0
    %1214 = vmatprep.subr.mxu0 0.0
    %1215 = vmatpush1.msra.mxu0 %v351
    %1216 = vmatprep.subr.mxu0 0.0
    %1217 = vmatpush1.msra.mxu0 0.0
    %1218 = vmatprep.subr.mxu0 0.0
    %1219 = vmatpush1.msra.mxu0 0.0
    %1220 = vmatprep.subr.mxu0 0.0
    %1221 = vmatpush1.msra.mxu0 0.0
    %1222 = vmatprep.subr.mxu0 0.0
    %1223 = vmatpush1.msra.mxu0 0.0
    %1224 = vmatprep.subr.mxu0 0.0
    %1225 = vmatpush1.msra.mxu0 0.0
    %1226 = vmatprep.subr.mxu0 0.0
    %1227 = vmatpush1.msra.mxu0 0.0
    %1228 = vmatprep.subr.mxu0 0.0
    %1229 = vmatpush1.msra.mxu0 0.0
    %1230 = vmatprep.subr.mxu0 0.0
    %1231 = vmatpush1.msra.mxu0 0.0
    %1232 = vmatprep.subr.mxu0 0.0
    %1233 = vmatpush1.msra.mxu0 0.0
    %1234 = vmatprep.subr.mxu0 0.0
    %1235 = vmatpush1.msra.mxu0 0.0
    %1236 = vmatprep.subr.mxu0 0.0
    %1237 = vmatpush1.msra.mxu0 0.0
    %1238 = vmatprep.subr.mxu0 0.0
    %1239 = vmatpush1.msra.mxu0 0.0
    %1240 = vmatprep.subr.mxu0 0.0
    %1241 = vmatpush1.msra.mxu0 0.0
    %1242 = vmatprep.subr.mxu0 0.0
    %1243 = vmatpush1.msra.mxu0 0.0
    %1244 = vmatprep.subr.mxu0 0.0
    %1245 = vmatpush1.msra.mxu0 0.0
    %1246 = vmatprep.subr.mxu0 0.0
    %1247 = vmatpush1.msra.mxu0 0.0
    %1248 = vmatprep.subr.mxu0 0.0
    %1249 = vmatpush1.msra.mxu0 0.0
    %1250 = vmatprep.subr.mxu0 0.0
    %1251 = vmatpush1.msra.mxu0 0.0
    %1252 = vmatprep.subr.mxu0 0.0
    %1253 = vmatpush1.msra.mxu0 0.0
    %1254 = vmatprep.subr.mxu0 0.0
    %1255 = vmatpush1.msra.mxu0 0.0
    %1256 = vmatprep.subr.mxu0 0.0
    %1257 = vmatpush1.msra.mxu0 0.0
    %1258 = vmatprep.subr.mxu0 0.0
    %1259 = vmatpush1.msra.mxu0 0.0
    %1260 = vmatprep.subr.mxu0 0.0
    %1261 = vmatpush1.msra.mxu0 0.0
    %1262 = vmatprep.subr.mxu0 0.0
    %1263 = vmatpush1.msra.mxu0 0.0
    %1264 = vmatprep.subr.mxu0 0.0
    %1265 = vmatpush1.msra.mxu0 0.0
    %1266 = vmatprep.subr.mxu0 0.0
    %1267 = vmatpush1.msra.mxu0 0.0
    %1268 = vmatprep.subr.mxu0 0.0
    %1269 = vmatpush1.msra.mxu0 0.0
    %1270 = vmatprep.subr.mxu0 0.0
    %1271 = vmatpush1.msra.mxu0 0.0
    %1272 = vmatprep.subr.mxu0 0.0
    %1273 = vmatpush1.msra.mxu0 0.0
    %1274 = vmatprep.subr.mxu0 0.0
    %1275 = vmatpush1.msra.mxu0 0.0
    %1276 = vmatprep.subr.mxu0 0.0
    %1277 = vmatpush1.msra.mxu0 0.0
    %1278 = vmatprep.mubr.f32.mxu0 0.0
    %1279 = vmatmul.mubr.f32.gmra.mrb[0].mxu0 %v1191
    %v1280 = vpop.f32.mrb[0].mxu0
    %v1281 = vadd.f32 0.0, %v1280
    %v1282 = vpop.f32.mrb[0].mxu0
    %1283 = vmatprep.mubr.f32.mxu0 0.0
    %1284 = vmatmul.mubr.f32.gmra.mrb[0].mxu0 %v1194
    %v1285 = vpop.f32.mrb[0].mxu0
    %v1286 = vadd.f32 0.0, %v1285
    %v1287 = vpop.f32.mrb[0].mxu0
    %1288 = vmatprep.mubr.f32.mxu0 0.0
    %1289 = vmatmul.mubr.f32.gmra.mrb[0].mxu0 %v1197
    %v1290 = vpop.f32.mrb[0].mxu0
    %v1291 = vadd.f32 0.0, %v1290
    %v1292 = vpop.f32.mrb[0].mxu0
    %1293 = vmatprep.mubr.f32.mxu0 0.0
    %1294 = vmatmul.mubr.f32.gmra.mrb[0].mxu0 %v1200
    %v1295 = vpop.f32.mrb[0].mxu0
    %v1296 = vadd.f32 0.0, %v1295
    %v1297 = vpop.f32.mrb[0].mxu0
    %1298 = vmatprep.mubr.f32.mxu0 0.0
    %1299 = vmatmul.mubr.f32.gmra.mrb[0].mxu0 %v1203
    %v1300 = vpop.f32.mrb[0].mxu0
    %v1301 = vadd.f32 0.0, %v1300
    %v1302 = vpop.f32.mrb[0].mxu0
    %1303 = vmatprep.mubr.f32.mxu0 0.0
    %1304 = vmatmul.mubr.f32.gmra.mrb[0].mxu0 %v1206
    %v1305 = vpop.f32.mrb[0].mxu0
    %v1306 = vadd.f32 0.0, %v1305
    %v1307 = vpop.f32.mrb[0].mxu0
    %1308 = vmatprep.mubr.f32.mxu0 0.0
    %1309 = vmatmul.mubr.f32.gmra.mrb[0].mxu0 %v1209
    %v1310 = vpop.f32.mrb[0].mxu0
    %v1311 = vadd.f32 0.0, %v1310
    %v1312 = vpop.f32.mrb[0].mxu0
    %1313 = vmatprep.mubr.f32.mxu0 0.0
    %1314 = vmatmul.mubr.f32.gmra.mrb[0].mxu0 %v1212
    %v1315 = vpop.f32.mrb[0].mxu0
    %v1316 = vadd.f32 0.0, %v1315
    %v1317 = vpop.f32.mrb[0].mxu0
    %1318 = vdwg.mxu0
    %v1319 = vmul.f32 %v1152, %v532
    %v1320 = vmul.f32 %v1157, %v533
    %v1321 = vmul.f32 %v1162, %v534
    %v1322 = vmul.f32 %v1167, %v535
    %v1323 = vmul.f32 %v1172, %v536
    %v1324 = vmul.f32 %v1177, %v537
    %v1325 = vmul.f32 %v1182, %v538
    %v1326 = vmul.f32 %v1187, %v539
    %v1327 = vmul.f32 %v1281, %v532
    %v1328 = vmul.f32 %v1286, %v533
    %v1329 = vmul.f32 %v1291, %v534
    %v1330 = vmul.f32 %v1296, %v535
    %v1331 = vmul.f32 %v1301, %v536
    %v1332 = vmul.f32 %v1306, %v537
    %v1333 = vmul.f32 %v1311, %v538
    %v1334 = vmul.f32 %v1316, %v539
    %v1335 = vadd.f32 %v1319, %v1320
    %v1336 = vadd.f32 %v1327, %v1328
    %v1337 = vadd.f32 %v1335, %v1321
    %v1338 = vadd.f32 %v1336, %v1329
    %v1339 = vadd.f32 %v1337, %v1322
    %v1340 = vadd.f32 %v1338, %v1330
    %v1341 = vadd.f32 %v1339, %v1323
    %v1342 = vadd.f32 %v1340, %v1331
    %v1343 = vadd.f32 %v1341, %v1324
    %v1344 = vadd.f32 %v1342, %v1332
    %v1345 = vadd.f32 %v1343, %v1325
    %v1346 = vadd.f32 %v1344, %v1333
    %v1347 = vadd.f32 %v1345, %v1326
    %v1348 = vadd.f32 %v1346, %v1334
    %v1349 = vpack.c.bf16 %v1348, %v1347
    %v1350 = vld [vmem:[%s9] sm:$0xf]
    %v1351 = vld [vmem:[%s9 + $0x4] sm:$0xf]
    %v1352 = vld [vmem:[%s9 + $0x8] sm:$0xf]
    %v1353 = vld [vmem:[%s9 + $0xc] sm:$0xf]
    %v1354 = vld [vmem:[%s9 + $0x10] sm:$0xf]
    %v1355 = vld [vmem:[%s9 + $0x14] sm:$0xf]
    %v1356 = vld [vmem:[%s9 + $0x18] sm:$0xf]
    %v1357 = vld [vmem:[%s9 + $0x1c] sm:$0xf]
    %v1358 = vld [vmem:[%s10] sm:$0x1]
    %v1360 = vlaneseq
    %v1361 = vshrl.u32 %v1360, 7
    %v1362 = vsub.s32 0, %v1361
    %v1363 = vrot.slane %v1358, %v1362
    %v1373 = vunpack.c.l.b16 %v1350
    %v1374 = vunpack.c.l.b16 %v1351
    %v1375 = vunpack.c.l.b16 %v1352
    %v1376 = vunpack.c.l.b16 %v1353
    %v1377 = vunpack.c.l.b16 %v1354
    %v1378 = vunpack.c.l.b16 %v1355
    %v1379 = vunpack.c.l.b16 %v1356
    %v1380 = vunpack.c.l.b16 %v1357
    %v1381 = vpack.c.b16 %v1374, %v1373
    %v1382 = vpack.c.b16 %v1376, %v1375
    %v1383 = vpack.c.b16 %v1378, %v1377
    %v1384 = vpack.c.b16 %v1380, %v1379
    %v1390 = vsel %vm62, %v1349, 0
    %1392 = vmatprep.subr.bf16.mxu0 0
    %1393 = vmatpush1.bf16.msra.mxu0 %v1381
    %1394 = vmatprep.subr.bf16.mxu0 0
    %1395 = vmatpush1.bf16.msra.mxu0 %v1382
    %1396 = vmatprep.subr.bf16.mxu0 0
    %1397 = vmatpush1.bf16.msra.mxu0 %v1383
    %1398 = vmatprep.subr.bf16.mxu0 0
    %1399 = vmatpush1.bf16.msra.mxu0 %v1384
    %1400 = vmatprep.subr.bf16.mxu0 0
    %1401 = vmatpush1.bf16.msra.mxu0 0
    %1402 = vmatprep.subr.bf16.mxu0 0
    %1403 = vmatpush1.bf16.msra.mxu0 0
    %1404 = vmatprep.subr.bf16.mxu0 0
    %1405 = vmatpush1.bf16.msra.mxu0 0
    %1406 = vmatprep.subr.bf16.mxu0 0
    %1407 = vmatpush1.bf16.msra.mxu0 0
    %1408 = vmatprep.subr.bf16.mxu0 0
    %1409 = vmatpush1.bf16.msra.mxu0 0
    %1410 = vmatprep.subr.bf16.mxu0 0
    %1411 = vmatpush1.bf16.msra.mxu0 0
    %1412 = vmatprep.subr.bf16.mxu0 0
    %1413 = vmatpush1.bf16.msra.mxu0 0
    %1414 = vmatprep.subr.bf16.mxu0 0
    %1415 = vmatpush1.bf16.msra.mxu0 0
    %1416 = vmatprep.subr.bf16.mxu0 0
    %1417 = vmatpush1.bf16.msra.mxu0 0
    %1418 = vmatprep.subr.bf16.mxu0 0
    %1419 = vmatpush1.bf16.msra.mxu0 0
    %1420 = vmatprep.subr.bf16.mxu0 0
    %1421 = vmatpush1.bf16.msra.mxu0 0
    %1422 = vmatprep.subr.bf16.mxu0 0
    %1423 = vmatpush1.bf16.msra.mxu0 0
    %1424 = vmatprep.mubr.bf16.mxu0 0
    %1425 = vmatmul.mubr.bf16.gmra.mrb[0].mxu0 %v1390
    %v1426 = vpop.f32.mrb[0].mxu0
    %v1427 = vadd.f32 %v1363, %v1426
    %v1428 = vpop.f32.mrb[0].mxu0
    %v1429 = vpop.f32.mrb[0].mxu0
    %v1430 = vadd.f32 %v1363, %v1429
    %v1431 = vpop.f32.mrb[0].mxu0
    %1432 = vdwg.mxu0
    %v1433 = vadd.f32 %v58, %v1427
    %v1434 = vadd.f32 %v59, %v1430
    %v1435 = vld [vmem:[%s11] sm:$0x1]
    %v1436 = vld [vmem:[%s12] sm:$0x1]
    %v1437 = vsel %vm62, %v1433, 0.0
    %1438 = vadd.xlane.f32.xlu0 %v1437
    %v1439 = vpop.xlane.xlu0 %1438
    %v1440 = vsel %vm62, %v1434, 0.0
    %1441 = vadd.xlane.f32.xlu0 %v1440
    %v1442 = vpop.xlane.xlu0 %1441
    %v1443 = vmul.f32 %v1439, %v69
    %v1444 = vmul.f32 %v1442, %v69
    %v1445 = vsub.f32 %v1433, %v1443
    %v1446 = vsub.f32 %v1434, %v1444
    %v1447 = vmul.f32 %v1445, %v1445
    %v1448 = vmul.f32 %v1446, %v1446
    %v1449 = vsel %vm62, %v1447, 0.0
    %1450 = vadd.xlane.f32.xlu0 %v1449
    %v1451 = vpop.xlane.xlu0 %1450
    %v1452 = vsel %vm62, %v1448, 0.0
    %1453 = vadd.xlane.f32.xlu0 %v1452
    %v1454 = vpop.xlane.xlu0 %1453
    %v1455 = vmul.f32 %v1451, %v69
    %v1456 = vmul.f32 %v1454, %v69
    %v1457 = vadd.f32 %v1455, 1e-05
    %v1458 = vadd.f32 %v1456, 1e-05
    %v1459 = vrsqrt.pop %v1457
    %v1460 = vrsqrt.pop %v1458
    %v1461 = vmul.f32 %v1445, %v1459
    %v1462 = vmul.f32 %v1446, %v1460
    %v1464 = vlaneseq
    %v1465 = vshrl.u32 %v1464, 7
    %v1466 = vsub.s32 0, %v1465
    %v1467 = vrot.slane %v1435, %v1466
    %v1469 = vmul.f32 %v1461, %v1467
    %v1470 = vmul.f32 %v1462, %v1467
    %v1472 = vlaneseq
    %v1473 = vshrl.u32 %v1472, 7
    %v1474 = vsub.s32 0, %v1473
    %v1475 = vrot.slane %v1436, %v1474
    %v1477 = vadd.f32 %v1469, %v1475
    %v1478 = vadd.f32 %v1470, %v1475
    %v1479 = vpack.c.bf16 %v1478, %v1477
    %v1480 = vld [vmem:[%s13] sm:$0xff]
    %v1481 = vld [vmem:[%s13 + $0x8] sm:$0xff]
    %v1482 = vld [vmem:[%s13 + $0x10] sm:$0xff]
    %v1483 = vld [vmem:[%s13 + $0x18] sm:$0xff]
    %v1484 = vld [vmem:[%s13 + $0x20] sm:$0xff]
    %v1485 = vld [vmem:[%s13 + $0x28] sm:$0xff]
    %v1486 = vld [vmem:[%s13 + $0x30] sm:$0xff]
    %v1487 = vld [vmem:[%s13 + $0x38] sm:$0xff]
    %v1488 = vld [vmem:[%s13 + $0x40] sm:$0xff]
    %v1489 = vld [vmem:[%s13 + $0x48] sm:$0xff]
    %v1490 = vld [vmem:[%s13 + $0x50] sm:$0xff]
    %v1491 = vld [vmem:[%s13 + $0x58] sm:$0xff]
    %v1492 = vld [vmem:[%s13 + $0x60] sm:$0xff]
    %v1493 = vld [vmem:[%s13 + $0x68] sm:$0xff]
    %v1494 = vld [vmem:[%s13 + $0x70] sm:$0xff]
    %v1495 = vld [vmem:[%s13 + $0x78] sm:$0xff]
    %v1496 = vld [vmem:[%s13 + $0x80] sm:$0xff]
    %v1497 = vld [vmem:[%s13 + $0x88] sm:$0xff]
    %v1498 = vld [vmem:[%s13 + $0x90] sm:$0xff]
    %v1499 = vld [vmem:[%s13 + $0x98] sm:$0xff]
    %v1500 = vld [vmem:[%s13 + $0xa0] sm:$0xff]
    %v1501 = vld [vmem:[%s13 + $0xa8] sm:$0xff]
    %v1502 = vld [vmem:[%s13 + $0xb0] sm:$0xff]
    %v1503 = vld [vmem:[%s13 + $0xb8] sm:$0xff]
    %v1504 = vld [vmem:[%s13 + $0xc0] sm:$0xff]
    %v1505 = vld [vmem:[%s13 + $0xc8] sm:$0xff]
    %v1506 = vld [vmem:[%s13 + $0xd0] sm:$0xff]
    %v1507 = vld [vmem:[%s13 + $0xd8] sm:$0xff]
    %v1508 = vld [vmem:[%s13 + $0xe0] sm:$0xff]
    %v1509 = vld [vmem:[%s13 + $0xe8] sm:$0xff]
    %v1510 = vld [vmem:[%s13 + $0xf0] sm:$0xff]
    %v1511 = vld [vmem:[%s13 + $0xf8] sm:$0xff]
    %v1512 = vld [vmem:[%s13 + $0x100] sm:$0xff]
    %v1513 = vld [vmem:[%s13 + $0x108] sm:$0xff]
    %v1514 = vld [vmem:[%s13 + $0x110] sm:$0xff]
    %v1515 = vld [vmem:[%s13 + $0x118] sm:$0xff]
    %v1516 = vld [vmem:[%s13 + $0x120] sm:$0xff]
    %v1517 = vld [vmem:[%s13 + $0x128] sm:$0xff]
    %v1518 = vld [vmem:[%s13 + $0x130] sm:$0xff]
    %v1519 = vld [vmem:[%s13 + $0x138] sm:$0xff]
    %v1520 = vld [vmem:[%s13 + $0x140] sm:$0xff]
    %v1521 = vld [vmem:[%s13 + $0x148] sm:$0xff]
    %v1522 = vld [vmem:[%s13 + $0x150] sm:$0xff]
    %v1523 = vld [vmem:[%s13 + $0x158] sm:$0xff]
    %v1524 = vld [vmem:[%s13 + $0x160] sm:$0xff]
    %v1525 = vld [vmem:[%s13 + $0x168] sm:$0xff]
    %v1526 = vld [vmem:[%s13 + $0x170] sm:$0xff]
    %v1527 = vld [vmem:[%s13 + $0x178] sm:$0xff]
    %v1528 = vld [vmem:[%s13 + $0x180] sm:$0xff]
    %v1529 = vld [vmem:[%s13 + $0x188] sm:$0xff]
    %v1530 = vld [vmem:[%s13 + $0x190] sm:$0xff]
    %v1531 = vld [vmem:[%s13 + $0x198] sm:$0xff]
    %v1532 = vld [vmem:[%s13 + $0x1a0] sm:$0xff]
    %v1533 = vld [vmem:[%s13 + $0x1a8] sm:$0xff]
    %v1534 = vld [vmem:[%s13 + $0x1b0] sm:$0xff]
    %v1535 = vld [vmem:[%s13 + $0x1b8] sm:$0xff]
    %v1536 = vld [vmem:[%s13 + $0x1c0] sm:$0xff]
    %v1537 = vld [vmem:[%s13 + $0x1c8] sm:$0xff]
    %v1538 = vld [vmem:[%s13 + $0x1d0] sm:$0xff]
    %v1539 = vld [vmem:[%s13 + $0x1d8] sm:$0xff]
    %v1540 = vld [vmem:[%s13 + $0x1e0] sm:$0xff]
    %v1541 = vld [vmem:[%s13 + $0x1e8] sm:$0xff]
    %v1542 = vld [vmem:[%s13 + $0x1f0] sm:$0xff]
    %v1543 = vld [vmem:[%s13 + $0x1f8] sm:$0xff]
    %v1544 = vld [vmem:[%s13 + $0x200] sm:$0xff]
    %v1545 = vld [vmem:[%s13 + $0x208] sm:$0xff]
    %v1546 = vld [vmem:[%s13 + $0x210] sm:$0xff]
    %v1547 = vld [vmem:[%s13 + $0x218] sm:$0xff]
    %v1548 = vld [vmem:[%s13 + $0x220] sm:$0xff]
    %v1549 = vld [vmem:[%s13 + $0x228] sm:$0xff]
    %v1550 = vld [vmem:[%s13 + $0x230] sm:$0xff]
    %v1551 = vld [vmem:[%s13 + $0x238] sm:$0xff]
    %v1552 = vld [vmem:[%s13 + $0x240] sm:$0xff]
    %v1553 = vld [vmem:[%s13 + $0x248] sm:$0xff]
    %v1554 = vld [vmem:[%s13 + $0x250] sm:$0xff]
    %v1555 = vld [vmem:[%s13 + $0x258] sm:$0xff]
    %v1556 = vld [vmem:[%s13 + $0x260] sm:$0xff]
    %v1557 = vld [vmem:[%s13 + $0x268] sm:$0xff]
    %v1558 = vld [vmem:[%s13 + $0x270] sm:$0xff]
    %v1559 = vld [vmem:[%s13 + $0x278] sm:$0xff]
    %v1560 = vld [vmem:[%s13 + $0x280] sm:$0xff]
    %v1561 = vld [vmem:[%s13 + $0x288] sm:$0xff]
    %v1562 = vld [vmem:[%s13 + $0x290] sm:$0xff]
    %v1563 = vld [vmem:[%s13 + $0x298] sm:$0xff]
    %v1564 = vld [vmem:[%s13 + $0x2a0] sm:$0xff]
    %v1565 = vld [vmem:[%s13 + $0x2a8] sm:$0xff]
    %v1566 = vld [vmem:[%s13 + $0x2b0] sm:$0xff]
    %v1567 = vld [vmem:[%s13 + $0x2b8] sm:$0xff]
    %v1568 = vld [vmem:[%s13 + $0x2c0] sm:$0xff]
    %v1569 = vld [vmem:[%s13 + $0x2c8] sm:$0xff]
    %v1570 = vld [vmem:[%s13 + $0x2d0] sm:$0xff]
    %v1571 = vld [vmem:[%s13 + $0x2d8] sm:$0xff]
    %v1572 = vld [vmem:[%s13 + $0x2e0] sm:$0xff]
    %v1573 = vld [vmem:[%s13 + $0x2e8] sm:$0xff]
    %v1574 = vld [vmem:[%s13 + $0x2f0] sm:$0xff]
    %v1575 = vld [vmem:[%s13 + $0x2f8] sm:$0xff]
    %v1576 = vld [vmem:[%s14] sm:$0xff]
    %v1577 = vld [vmem:[%s14 + $0x8] sm:$0xff]
    %v1578 = vld [vmem:[%s14 + $0x10] sm:$0xff]
    %v1582 = vlaneseq
    %v1583 = vshrl.u32 %v1582, 7
    %v1584 = vsub.s32 0, %v1583
    %v1585 = vrot.slane %v1576, %v1584
    %v1586 = vlaneseq
    %v1587 = vshrl.u32 %v1586, 7
    %v1588 = vsub.s32 1, %v1587
    %v1589 = vrot.slane %v1576, %v1588
    %v1590 = vlaneseq
    %v1591 = vshrl.u32 %v1590, 7
    %v1592 = vsub.s32 2, %v1591
    %v1593 = vrot.slane %v1576, %v1592
    %v1594 = vlaneseq
    %v1595 = vshrl.u32 %v1594, 7
    %v1596 = vsub.s32 3, %v1595
    %v1597 = vrot.slane %v1576, %v1596
    %v1598 = vlaneseq
    %v1599 = vshrl.u32 %v1598, 7
    %v1600 = vsub.s32 4, %v1599
    %v1601 = vrot.slane %v1576, %v1600
    %v1602 = vlaneseq
    %v1603 = vshrl.u32 %v1602, 7
    %v1604 = vsub.s32 5, %v1603
    %v1605 = vrot.slane %v1576, %v1604
    %v1606 = vlaneseq
    %v1607 = vshrl.u32 %v1606, 7
    %v1608 = vsub.s32 6, %v1607
    %v1609 = vrot.slane %v1576, %v1608
    %v1610 = vlaneseq
    %v1611 = vshrl.u32 %v1610, 7
    %v1612 = vsub.s32 7, %v1611
    %v1613 = vrot.slane %v1576, %v1612
    %v1614 = vlaneseq
    %v1615 = vshrl.u32 %v1614, 7
    %v1616 = vsub.s32 0, %v1615
    %v1617 = vrot.slane %v1577, %v1616
    %v1618 = vlaneseq
    %v1619 = vshrl.u32 %v1618, 7
    %v1620 = vsub.s32 1, %v1619
    %v1621 = vrot.slane %v1577, %v1620
    %v1622 = vlaneseq
    %v1623 = vshrl.u32 %v1622, 7
    %v1624 = vsub.s32 2, %v1623
    %v1625 = vrot.slane %v1577, %v1624
    %v1626 = vlaneseq
    %v1627 = vshrl.u32 %v1626, 7
    %v1628 = vsub.s32 3, %v1627
    %v1629 = vrot.slane %v1577, %v1628
    %v1630 = vlaneseq
    %v1631 = vshrl.u32 %v1630, 7
    %v1632 = vsub.s32 4, %v1631
    %v1633 = vrot.slane %v1577, %v1632
    %v1634 = vlaneseq
    %v1635 = vshrl.u32 %v1634, 7
    %v1636 = vsub.s32 5, %v1635
    %v1637 = vrot.slane %v1577, %v1636
    %v1638 = vlaneseq
    %v1639 = vshrl.u32 %v1638, 7
    %v1640 = vsub.s32 6, %v1639
    %v1641 = vrot.slane %v1577, %v1640
    %v1642 = vlaneseq
    %v1643 = vshrl.u32 %v1642, 7
    %v1644 = vsub.s32 7, %v1643
    %v1645 = vrot.slane %v1577, %v1644
    %v1646 = vlaneseq
    %v1647 = vshrl.u32 %v1646, 7
    %v1648 = vsub.s32 0, %v1647
    %v1649 = vrot.slane %v1578, %v1648
    %v1650 = vlaneseq
    %v1651 = vshrl.u32 %v1650, 7
    %v1652 = vsub.s32 1, %v1651
    %v1653 = vrot.slane %v1578, %v1652
    %v1654 = vlaneseq
    %v1655 = vshrl.u32 %v1654, 7
    %v1656 = vsub.s32 2, %v1655
    %v1657 = vrot.slane %v1578, %v1656
    %v1658 = vlaneseq
    %v1659 = vshrl.u32 %v1658, 7
    %v1660 = vsub.s32 3, %v1659
    %v1661 = vrot.slane %v1578, %v1660
    %v1662 = vlaneseq
    %v1663 = vshrl.u32 %v1662, 7
    %v1664 = vsub.s32 4, %v1663
    %v1665 = vrot.slane %v1578, %v1664
    %v1666 = vlaneseq
    %v1667 = vshrl.u32 %v1666, 7
    %v1668 = vsub.s32 5, %v1667
    %v1669 = vrot.slane %v1578, %v1668
    %v1670 = vlaneseq
    %v1671 = vshrl.u32 %v1670, 7
    %v1672 = vsub.s32 6, %v1671
    %v1673 = vrot.slane %v1578, %v1672
    %v1674 = vlaneseq
    %v1675 = vshrl.u32 %v1674, 7
    %v1676 = vsub.s32 7, %v1675
    %v1677 = vrot.slane %v1578, %v1676
    %v1798 = vunpack.c.l.b16 %v1480
    %v1799 = vunpack.c.h.b16 %v1480
    %v1800 = vunpack.c.l.b16 %v1481
    %v1801 = vunpack.c.h.b16 %v1481
    %v1802 = vunpack.c.l.b16 %v1482
    %v1803 = vunpack.c.h.b16 %v1482
    %v1804 = vunpack.c.l.b16 %v1483
    %v1805 = vunpack.c.h.b16 %v1483
    %v1806 = vunpack.c.l.b16 %v1484
    %v1807 = vunpack.c.h.b16 %v1484
    %v1808 = vunpack.c.l.b16 %v1485
    %v1809 = vunpack.c.h.b16 %v1485
    %v1810 = vunpack.c.l.b16 %v1486
    %v1811 = vunpack.c.h.b16 %v1486
    %v1812 = vunpack.c.l.b16 %v1487
    %v1813 = vunpack.c.h.b16 %v1487
    %v1814 = vunpack.c.l.b16 %v1488
    %v1815 = vunpack.c.h.b16 %v1488
    %v1816 = vunpack.c.l.b16 %v1489
    %v1817 = vunpack.c.h.b16 %v1489
    %v1818 = vunpack.c.l.b16 %v1490
    %v1819 = vunpack.c.h.b16 %v1490
    %v1820 = vunpack.c.l.b16 %v1491
    %v1821 = vunpack.c.h.b16 %v1491
    %v1822 = vunpack.c.l.b16 %v1492
    %v1823 = vunpack.c.h.b16 %v1492
    %v1824 = vunpack.c.l.b16 %v1493
    %v1825 = vunpack.c.h.b16 %v1493
    %v1826 = vunpack.c.l.b16 %v1494
    %v1827 = vunpack.c.h.b16 %v1494
    %v1828 = vunpack.c.l.b16 %v1495
    %v1829 = vunpack.c.h.b16 %v1495
    %v1830 = vunpack.c.l.b16 %v1496
    %v1831 = vunpack.c.h.b16 %v1496
    %v1832 = vunpack.c.l.b16 %v1497
    %v1833 = vunpack.c.h.b16 %v1497
    %v1834 = vunpack.c.l.b16 %v1498
    %v1835 = vunpack.c.h.b16 %v1498
    %v1836 = vunpack.c.l.b16 %v1499
    %v1837 = vunpack.c.h.b16 %v1499
    %v1838 = vunpack.c.l.b16 %v1500
    %v1839 = vunpack.c.h.b16 %v1500
    %v1840 = vunpack.c.l.b16 %v1501
    %v1841 = vunpack.c.h.b16 %v1501
    %v1842 = vunpack.c.l.b16 %v1502
    %v1843 = vunpack.c.h.b16 %v1502
    %v1844 = vunpack.c.l.b16 %v1503
    %v1845 = vunpack.c.h.b16 %v1503
    %v1846 = vunpack.c.l.b16 %v1504
    %v1847 = vunpack.c.h.b16 %v1504
    %v1848 = vunpack.c.l.b16 %v1505
    %v1849 = vunpack.c.h.b16 %v1505
    %v1850 = vunpack.c.l.b16 %v1506
    %v1851 = vunpack.c.h.b16 %v1506
    %v1852 = vunpack.c.l.b16 %v1507
    %v1853 = vunpack.c.h.b16 %v1507
    %v1854 = vunpack.c.l.b16 %v1508
    %v1855 = vunpack.c.h.b16 %v1508
    %v1856 = vunpack.c.l.b16 %v1509
    %v1857 = vunpack.c.h.b16 %v1509
    %v1858 = vunpack.c.l.b16 %v1510
    %v1859 = vunpack.c.h.b16 %v1510
    %v1860 = vunpack.c.l.b16 %v1511
    %v1861 = vunpack.c.h.b16 %v1511
    %v1862 = vunpack.c.l.b16 %v1512
    %v1863 = vunpack.c.h.b16 %v1512
    %v1864 = vunpack.c.l.b16 %v1513
    %v1865 = vunpack.c.h.b16 %v1513
    %v1866 = vunpack.c.l.b16 %v1514
    %v1867 = vunpack.c.h.b16 %v1514
    %v1868 = vunpack.c.l.b16 %v1515
    %v1869 = vunpack.c.h.b16 %v1515
    %v1870 = vunpack.c.l.b16 %v1516
    %v1871 = vunpack.c.h.b16 %v1516
    %v1872 = vunpack.c.l.b16 %v1517
    %v1873 = vunpack.c.h.b16 %v1517
    %v1874 = vunpack.c.l.b16 %v1518
    %v1875 = vunpack.c.h.b16 %v1518
    %v1876 = vunpack.c.l.b16 %v1519
    %v1877 = vunpack.c.h.b16 %v1519
    %v1878 = vunpack.c.l.b16 %v1520
    %v1879 = vunpack.c.h.b16 %v1520
    %v1880 = vunpack.c.l.b16 %v1521
    %v1881 = vunpack.c.h.b16 %v1521
    %v1882 = vunpack.c.l.b16 %v1522
    %v1883 = vunpack.c.h.b16 %v1522
    %v1884 = vunpack.c.l.b16 %v1523
    %v1885 = vunpack.c.h.b16 %v1523
    %v1886 = vunpack.c.l.b16 %v1524
    %v1887 = vunpack.c.h.b16 %v1524
    %v1888 = vunpack.c.l.b16 %v1525
    %v1889 = vunpack.c.h.b16 %v1525
    %v1890 = vunpack.c.l.b16 %v1526
    %v1891 = vunpack.c.h.b16 %v1526
    %v1892 = vunpack.c.l.b16 %v1527
    %v1893 = vunpack.c.h.b16 %v1527
    %v1894 = vunpack.c.l.b16 %v1528
    %v1895 = vunpack.c.h.b16 %v1528
    %v1896 = vunpack.c.l.b16 %v1529
    %v1897 = vunpack.c.h.b16 %v1529
    %v1898 = vunpack.c.l.b16 %v1530
    %v1899 = vunpack.c.h.b16 %v1530
    %v1900 = vunpack.c.l.b16 %v1531
    %v1901 = vunpack.c.h.b16 %v1531
    %v1902 = vunpack.c.l.b16 %v1532
    %v1903 = vunpack.c.h.b16 %v1532
    %v1904 = vunpack.c.l.b16 %v1533
    %v1905 = vunpack.c.h.b16 %v1533
    %v1906 = vunpack.c.l.b16 %v1534
    %v1907 = vunpack.c.h.b16 %v1534
    %v1908 = vunpack.c.l.b16 %v1535
    %v1909 = vunpack.c.h.b16 %v1535
    %v1910 = vunpack.c.l.b16 %v1536
    %v1911 = vunpack.c.h.b16 %v1536
    %v1912 = vunpack.c.l.b16 %v1537
    %v1913 = vunpack.c.h.b16 %v1537
    %v1914 = vunpack.c.l.b16 %v1538
    %v1915 = vunpack.c.h.b16 %v1538
    %v1916 = vunpack.c.l.b16 %v1539
    %v1917 = vunpack.c.h.b16 %v1539
    %v1918 = vunpack.c.l.b16 %v1540
    %v1919 = vunpack.c.h.b16 %v1540
    %v1920 = vunpack.c.l.b16 %v1541
    %v1921 = vunpack.c.h.b16 %v1541
    %v1922 = vunpack.c.l.b16 %v1542
    %v1923 = vunpack.c.h.b16 %v1542
    %v1924 = vunpack.c.l.b16 %v1543
    %v1925 = vunpack.c.h.b16 %v1543
    %v1926 = vunpack.c.l.b16 %v1544
    %v1927 = vunpack.c.h.b16 %v1544
    %v1928 = vunpack.c.l.b16 %v1545
    %v1929 = vunpack.c.h.b16 %v1545
    %v1930 = vunpack.c.l.b16 %v1546
    %v1931 = vunpack.c.h.b16 %v1546
    %v1932 = vunpack.c.l.b16 %v1547
    %v1933 = vunpack.c.h.b16 %v1547
    %v1934 = vunpack.c.l.b16 %v1548
    %v1935 = vunpack.c.h.b16 %v1548
    %v1936 = vunpack.c.l.b16 %v1549
    %v1937 = vunpack.c.h.b16 %v1549
    %v1938 = vunpack.c.l.b16 %v1550
    %v1939 = vunpack.c.h.b16 %v1550
    %v1940 = vunpack.c.l.b16 %v1551
    %v1941 = vunpack.c.h.b16 %v1551
    %v1942 = vunpack.c.l.b16 %v1552
    %v1943 = vunpack.c.h.b16 %v1552
    %v1944 = vunpack.c.l.b16 %v1553
    %v1945 = vunpack.c.h.b16 %v1553
    %v1946 = vunpack.c.l.b16 %v1554
    %v1947 = vunpack.c.h.b16 %v1554
    %v1948 = vunpack.c.l.b16 %v1555
    %v1949 = vunpack.c.h.b16 %v1555
    %v1950 = vunpack.c.l.b16 %v1556
    %v1951 = vunpack.c.h.b16 %v1556
    %v1952 = vunpack.c.l.b16 %v1557
    %v1953 = vunpack.c.h.b16 %v1557
    %v1954 = vunpack.c.l.b16 %v1558
    %v1955 = vunpack.c.h.b16 %v1558
    %v1956 = vunpack.c.l.b16 %v1559
    %v1957 = vunpack.c.h.b16 %v1559
    %v1958 = vunpack.c.l.b16 %v1560
    %v1959 = vunpack.c.h.b16 %v1560
    %v1960 = vunpack.c.l.b16 %v1561
    %v1961 = vunpack.c.h.b16 %v1561
    %v1962 = vunpack.c.l.b16 %v1562
    %v1963 = vunpack.c.h.b16 %v1562
    %v1964 = vunpack.c.l.b16 %v1563
    %v1965 = vunpack.c.h.b16 %v1563
    %v1966 = vunpack.c.l.b16 %v1564
    %v1967 = vunpack.c.h.b16 %v1564
    %v1968 = vunpack.c.l.b16 %v1565
    %v1969 = vunpack.c.h.b16 %v1565
    %v1970 = vunpack.c.l.b16 %v1566
    %v1971 = vunpack.c.h.b16 %v1566
    %v1972 = vunpack.c.l.b16 %v1567
    %v1973 = vunpack.c.h.b16 %v1567
    %v1974 = vunpack.c.l.b16 %v1568
    %v1975 = vunpack.c.h.b16 %v1568
    %v1976 = vunpack.c.l.b16 %v1569
    %v1977 = vunpack.c.h.b16 %v1569
    %v1978 = vunpack.c.l.b16 %v1570
    %v1979 = vunpack.c.h.b16 %v1570
    %v1980 = vunpack.c.l.b16 %v1571
    %v1981 = vunpack.c.h.b16 %v1571
    %v1982 = vunpack.c.l.b16 %v1572
    %v1983 = vunpack.c.h.b16 %v1572
    %v1984 = vunpack.c.l.b16 %v1573
    %v1985 = vunpack.c.h.b16 %v1573
    %v1986 = vunpack.c.l.b16 %v1574
    %v1987 = vunpack.c.h.b16 %v1574
    %v1988 = vunpack.c.l.b16 %v1575
    %v1989 = vunpack.c.h.b16 %v1575
    %v1990 = vpack.c.b16 %v1822, %v1798
    %v1991 = vpack.c.b16 %v1823, %v1799
    %v1992 = vpack.c.b16 %v1824, %v1800
    %v1993 = vpack.c.b16 %v1825, %v1801
    %v1994 = vpack.c.b16 %v1826, %v1802
    %v1995 = vpack.c.b16 %v1827, %v1803
    %v1996 = vpack.c.b16 %v1828, %v1804
    %v1997 = vpack.c.b16 %v1829, %v1805
    %v1998 = vpack.c.b16 %v1830, %v1806
    %v1999 = vpack.c.b16 %v1831, %v1807
    %v2000 = vpack.c.b16 %v1832, %v1808
    %v2001 = vpack.c.b16 %v1833, %v1809
    %v2002 = vpack.c.b16 %v1834, %v1810
    %v2003 = vpack.c.b16 %v1835, %v1811
    %v2004 = vpack.c.b16 %v1836, %v1812
    %v2005 = vpack.c.b16 %v1837, %v1813
    %v2006 = vpack.c.b16 %v1838, %v1814
    %v2007 = vpack.c.b16 %v1839, %v1815
    %v2008 = vpack.c.b16 %v1840, %v1816
    %v2009 = vpack.c.b16 %v1841, %v1817
    %v2010 = vpack.c.b16 %v1842, %v1818
    %v2011 = vpack.c.b16 %v1843, %v1819
    %v2012 = vpack.c.b16 %v1844, %v1820
    %v2013 = vpack.c.b16 %v1845, %v1821
    %v2014 = vpack.c.b16 %v1870, %v1846
    %v2015 = vpack.c.b16 %v1871, %v1847
    %v2016 = vpack.c.b16 %v1872, %v1848
    %v2017 = vpack.c.b16 %v1873, %v1849
    %v2018 = vpack.c.b16 %v1874, %v1850
    %v2019 = vpack.c.b16 %v1875, %v1851
    %v2020 = vpack.c.b16 %v1876, %v1852
    %v2021 = vpack.c.b16 %v1877, %v1853
    %v2022 = vpack.c.b16 %v1878, %v1854
    %v2023 = vpack.c.b16 %v1879, %v1855
    %v2024 = vpack.c.b16 %v1880, %v1856
    %v2025 = vpack.c.b16 %v1881, %v1857
    %v2026 = vpack.c.b16 %v1882, %v1858
    %v2027 = vpack.c.b16 %v1883, %v1859
    %v2028 = vpack.c.b16 %v1884, %v1860
    %v2029 = vpack.c.b16 %v1885, %v1861
    %v2030 = vpack.c.b16 %v1886, %v1862
    %v2031 = vpack.c.b16 %v1887, %v1863
    %v2032 = vpack.c.b16 %v1888, %v1864
    %v2033 = vpack.c.b16 %v1889, %v1865
    %v2034 = vpack.c.b16 %v1890, %v1866
    %v2035 = vpack.c.b16 %v1891, %v1867
    %v2036 = vpack.c.b16 %v1892, %v1868
    %v2037 = vpack.c.b16 %v1893, %v1869
    %v2038 = vpack.c.b16 %v1918, %v1894
    %v2039 = vpack.c.b16 %v1919, %v1895
    %v2040 = vpack.c.b16 %v1920, %v1896
    %v2041 = vpack.c.b16 %v1921, %v1897
    %v2042 = vpack.c.b16 %v1922, %v1898
    %v2043 = vpack.c.b16 %v1923, %v1899
    %v2044 = vpack.c.b16 %v1924, %v1900
    %v2045 = vpack.c.b16 %v1925, %v1901
    %v2046 = vpack.c.b16 %v1926, %v1902
    %v2047 = vpack.c.b16 %v1927, %v1903
    %v2048 = vpack.c.b16 %v1928, %v1904
    %v2049 = vpack.c.b16 %v1929, %v1905
    %v2050 = vpack.c.b16 %v1930, %v1906
    %v2051 = vpack.c.b16 %v1931, %v1907
    %v2052 = vpack.c.b16 %v1932, %v1908
    %v2053 = vpack.c.b16 %v1933, %v1909
    %v2054 = vpack.c.b16 %v1934, %v1910
    %v2055 = vpack.c.b16 %v1935, %v1911
    %v2056 = vpack.c.b16 %v1936, %v1912
    %v2057 = vpack.c.b16 %v1937, %v1913
    %v2058 = vpack.c.b16 %v1938, %v1914
    %v2059 = vpack.c.b16 %v1939, %v1915
    %v2060 = vpack.c.b16 %v1940, %v1916
    %v2061 = vpack.c.b16 %v1941, %v1917
    %v2062 = vpack.c.b16 %v1966, %v1942
    %v2063 = vpack.c.b16 %v1967, %v1943
    %v2064 = vpack.c.b16 %v1968, %v1944
    %v2065 = vpack.c.b16 %v1969, %v1945
    %v2066 = vpack.c.b16 %v1970, %v1946
    %v2067 = vpack.c.b16 %v1971, %v1947
    %v2068 = vpack.c.b16 %v1972, %v1948
    %v2069 = vpack.c.b16 %v1973, %v1949
    %v2070 = vpack.c.b16 %v1974, %v1950
    %v2071 = vpack.c.b16 %v1975, %v1951
    %v2072 = vpack.c.b16 %v1976, %v1952
    %v2073 = vpack.c.b16 %v1977, %v1953
    %v2074 = vpack.c.b16 %v1978, %v1954
    %v2075 = vpack.c.b16 %v1979, %v1955
    %v2076 = vpack.c.b16 %v1980, %v1956
    %v2077 = vpack.c.b16 %v1981, %v1957
    %v2078 = vpack.c.b16 %v1982, %v1958
    %v2079 = vpack.c.b16 %v1983, %v1959
    %v2080 = vpack.c.b16 %v1984, %v1960
    %v2081 = vpack.c.b16 %v1985, %v1961
    %v2082 = vpack.c.b16 %v1986, %v1962
    %v2083 = vpack.c.b16 %v1987, %v1963
    %v2084 = vpack.c.b16 %v1988, %v1964
    %v2085 = vpack.c.b16 %v1989, %v1965
    %v2183 = vsel %vm62, %v1479, 0
    %2185 = vmatprep.subr.bf16.mxu0 %v1991
    %2186 = vmatpush1.bf16.msra.mxu0 %v1990
    %2187 = vmatprep.subr.bf16.mxu0 %v2015
    %2188 = vmatpush1.bf16.msra.mxu0 %v2014
    %2189 = vmatprep.subr.bf16.mxu0 %v2039
    %2190 = vmatpush1.bf16.msra.mxu0 %v2038
    %2191 = vmatprep.subr.bf16.mxu0 %v2063
    %2192 = vmatpush1.bf16.msra.mxu0 %v2062
    %2193 = vmatprep.subr.bf16.mxu0 0
    %2194 = vmatpush1.bf16.msra.mxu0 0
    %2195 = vmatprep.subr.bf16.mxu0 0
    %2196 = vmatpush1.bf16.msra.mxu0 0
    %2197 = vmatprep.subr.bf16.mxu0 0
    %2198 = vmatpush1.bf16.msra.mxu0 0
    %2199 = vmatprep.subr.bf16.mxu0 0
    %2200 = vmatpush1.bf16.msra.mxu0 0
    %2201 = vmatprep.subr.bf16.mxu0 0
    %2202 = vmatpush1.bf16.msra.mxu0 0
    %2203 = vmatprep.subr.bf16.mxu0 0
    %2204 = vmatpush1.bf16.msra.mxu0 0
    %2205 = vmatprep.subr.bf16.mxu0 0
    %2206 = vmatpush1.bf16.msra.mxu0 0
    %2207 = vmatprep.subr.bf16.mxu0 0
    %2208 = vmatpush1.bf16.msra.mxu0 0
    %2209 = vmatprep.subr.bf16.mxu0 0
    %2210 = vmatpush1.bf16.msra.mxu0 0
    %2211 = vmatprep.subr.bf16.mxu0 0
    %2212 = vmatpush1.bf16.msra.mxu0 0
    %2213 = vmatprep.subr.bf16.mxu0 0
    %2214 = vmatpush1.bf16.msra.mxu0 0
    %2215 = vmatprep.subr.bf16.mxu0 0
    %2216 = vmatpush1.bf16.msra.mxu0 0
    %2217 = vmatprep.mubr.bf16.mxu0 0
    %2218 = vmatmul.mubr.bf16.gmra.mrb[0].mxu0 %v2183
    %v2219 = vpop.f32.mrb[0].mxu0
    %v2220 = vadd.f32 %v1585, %v2219
    %v2221 = vpop.f32.mrb[0].mxu0
    %v2222 = vadd.f32 %v1589, %v2221
    %v2223 = vpop.f32.mrb[0].mxu0
    %v2224 = vadd.f32 %v1585, %v2223
    %v2225 = vpop.f32.mrb[0].mxu0
    %v2226 = vadd.f32 %v1589, %v2225
    %2227 = vdwg.mxu0
    %2228 = vmatprep.subr.bf16.mxu0 %v1993
    %2229 = vmatpush1.bf16.msra.mxu0 %v1992
    %2230 = vmatprep.subr.bf16.mxu0 %v2017
    %2231 = vmatpush1.bf16.msra.mxu0 %v2016
    %2232 = vmatprep.subr.bf16.mxu0 %v2041
    %2233 = vmatpush1.bf16.msra.mxu0 %v2040
    %2234 = vmatprep.subr.bf16.mxu0 %v2065
    %2235 = vmatpush1.bf16.msra.mxu0 %v2064
    %2236 = vmatprep.subr.bf16.mxu0 0
    %2237 = vmatpush1.bf16.msra.mxu0 0
    %2238 = vmatprep.subr.bf16.mxu0 0
    %2239 = vmatpush1.bf16.msra.mxu0 0
    %2240 = vmatprep.subr.bf16.mxu0 0
    %2241 = vmatpush1.bf16.msra.mxu0 0
    %2242 = vmatprep.subr.bf16.mxu0 0
    %2243 = vmatpush1.bf16.msra.mxu0 0
    %2244 = vmatprep.subr.bf16.mxu0 0
    %2245 = vmatpush1.bf16.msra.mxu0 0
    %2246 = vmatprep.subr.bf16.mxu0 0
    %2247 = vmatpush1.bf16.msra.mxu0 0
    %2248 = vmatprep.subr.bf16.mxu0 0
    %2249 = vmatpush1.bf16.msra.mxu0 0
    %2250 = vmatprep.subr.bf16.mxu0 0
    %2251 = vmatpush1.bf16.msra.mxu0 0
    %2252 = vmatprep.subr.bf16.mxu0 0
    %2253 = vmatpush1.bf16.msra.mxu0 0
    %2254 = vmatprep.subr.bf16.mxu0 0
    %2255 = vmatpush1.bf16.msra.mxu0 0
    %2256 = vmatprep.subr.bf16.mxu0 0
    %2257 = vmatpush1.bf16.msra.mxu0 0
    %2258 = vmatprep.subr.bf16.mxu0 0
    %2259 = vmatpush1.bf16.msra.mxu0 0
    %2260 = vmatprep.mubr.bf16.mxu0 0
    %2261 = vmatmul.mubr.bf16.gmra.mrb[0].mxu0 %v2183
    %v2262 = vpop.f32.mrb[0].mxu0
    %v2263 = vadd.f32 %v1593, %v2262
    %v2264 = vpop.f32.mrb[0].mxu0
    %v2265 = vadd.f32 %v1597, %v2264
    %v2266 = vpop.f32.mrb[0].mxu0
    %v2267 = vadd.f32 %v1593, %v2266
    %v2268 = vpop.f32.mrb[0].mxu0
    %v2269 = vadd.f32 %v1597, %v2268
    %2270 = vdwg.mxu0
    %2271 = vmatprep.subr.bf16.mxu0 %v1995
    %2272 = vmatpush1.bf16.msra.mxu0 %v1994
    %2273 = vmatprep.subr.bf16.mxu0 %v2019
    %2274 = vmatpush1.bf16.msra.mxu0 %v2018
    %2275 = vmatprep.subr.bf16.mxu0 %v2043
    %2276 = vmatpush1.bf16.msra.mxu0 %v2042
    %2277 = vmatprep.subr.bf16.mxu0 %v2067
    %2278 = vmatpush1.bf16.msra.mxu0 %v2066
    %2279 = vmatprep.subr.bf16.mxu0 0
    %2280 = vmatpush1.bf16.msra.mxu0 0
    %2281 = vmatprep.subr.bf16.mxu0 0
    %2282 = vmatpush1.bf16.msra.mxu0 0
    %2283 = vmatprep.subr.bf16.mxu0 0
    %2284 = vmatpush1.bf16.msra.mxu0 0
    %2285 = vmatprep.subr.bf16.mxu0 0
    %2286 = vmatpush1.bf16.msra.mxu0 0
    %2287 = vmatprep.subr.bf16.mxu0 0
    %2288 = vmatpush1.bf16.msra.mxu0 0
    %2289 = vmatprep.subr.bf16.mxu0 0
    %2290 = vmatpush1.bf16.msra.mxu0 0
    %2291 = vmatprep.subr.bf16.mxu0 0
    %2292 = vmatpush1.bf16.msra.mxu0 0
    %2293 = vmatprep.subr.bf16.mxu0 0
    %2294 = vmatpush1.bf16.msra.mxu0 0
    %2295 = vmatprep.subr.bf16.mxu0 0
    %2296 = vmatpush1.bf16.msra.mxu0 0
    %2297 = vmatprep.subr.bf16.mxu0 0
    %2298 = vmatpush1.bf16.msra.mxu0 0
    %2299 = vmatprep.subr.bf16.mxu0 0
    %2300 = vmatpush1.bf16.msra.mxu0 0
    %2301 = vmatprep.subr.bf16.mxu0 0
    %2302 = vmatpush1.bf16.msra.mxu0 0
    %2303 = vmatprep.mubr.bf16.mxu0 0
    %2304 = vmatmul.mubr.bf16.gmra.mrb[0].mxu0 %v2183
    %v2305 = vpop.f32.mrb[0].mxu0
    %v2306 = vadd.f32 %v1601, %v2305
    %v2307 = vpop.f32.mrb[0].mxu0
    %v2308 = vadd.f32 %v1605, %v2307
    %v2309 = vpop.f32.mrb[0].mxu0
    %v2310 = vadd.f32 %v1601, %v2309
    %v2311 = vpop.f32.mrb[0].mxu0
    %v2312 = vadd.f32 %v1605, %v2311
    %2313 = vdwg.mxu0
    %2314 = vmatprep.subr.bf16.mxu0 %v1997
    %2315 = vmatpush1.bf16.msra.mxu0 %v1996
    %2316 = vmatprep.subr.bf16.mxu0 %v2021
    %2317 = vmatpush1.bf16.msra.mxu0 %v2020
    %2318 = vmatprep.subr.bf16.mxu0 %v2045
    %2319 = vmatpush1.bf16.msra.mxu0 %v2044
    %2320 = vmatprep.subr.bf16.mxu0 %v2069
    %2321 = vmatpush1.bf16.msra.mxu0 %v2068
    %2322 = vmatprep.subr.bf16.mxu0 0
    %2323 = vmatpush1.bf16.msra.mxu0 0
    %2324 = vmatprep.subr.bf16.mxu0 0
    %2325 = vmatpush1.bf16.msra.mxu0 0
    %2326 = vmatprep.subr.bf16.mxu0 0
    %2327 = vmatpush1.bf16.msra.mxu0 0
    %2328 = vmatprep.subr.bf16.mxu0 0
    %2329 = vmatpush1.bf16.msra.mxu0 0
    %2330 = vmatprep.subr.bf16.mxu0 0
    %2331 = vmatpush1.bf16.msra.mxu0 0
    %2332 = vmatprep.subr.bf16.mxu0 0
    %2333 = vmatpush1.bf16.msra.mxu0 0
    %2334 = vmatprep.subr.bf16.mxu0 0
    %2335 = vmatpush1.bf16.msra.mxu0 0
    %2336 = vmatprep.subr.bf16.mxu0 0
    %2337 = vmatpush1.bf16.msra.mxu0 0
    %2338 = vmatprep.subr.bf16.mxu0 0
    %2339 = vmatpush1.bf16.msra.mxu0 0
    %2340 = vmatprep.subr.bf16.mxu0 0
    %2341 = vmatpush1.bf16.msra.mxu0 0
    %2342 = vmatprep.subr.bf16.mxu0 0
    %2343 = vmatpush1.bf16.msra.mxu0 0
    %2344 = vmatprep.subr.bf16.mxu0 0
    %2345 = vmatpush1.bf16.msra.mxu0 0
    %2346 = vmatprep.mubr.bf16.mxu0 0
    %2347 = vmatmul.mubr.bf16.gmra.mrb[0].mxu0 %v2183
    %v2348 = vpop.f32.mrb[0].mxu0
    %v2349 = vadd.f32 %v1609, %v2348
    %v2350 = vpop.f32.mrb[0].mxu0
    %v2351 = vadd.f32 %v1613, %v2350
    %v2352 = vpop.f32.mrb[0].mxu0
    %v2353 = vadd.f32 %v1609, %v2352
    %v2354 = vpop.f32.mrb[0].mxu0
    %v2355 = vadd.f32 %v1613, %v2354
    %2356 = vdwg.mxu0
    %2357 = vmatprep.subr.bf16.mxu0 %v1999
    %2358 = vmatpush1.bf16.msra.mxu0 %v1998
    %2359 = vmatprep.subr.bf16.mxu0 %v2023
    %2360 = vmatpush1.bf16.msra.mxu0 %v2022
    %2361 = vmatprep.subr.bf16.mxu0 %v2047
    %2362 = vmatpush1.bf16.msra.mxu0 %v2046
    %2363 = vmatprep.subr.bf16.mxu0 %v2071
    %2364 = vmatpush1.bf16.msra.mxu0 %v2070
    %2365 = vmatprep.subr.bf16.mxu0 0
    %2366 = vmatpush1.bf16.msra.mxu0 0
    %2367 = vmatprep.subr.bf16.mxu0 0
    %2368 = vmatpush1.bf16.msra.mxu0 0
    %2369 = vmatprep.subr.bf16.mxu0 0
    %2370 = vmatpush1.bf16.msra.mxu0 0
    %2371 = vmatprep.subr.bf16.mxu0 0
    %2372 = vmatpush1.bf16.msra.mxu0 0
    %2373 = vmatprep.subr.bf16.mxu0 0
    %2374 = vmatpush1.bf16.msra.mxu0 0
    %2375 = vmatprep.subr.bf16.mxu0 0
    %2376 = vmatpush1.bf16.msra.mxu0 0
    %2377 = vmatprep.subr.bf16.mxu0 0
    %2378 = vmatpush1.bf16.msra.mxu0 0
    %2379 = vmatprep.subr.bf16.mxu0 0
    %2380 = vmatpush1.bf16.msra.mxu0 0
    %2381 = vmatprep.subr.bf16.mxu0 0
    %2382 = vmatpush1.bf16.msra.mxu0 0
    %2383 = vmatprep.subr.bf16.mxu0 0
    %2384 = vmatpush1.bf16.msra.mxu0 0
    %2385 = vmatprep.subr.bf16.mxu0 0
    %2386 = vmatpush1.bf16.msra.mxu0 0
    %2387 = vmatprep.subr.bf16.mxu0 0
    %2388 = vmatpush1.bf16.msra.mxu0 0
    %2389 = vmatprep.mubr.bf16.mxu0 0
    %2390 = vmatmul.mubr.bf16.gmra.mrb[0].mxu0 %v2183
    %v2391 = vpop.f32.mrb[0].mxu0
    %v2392 = vadd.f32 %v1617, %v2391
    %v2393 = vpop.f32.mrb[0].mxu0
    %v2394 = vadd.f32 %v1621, %v2393
    %v2395 = vpop.f32.mrb[0].mxu0
    %v2396 = vadd.f32 %v1617, %v2395
    %v2397 = vpop.f32.mrb[0].mxu0
    %v2398 = vadd.f32 %v1621, %v2397
    %2399 = vdwg.mxu0
    %2400 = vmatprep.subr.bf16.mxu0 %v2001
    %2401 = vmatpush1.bf16.msra.mxu0 %v2000
    %2402 = vmatprep.subr.bf16.mxu0 %v2025
    %2403 = vmatpush1.bf16.msra.mxu0 %v2024
    %2404 = vmatprep.subr.bf16.mxu0 %v2049
    %2405 = vmatpush1.bf16.msra.mxu0 %v2048
    %2406 = vmatprep.subr.bf16.mxu0 %v2073
    %2407 = vmatpush1.bf16.msra.mxu0 %v2072
    %2408 = vmatprep.subr.bf16.mxu0 0
    %2409 = vmatpush1.bf16.msra.mxu0 0
    %2410 = vmatprep.subr.bf16.mxu0 0
    %2411 = vmatpush1.bf16.msra.mxu0 0
    %2412 = vmatprep.subr.bf16.mxu0 0
    %2413 = vmatpush1.bf16.msra.mxu0 0
    %2414 = vmatprep.subr.bf16.mxu0 0
    %2415 = vmatpush1.bf16.msra.mxu0 0
    %2416 = vmatprep.subr.bf16.mxu0 0
    %2417 = vmatpush1.bf16.msra.mxu0 0
    %2418 = vmatprep.subr.bf16.mxu0 0
    %2419 = vmatpush1.bf16.msra.mxu0 0
    %2420 = vmatprep.subr.bf16.mxu0 0
    %2421 = vmatpush1.bf16.msra.mxu0 0
    %2422 = vmatprep.subr.bf16.mxu0 0
    %2423 = vmatpush1.bf16.msra.mxu0 0
    %2424 = vmatprep.subr.bf16.mxu0 0
    %2425 = vmatpush1.bf16.msra.mxu0 0
    %2426 = vmatprep.subr.bf16.mxu0 0
    %2427 = vmatpush1.bf16.msra.mxu0 0
    %2428 = vmatprep.subr.bf16.mxu0 0
    %2429 = vmatpush1.bf16.msra.mxu0 0
    %2430 = vmatprep.subr.bf16.mxu0 0
    %2431 = vmatpush1.bf16.msra.mxu0 0
    %2432 = vmatprep.mubr.bf16.mxu0 0
    %2433 = vmatmul.mubr.bf16.gmra.mrb[0].mxu0 %v2183
    %v2434 = vpop.f32.mrb[0].mxu0
    %v2435 = vadd.f32 %v1625, %v2434
    %v2436 = vpop.f32.mrb[0].mxu0
    %v2437 = vadd.f32 %v1629, %v2436
    %v2438 = vpop.f32.mrb[0].mxu0
    %v2439 = vadd.f32 %v1625, %v2438
    %v2440 = vpop.f32.mrb[0].mxu0
    %v2441 = vadd.f32 %v1629, %v2440
    %2442 = vdwg.mxu0
    %2443 = vmatprep.subr.bf16.mxu0 %v2003
    %2444 = vmatpush1.bf16.msra.mxu0 %v2002
    %2445 = vmatprep.subr.bf16.mxu0 %v2027
    %2446 = vmatpush1.bf16.msra.mxu0 %v2026
    %2447 = vmatprep.subr.bf16.mxu0 %v2051
    %2448 = vmatpush1.bf16.msra.mxu0 %v2050
    %2449 = vmatprep.subr.bf16.mxu0 %v2075
    %2450 = vmatpush1.bf16.msra.mxu0 %v2074
    %2451 = vmatprep.subr.bf16.mxu0 0
    %2452 = vmatpush1.bf16.msra.mxu0 0
    %2453 = vmatprep.subr.bf16.mxu0 0
    %2454 = vmatpush1.bf16.msra.mxu0 0
    %2455 = vmatprep.subr.bf16.mxu0 0
    %2456 = vmatpush1.bf16.msra.mxu0 0
    %2457 = vmatprep.subr.bf16.mxu0 0
    %2458 = vmatpush1.bf16.msra.mxu0 0
    %2459 = vmatprep.subr.bf16.mxu0 0
    %2460 = vmatpush1.bf16.msra.mxu0 0
    %2461 = vmatprep.subr.bf16.mxu0 0
    %2462 = vmatpush1.bf16.msra.mxu0 0
    %2463 = vmatprep.subr.bf16.mxu0 0
    %2464 = vmatpush1.bf16.msra.mxu0 0
    %2465 = vmatprep.subr.bf16.mxu0 0
    %2466 = vmatpush1.bf16.msra.mxu0 0
    %2467 = vmatprep.subr.bf16.mxu0 0
    %2468 = vmatpush1.bf16.msra.mxu0 0
    %2469 = vmatprep.subr.bf16.mxu0 0
    %2470 = vmatpush1.bf16.msra.mxu0 0
    %2471 = vmatprep.subr.bf16.mxu0 0
    %2472 = vmatpush1.bf16.msra.mxu0 0
    %2473 = vmatprep.subr.bf16.mxu0 0
    %2474 = vmatpush1.bf16.msra.mxu0 0
    %2475 = vmatprep.mubr.bf16.mxu0 0
    %2476 = vmatmul.mubr.bf16.gmra.mrb[0].mxu0 %v2183
    %v2477 = vpop.f32.mrb[0].mxu0
    %v2478 = vadd.f32 %v1633, %v2477
    %v2479 = vpop.f32.mrb[0].mxu0
    %v2480 = vadd.f32 %v1637, %v2479
    %v2481 = vpop.f32.mrb[0].mxu0
    %v2482 = vadd.f32 %v1633, %v2481
    %v2483 = vpop.f32.mrb[0].mxu0
    %v2484 = vadd.f32 %v1637, %v2483
    %2485 = vdwg.mxu0
    %2486 = vmatprep.subr.bf16.mxu0 %v2005
    %2487 = vmatpush1.bf16.msra.mxu0 %v2004
    %2488 = vmatprep.subr.bf16.mxu0 %v2029
    %2489 = vmatpush1.bf16.msra.mxu0 %v2028
    %2490 = vmatprep.subr.bf16.mxu0 %v2053
    %2491 = vmatpush1.bf16.msra.mxu0 %v2052
    %2492 = vmatprep.subr.bf16.mxu0 %v2077
    %2493 = vmatpush1.bf16.msra.mxu0 %v2076
    %2494 = vmatprep.subr.bf16.mxu0 0
    %2495 = vmatpush1.bf16.msra.mxu0 0
    %2496 = vmatprep.subr.bf16.mxu0 0
    %2497 = vmatpush1.bf16.msra.mxu0 0
    %2498 = vmatprep.subr.bf16.mxu0 0
    %2499 = vmatpush1.bf16.msra.mxu0 0
    %2500 = vmatprep.subr.bf16.mxu0 0
    %2501 = vmatpush1.bf16.msra.mxu0 0
    %2502 = vmatprep.subr.bf16.mxu0 0
    %2503 = vmatpush1.bf16.msra.mxu0 0
    %2504 = vmatprep.subr.bf16.mxu0 0
    %2505 = vmatpush1.bf16.msra.mxu0 0
    %2506 = vmatprep.subr.bf16.mxu0 0
    %2507 = vmatpush1.bf16.msra.mxu0 0
    %2508 = vmatprep.subr.bf16.mxu0 0
    %2509 = vmatpush1.bf16.msra.mxu0 0
    %2510 = vmatprep.subr.bf16.mxu0 0
    %2511 = vmatpush1.bf16.msra.mxu0 0
    %2512 = vmatprep.subr.bf16.mxu0 0
    %2513 = vmatpush1.bf16.msra.mxu0 0
    %2514 = vmatprep.subr.bf16.mxu0 0
    %2515 = vmatpush1.bf16.msra.mxu0 0
    %2516 = vmatprep.subr.bf16.mxu0 0
    %2517 = vmatpush1.bf16.msra.mxu0 0
    %2518 = vmatprep.mubr.bf16.mxu0 0
    %2519 = vmatmul.mubr.bf16.gmra.mrb[0].mxu0 %v2183
    %v2520 = vpop.f32.mrb[0].mxu0
    %v2521 = vadd.f32 %v1641, %v2520
    %v2522 = vpop.f32.mrb[0].mxu0
    %v2523 = vadd.f32 %v1645, %v2522
    %v2524 = vpop.f32.mrb[0].mxu0
    %v2525 = vadd.f32 %v1641, %v2524
    %v2526 = vpop.f32.mrb[0].mxu0
    %v2527 = vadd.f32 %v1645, %v2526
    %2528 = vdwg.mxu0
    %2529 = vmatprep.subr.bf16.mxu0 %v2007
    %2530 = vmatpush1.bf16.msra.mxu0 %v2006
    %2531 = vmatprep.subr.bf16.mxu0 %v2031
    %2532 = vmatpush1.bf16.msra.mxu0 %v2030
    %2533 = vmatprep.subr.bf16.mxu0 %v2055
    %2534 = vmatpush1.bf16.msra.mxu0 %v2054
    %2535 = vmatprep.subr.bf16.mxu0 %v2079
    %2536 = vmatpush1.bf16.msra.mxu0 %v2078
    %2537 = vmatprep.subr.bf16.mxu0 0
    %2538 = vmatpush1.bf16.msra.mxu0 0
    %2539 = vmatprep.subr.bf16.mxu0 0
    %2540 = vmatpush1.bf16.msra.mxu0 0
    %2541 = vmatprep.subr.bf16.mxu0 0
    %2542 = vmatpush1.bf16.msra.mxu0 0
    %2543 = vmatprep.subr.bf16.mxu0 0
    %2544 = vmatpush1.bf16.msra.mxu0 0
    %2545 = vmatprep.subr.bf16.mxu0 0
    %2546 = vmatpush1.bf16.msra.mxu0 0
    %2547 = vmatprep.subr.bf16.mxu0 0
    %2548 = vmatpush1.bf16.msra.mxu0 0
    %2549 = vmatprep.subr.bf16.mxu0 0
    %2550 = vmatpush1.bf16.msra.mxu0 0
    %2551 = vmatprep.subr.bf16.mxu0 0
    %2552 = vmatpush1.bf16.msra.mxu0 0
    %2553 = vmatprep.subr.bf16.mxu0 0
    %2554 = vmatpush1.bf16.msra.mxu0 0
    %2555 = vmatprep.subr.bf16.mxu0 0
    %2556 = vmatpush1.bf16.msra.mxu0 0
    %2557 = vmatprep.subr.bf16.mxu0 0
    %2558 = vmatpush1.bf16.msra.mxu0 0
    %2559 = vmatprep.subr.bf16.mxu0 0
    %2560 = vmatpush1.bf16.msra.mxu0 0
    %2561 = vmatprep.mubr.bf16.mxu0 0
    %2562 = vmatmul.mubr.bf16.gmra.mrb[0].mxu0 %v2183
    %v2563 = vpop.f32.mrb[0].mxu0
    %v2564 = vadd.f32 %v1649, %v2563
    %v2565 = vpop.f32.mrb[0].mxu0
    %v2566 = vadd.f32 %v1653, %v2565
    %v2567 = vpop.f32.mrb[0].mxu0
    %v2568 = vadd.f32 %v1649, %v2567
    %v2569 = vpop.f32.mrb[0].mxu0
    %v2570 = vadd.f32 %v1653, %v2569
    %2571 = vdwg.mxu0
    %2572 = vmatprep.subr.bf16.mxu0 %v2009
    %2573 = vmatpush1.bf16.msra.mxu0 %v2008
    %2574 = vmatprep.subr.bf16.mxu0 %v2033
    %2575 = vmatpush1.bf16.msra.mxu0 %v2032
    %2576 = vmatprep.subr.bf16.mxu0 %v2057
    %2577 = vmatpush1.bf16.msra.mxu0 %v2056
    %2578 = vmatprep.subr.bf16.mxu0 %v2081
    %2579 = vmatpush1.bf16.msra.mxu0 %v2080
    %2580 = vmatprep.subr.bf16.mxu0 0
    %2581 = vmatpush1.bf16.msra.mxu0 0
    %2582 = vmatprep.subr.bf16.mxu0 0
    %2583 = vmatpush1.bf16.msra.mxu0 0
    %2584 = vmatprep.subr.bf16.mxu0 0
    %2585 = vmatpush1.bf16.msra.mxu0 0
    %2586 = vmatprep.subr.bf16.mxu0 0
    %2587 = vmatpush1.bf16.msra.mxu0 0
    %2588 = vmatprep.subr.bf16.mxu0 0
    %2589 = vmatpush1.bf16.msra.mxu0 0
    %2590 = vmatprep.subr.bf16.mxu0 0
    %2591 = vmatpush1.bf16.msra.mxu0 0
    %2592 = vmatprep.subr.bf16.mxu0 0
    %2593 = vmatpush1.bf16.msra.mxu0 0
    %2594 = vmatprep.subr.bf16.mxu0 0
    %2595 = vmatpush1.bf16.msra.mxu0 0
    %2596 = vmatprep.subr.bf16.mxu0 0
    %2597 = vmatpush1.bf16.msra.mxu0 0
    %2598 = vmatprep.subr.bf16.mxu0 0
    %2599 = vmatpush1.bf16.msra.mxu0 0
    %2600 = vmatprep.subr.bf16.mxu0 0
    %2601 = vmatpush1.bf16.msra.mxu0 0
    %2602 = vmatprep.subr.bf16.mxu0 0
    %2603 = vmatpush1.bf16.msra.mxu0 0
    %2604 = vmatprep.mubr.bf16.mxu0 0
    %2605 = vmatmul.mubr.bf16.gmra.mrb[0].mxu0 %v2183
    %v2606 = vpop.f32.mrb[0].mxu0
    %v2607 = vadd.f32 %v1657, %v2606
    %v2608 = vpop.f32.mrb[0].mxu0
    %v2609 = vadd.f32 %v1661, %v2608
    %v2610 = vpop.f32.mrb[0].mxu0
    %v2611 = vadd.f32 %v1657, %v2610
    %v2612 = vpop.f32.mrb[0].mxu0
    %v2613 = vadd.f32 %v1661, %v2612
    %2614 = vdwg.mxu0
    %2615 = vmatprep.subr.bf16.mxu0 %v2011
    %2616 = vmatpush1.bf16.msra.mxu0 %v2010
    %2617 = vmatprep.subr.bf16.mxu0 %v2035
    %2618 = vmatpush1.bf16.msra.mxu0 %v2034
    %2619 = vmatprep.subr.bf16.mxu0 %v2059
    %2620 = vmatpush1.bf16.msra.mxu0 %v2058
    %2621 = vmatprep.subr.bf16.mxu0 %v2083
    %2622 = vmatpush1.bf16.msra.mxu0 %v2082
    %2623 = vmatprep.subr.bf16.mxu0 0
    %2624 = vmatpush1.bf16.msra.mxu0 0
    %2625 = vmatprep.subr.bf16.mxu0 0
    %2626 = vmatpush1.bf16.msra.mxu0 0
    %2627 = vmatprep.subr.bf16.mxu0 0
    %2628 = vmatpush1.bf16.msra.mxu0 0
    %2629 = vmatprep.subr.bf16.mxu0 0
    %2630 = vmatpush1.bf16.msra.mxu0 0
    %2631 = vmatprep.subr.bf16.mxu0 0
    %2632 = vmatpush1.bf16.msra.mxu0 0
    %2633 = vmatprep.subr.bf16.mxu0 0
    %2634 = vmatpush1.bf16.msra.mxu0 0
    %2635 = vmatprep.subr.bf16.mxu0 0
    %2636 = vmatpush1.bf16.msra.mxu0 0
    %2637 = vmatprep.subr.bf16.mxu0 0
    %2638 = vmatpush1.bf16.msra.mxu0 0
    %2639 = vmatprep.subr.bf16.mxu0 0
    %2640 = vmatpush1.bf16.msra.mxu0 0
    %2641 = vmatprep.subr.bf16.mxu0 0
    %2642 = vmatpush1.bf16.msra.mxu0 0
    %2643 = vmatprep.subr.bf16.mxu0 0
    %2644 = vmatpush1.bf16.msra.mxu0 0
    %2645 = vmatprep.subr.bf16.mxu0 0
    %2646 = vmatpush1.bf16.msra.mxu0 0
    %2647 = vmatprep.mubr.bf16.mxu0 0
    %2648 = vmatmul.mubr.bf16.gmra.mrb[0].mxu0 %v2183
    %v2649 = vpop.f32.mrb[0].mxu0
    %v2650 = vadd.f32 %v1665, %v2649
    %v2651 = vpop.f32.mrb[0].mxu0
    %v2652 = vadd.f32 %v1669, %v2651
    %v2653 = vpop.f32.mrb[0].mxu0
    %v2654 = vadd.f32 %v1665, %v2653
    %v2655 = vpop.f32.mrb[0].mxu0
    %v2656 = vadd.f32 %v1669, %v2655
    %2657 = vdwg.mxu0
    %2658 = vmatprep.subr.bf16.mxu0 %v2013
    %2659 = vmatpush1.bf16.msra.mxu0 %v2012
    %2660 = vmatprep.subr.bf16.mxu0 %v2037
    %2661 = vmatpush1.bf16.msra.mxu0 %v2036
    %2662 = vmatprep.subr.bf16.mxu0 %v2061
    %2663 = vmatpush1.bf16.msra.mxu0 %v2060
    %2664 = vmatprep.subr.bf16.mxu0 %v2085
    %2665 = vmatpush1.bf16.msra.mxu0 %v2084
    %2666 = vmatprep.subr.bf16.mxu0 0
    %2667 = vmatpush1.bf16.msra.mxu0 0
    %2668 = vmatprep.subr.bf16.mxu0 0
    %2669 = vmatpush1.bf16.msra.mxu0 0
    %2670 = vmatprep.subr.bf16.mxu0 0
    %2671 = vmatpush1.bf16.msra.mxu0 0
    %2672 = vmatprep.subr.bf16.mxu0 0
    %2673 = vmatpush1.bf16.msra.mxu0 0
    %2674 = vmatprep.subr.bf16.mxu0 0
    %2675 = vmatpush1.bf16.msra.mxu0 0
    %2676 = vmatprep.subr.bf16.mxu0 0
    %2677 = vmatpush1.bf16.msra.mxu0 0
    %2678 = vmatprep.subr.bf16.mxu0 0
    %2679 = vmatpush1.bf16.msra.mxu0 0
    %2680 = vmatprep.subr.bf16.mxu0 0
    %2681 = vmatpush1.bf16.msra.mxu0 0
    %2682 = vmatprep.subr.bf16.mxu0 0
    %2683 = vmatpush1.bf16.msra.mxu0 0
    %2684 = vmatprep.subr.bf16.mxu0 0
    %2685 = vmatpush1.bf16.msra.mxu0 0
    %2686 = vmatprep.subr.bf16.mxu0 0
    %2687 = vmatpush1.bf16.msra.mxu0 0
    %2688 = vmatprep.subr.bf16.mxu0 0
    %2689 = vmatpush1.bf16.msra.mxu0 0
    %2690 = vmatprep.mubr.bf16.mxu0 0
    %2691 = vmatmul.mubr.bf16.gmra.mrb[0].mxu0 %v2183
    %v2692 = vpop.f32.mrb[0].mxu0
    %v2693 = vadd.f32 %v1673, %v2692
    %v2694 = vpop.f32.mrb[0].mxu0
    %v2695 = vadd.f32 %v1677, %v2694
    %v2696 = vpop.f32.mrb[0].mxu0
    %v2697 = vadd.f32 %v1673, %v2696
    %v2698 = vpop.f32.mrb[0].mxu0
    %v2699 = vadd.f32 %v1677, %v2698
    %2700 = vdwg.mxu0
    %v2701 = vmul.f32 %v2220, 0.5
    %v2702 = vmul.f32 %v2222, 0.5
    %v2703 = vmul.f32 %v2263, 0.5
    %v2704 = vmul.f32 %v2265, 0.5
    %v2705 = vmul.f32 %v2306, 0.5
    %v2706 = vmul.f32 %v2308, 0.5
    %v2707 = vmul.f32 %v2349, 0.5
    %v2708 = vmul.f32 %v2351, 0.5
    %v2709 = vmul.f32 %v2392, 0.5
    %v2710 = vmul.f32 %v2394, 0.5
    %v2711 = vmul.f32 %v2435, 0.5
    %v2712 = vmul.f32 %v2437, 0.5
    %v2713 = vmul.f32 %v2478, 0.5
    %v2714 = vmul.f32 %v2480, 0.5
    %v2715 = vmul.f32 %v2521, 0.5
    %v2716 = vmul.f32 %v2523, 0.5
    %v2717 = vmul.f32 %v2564, 0.5
    %v2718 = vmul.f32 %v2566, 0.5
    %v2719 = vmul.f32 %v2607, 0.5
    %v2720 = vmul.f32 %v2609, 0.5
    %v2721 = vmul.f32 %v2650, 0.5
    %v2722 = vmul.f32 %v2652, 0.5
    %v2723 = vmul.f32 %v2693, 0.5
    %v2724 = vmul.f32 %v2695, 0.5
    %v2725 = vmul.f32 %v2224, 0.5
    %v2726 = vmul.f32 %v2226, 0.5
    %v2727 = vmul.f32 %v2267, 0.5
    %v2728 = vmul.f32 %v2269, 0.5
    %v2729 = vmul.f32 %v2310, 0.5
    %v2730 = vmul.f32 %v2312, 0.5
    %v2731 = vmul.f32 %v2353, 0.5
    %v2732 = vmul.f32 %v2355, 0.5
    %v2733 = vmul.f32 %v2396, 0.5
    %v2734 = vmul.f32 %v2398, 0.5
    %v2735 = vmul.f32 %v2439, 0.5
    %v2736 = vmul.f32 %v2441, 0.5
    %v2737 = vmul.f32 %v2482, 0.5
    %v2738 = vmul.f32 %v2484, 0.5
    %v2739 = vmul.f32 %v2525, 0.5
    %v2740 = vmul.f32 %v2527, 0.5
    %v2741 = vmul.f32 %v2568, 0.5
    %v2742 = vmul.f32 %v2570, 0.5
    %v2743 = vmul.f32 %v2611, 0.5
    %v2744 = vmul.f32 %v2613, 0.5
    %v2745 = vmul.f32 %v2654, 0.5
    %v2746 = vmul.f32 %v2656, 0.5
    %v2747 = vmul.f32 %v2697, 0.5
    %v2748 = vmul.f32 %v2699, 0.5
    %v2749 = vmul.f32 %v2220, 0.70710677
    %v2750 = vmul.f32 %v2222, 0.70710677
    %v2751 = vmul.f32 %v2263, 0.70710677
    %v2752 = vmul.f32 %v2265, 0.70710677
    %v2753 = vmul.f32 %v2306, 0.70710677
    %v2754 = vmul.f32 %v2308, 0.70710677
    %v2755 = vmul.f32 %v2349, 0.70710677
    %v2756 = vmul.f32 %v2351, 0.70710677
    %v2757 = vmul.f32 %v2392, 0.70710677
    %v2758 = vmul.f32 %v2394, 0.70710677
    %v2759 = vmul.f32 %v2435, 0.70710677
    %v2760 = vmul.f32 %v2437, 0.70710677
    %v2761 = vmul.f32 %v2478, 0.70710677
    %v2762 = vmul.f32 %v2480, 0.70710677
    %v2763 = vmul.f32 %v2521, 0.70710677
    %v2764 = vmul.f32 %v2523, 0.70710677
    %v2765 = vmul.f32 %v2564, 0.70710677
    %v2766 = vmul.f32 %v2566, 0.70710677
    %v2767 = vmul.f32 %v2607, 0.70710677
    %v2768 = vmul.f32 %v2609, 0.70710677
    %v2769 = vmul.f32 %v2650, 0.70710677
    %v2770 = vmul.f32 %v2652, 0.70710677
    %v2771 = vmul.f32 %v2693, 0.70710677
    %v2772 = vmul.f32 %v2695, 0.70710677
    %v2773 = vmul.f32 %v2224, 0.70710677
    %v2774 = vmul.f32 %v2226, 0.70710677
    %v2775 = vmul.f32 %v2267, 0.70710677
    %v2776 = vmul.f32 %v2269, 0.70710677
    %v2777 = vmul.f32 %v2310, 0.70710677
    %v2778 = vmul.f32 %v2312, 0.70710677
    %v2779 = vmul.f32 %v2353, 0.70710677
    %v2780 = vmul.f32 %v2355, 0.70710677
    %v2781 = vmul.f32 %v2396, 0.70710677
    %v2782 = vmul.f32 %v2398, 0.70710677
    %v2783 = vmul.f32 %v2439, 0.70710677
    %v2784 = vmul.f32 %v2441, 0.70710677
    %v2785 = vmul.f32 %v2482, 0.70710677
    %v2786 = vmul.f32 %v2484, 0.70710677
    %v2787 = vmul.f32 %v2525, 0.70710677
    %v2788 = vmul.f32 %v2527, 0.70710677
    %v2789 = vmul.f32 %v2568, 0.70710677
    %v2790 = vmul.f32 %v2570, 0.70710677
    %v2791 = vmul.f32 %v2611, 0.70710677
    %v2792 = vmul.f32 %v2613, 0.70710677
    %v2793 = vmul.f32 %v2654, 0.70710677
    %v2794 = vmul.f32 %v2656, 0.70710677
    %v2795 = vmul.f32 %v2697, 0.70710677
    %v2796 = vmul.f32 %v2699, 0.70710677
    %v2797 = verf.f32.pop %v2749
    %v2798 = verf.f32.pop %v2750
    %v2799 = verf.f32.pop %v2751
    %v2800 = verf.f32.pop %v2752
    %v2801 = verf.f32.pop %v2753
    %v2802 = verf.f32.pop %v2754
    %v2803 = verf.f32.pop %v2755
    %v2804 = verf.f32.pop %v2756
    %v2805 = verf.f32.pop %v2757
    %v2806 = verf.f32.pop %v2758
    %v2807 = verf.f32.pop %v2759
    %v2808 = verf.f32.pop %v2760
    %v2809 = verf.f32.pop %v2761
    %v2810 = verf.f32.pop %v2762
    %v2811 = verf.f32.pop %v2763
    %v2812 = verf.f32.pop %v2764
    %v2813 = verf.f32.pop %v2765
    %v2814 = verf.f32.pop %v2766
    %v2815 = verf.f32.pop %v2767
    %v2816 = verf.f32.pop %v2768
    %v2817 = verf.f32.pop %v2769
    %v2818 = verf.f32.pop %v2770
    %v2819 = verf.f32.pop %v2771
    %v2820 = verf.f32.pop %v2772
    %v2821 = verf.f32.pop %v2773
    %v2822 = verf.f32.pop %v2774
    %v2823 = verf.f32.pop %v2775
    %v2824 = verf.f32.pop %v2776
    %v2825 = verf.f32.pop %v2777
    %v2826 = verf.f32.pop %v2778
    %v2827 = verf.f32.pop %v2779
    %v2828 = verf.f32.pop %v2780
    %v2829 = verf.f32.pop %v2781
    %v2830 = verf.f32.pop %v2782
    %v2831 = verf.f32.pop %v2783
    %v2832 = verf.f32.pop %v2784
    %v2833 = verf.f32.pop %v2785
    %v2834 = verf.f32.pop %v2786
    %v2835 = verf.f32.pop %v2787
    %v2836 = verf.f32.pop %v2788
    %v2837 = verf.f32.pop %v2789
    %v2838 = verf.f32.pop %v2790
    %v2839 = verf.f32.pop %v2791
    %v2840 = verf.f32.pop %v2792
    %v2841 = verf.f32.pop %v2793
    %v2842 = verf.f32.pop %v2794
    %v2843 = verf.f32.pop %v2795
    %v2844 = verf.f32.pop %v2796
    %v2845 = vadd.f32 %v2797, 1.0
    %v2846 = vadd.f32 %v2798, 1.0
    %v2847 = vadd.f32 %v2799, 1.0
    %v2848 = vadd.f32 %v2800, 1.0
    %v2849 = vadd.f32 %v2801, 1.0
    %v2850 = vadd.f32 %v2802, 1.0
    %v2851 = vadd.f32 %v2803, 1.0
    %v2852 = vadd.f32 %v2804, 1.0
    %v2853 = vadd.f32 %v2805, 1.0
    %v2854 = vadd.f32 %v2806, 1.0
    %v2855 = vadd.f32 %v2807, 1.0
    %v2856 = vadd.f32 %v2808, 1.0
    %v2857 = vadd.f32 %v2809, 1.0
    %v2858 = vadd.f32 %v2810, 1.0
    %v2859 = vadd.f32 %v2811, 1.0
    %v2860 = vadd.f32 %v2812, 1.0
    %v2861 = vadd.f32 %v2813, 1.0
    %v2862 = vadd.f32 %v2814, 1.0
    %v2863 = vadd.f32 %v2815, 1.0
    %v2864 = vadd.f32 %v2816, 1.0
    %v2865 = vadd.f32 %v2817, 1.0
    %v2866 = vadd.f32 %v2818, 1.0
    %v2867 = vadd.f32 %v2819, 1.0
    %v2868 = vadd.f32 %v2820, 1.0
    %v2869 = vadd.f32 %v2821, 1.0
    %v2870 = vadd.f32 %v2822, 1.0
    %v2871 = vadd.f32 %v2823, 1.0
    %v2872 = vadd.f32 %v2824, 1.0
    %v2873 = vadd.f32 %v2825, 1.0
    %v2874 = vadd.f32 %v2826, 1.0
    %v2875 = vadd.f32 %v2827, 1.0
    %v2876 = vadd.f32 %v2828, 1.0
    %v2877 = vadd.f32 %v2829, 1.0
    %v2878 = vadd.f32 %v2830, 1.0
    %v2879 = vadd.f32 %v2831, 1.0
    %v2880 = vadd.f32 %v2832, 1.0
    %v2881 = vadd.f32 %v2833, 1.0
    %v2882 = vadd.f32 %v2834, 1.0
    %v2883 = vadd.f32 %v2835, 1.0
    %v2884 = vadd.f32 %v2836, 1.0
    %v2885 = vadd.f32 %v2837, 1.0
    %v2886 = vadd.f32 %v2838, 1.0
    %v2887 = vadd.f32 %v2839, 1.0
    %v2888 = vadd.f32 %v2840, 1.0
    %v2889 = vadd.f32 %v2841, 1.0
    %v2890 = vadd.f32 %v2842, 1.0
    %v2891 = vadd.f32 %v2843, 1.0
    %v2892 = vadd.f32 %v2844, 1.0
    %v2893 = vmul.f32 %v2701, %v2845
    %v2894 = vmul.f32 %v2702, %v2846
    %v2895 = vmul.f32 %v2703, %v2847
    %v2896 = vmul.f32 %v2704, %v2848
    %v2897 = vmul.f32 %v2705, %v2849
    %v2898 = vmul.f32 %v2706, %v2850
    %v2899 = vmul.f32 %v2707, %v2851
    %v2900 = vmul.f32 %v2708, %v2852
    %v2901 = vmul.f32 %v2709, %v2853
    %v2902 = vmul.f32 %v2710, %v2854
    %v2903 = vmul.f32 %v2711, %v2855
    %v2904 = vmul.f32 %v2712, %v2856
    %v2905 = vmul.f32 %v2713, %v2857
    %v2906 = vmul.f32 %v2714, %v2858
    %v2907 = vmul.f32 %v2715, %v2859
    %v2908 = vmul.f32 %v2716, %v2860
    %v2909 = vmul.f32 %v2717, %v2861
    %v2910 = vmul.f32 %v2718, %v2862
    %v2911 = vmul.f32 %v2719, %v2863
    %v2912 = vmul.f32 %v2720, %v2864
    %v2913 = vmul.f32 %v2721, %v2865
    %v2914 = vmul.f32 %v2722, %v2866
    %v2915 = vmul.f32 %v2723, %v2867
    %v2916 = vmul.f32 %v2724, %v2868
    %v2917 = vmul.f32 %v2725, %v2869
    %v2918 = vmul.f32 %v2726, %v2870
    %v2919 = vmul.f32 %v2727, %v2871
    %v2920 = vmul.f32 %v2728, %v2872
    %v2921 = vmul.f32 %v2729, %v2873
    %v2922 = vmul.f32 %v2730, %v2874
    %v2923 = vmul.f32 %v2731, %v2875
    %v2924 = vmul.f32 %v2732, %v2876
    %v2925 = vmul.f32 %v2733, %v2877
    %v2926 = vmul.f32 %v2734, %v2878
    %v2927 = vmul.f32 %v2735, %v2879
    %v2928 = vmul.f32 %v2736, %v2880
    %v2929 = vmul.f32 %v2737, %v2881
    %v2930 = vmul.f32 %v2738, %v2882
    %v2931 = vmul.f32 %v2739, %v2883
    %v2932 = vmul.f32 %v2740, %v2884
    %v2933 = vmul.f32 %v2741, %v2885
    %v2934 = vmul.f32 %v2742, %v2886
    %v2935 = vmul.f32 %v2743, %v2887
    %v2936 = vmul.f32 %v2744, %v2888
    %v2937 = vmul.f32 %v2745, %v2889
    %v2938 = vmul.f32 %v2746, %v2890
    %v2939 = vmul.f32 %v2747, %v2891
    %v2940 = vmul.f32 %v2748, %v2892
    %v2941 = vpack.c.bf16 %v2917, %v2893
    %v2942 = vpack.c.bf16 %v2918, %v2894
    %v2943 = vpack.c.bf16 %v2919, %v2895
    %v2944 = vpack.c.bf16 %v2920, %v2896
    %v2945 = vpack.c.bf16 %v2921, %v2897
    %v2946 = vpack.c.bf16 %v2922, %v2898
    %v2947 = vpack.c.bf16 %v2923, %v2899
    %v2948 = vpack.c.bf16 %v2924, %v2900
    %v2949 = vpack.c.bf16 %v2925, %v2901
    %v2950 = vpack.c.bf16 %v2926, %v2902
    %v2951 = vpack.c.bf16 %v2927, %v2903
    %v2952 = vpack.c.bf16 %v2928, %v2904
    %v2953 = vpack.c.bf16 %v2929, %v2905
    %v2954 = vpack.c.bf16 %v2930, %v2906
    %v2955 = vpack.c.bf16 %v2931, %v2907
    %v2956 = vpack.c.bf16 %v2932, %v2908
    %v2957 = vpack.c.bf16 %v2933, %v2909
    %v2958 = vpack.c.bf16 %v2934, %v2910
    %v2959 = vpack.c.bf16 %v2935, %v2911
    %v2960 = vpack.c.bf16 %v2936, %v2912
    %v2961 = vpack.c.bf16 %v2937, %v2913
    %v2962 = vpack.c.bf16 %v2938, %v2914
    %v2963 = vpack.c.bf16 %v2939, %v2915
    %v2964 = vpack.c.bf16 %v2940, %v2916
    %v2965 = vld [vmem:[%s15] sm:$0xf]
    %v2966 = vld [vmem:[%s15 + $0x4] sm:$0xf]
    %v2967 = vld [vmem:[%s15 + $0x8] sm:$0xf]
    %v2968 = vld [vmem:[%s15 + $0xc] sm:$0xf]
    %v2969 = vld [vmem:[%s15 + $0x10] sm:$0xf]
    %v2970 = vld [vmem:[%s15 + $0x14] sm:$0xf]
    %v2971 = vld [vmem:[%s15 + $0x18] sm:$0xf]
    %v2972 = vld [vmem:[%s15 + $0x1c] sm:$0xf]
    %v2973 = vld [vmem:[%s15 + $0x20] sm:$0xf]
    %v2974 = vld [vmem:[%s15 + $0x24] sm:$0xf]
    %v2975 = vld [vmem:[%s15 + $0x28] sm:$0xf]
    %v2976 = vld [vmem:[%s15 + $0x2c] sm:$0xf]
    %v2977 = vld [vmem:[%s15 + $0x30] sm:$0xf]
    %v2978 = vld [vmem:[%s15 + $0x34] sm:$0xf]
    %v2979 = vld [vmem:[%s15 + $0x38] sm:$0xf]
    %v2980 = vld [vmem:[%s15 + $0x3c] sm:$0xf]
    %v2981 = vld [vmem:[%s15 + $0x40] sm:$0xf]
    %v2982 = vld [vmem:[%s15 + $0x44] sm:$0xf]
    %v2983 = vld [vmem:[%s15 + $0x48] sm:$0xf]
    %v2984 = vld [vmem:[%s15 + $0x4c] sm:$0xf]
    %v2985 = vld [vmem:[%s15 + $0x50] sm:$0xf]
    %v2986 = vld [vmem:[%s15 + $0x54] sm:$0xf]
    %v2987 = vld [vmem:[%s15 + $0x58] sm:$0xf]
    %v2988 = vld [vmem:[%s15 + $0x5c] sm:$0xf]
    %v2989 = vld [vmem:[%s15 + $0x60] sm:$0xf]
    %v2990 = vld [vmem:[%s15 + $0x64] sm:$0xf]
    %v2991 = vld [vmem:[%s15 + $0x68] sm:$0xf]
    %v2992 = vld [vmem:[%s15 + $0x6c] sm:$0xf]
    %v2993 = vld [vmem:[%s15 + $0x70] sm:$0xf]
    %v2994 = vld [vmem:[%s15 + $0x74] sm:$0xf]
    %v2995 = vld [vmem:[%s15 + $0x78] sm:$0xf]
    %v2996 = vld [vmem:[%s15 + $0x7c] sm:$0xf]
    %v2997 = vld [vmem:[%s15 + $0x80] sm:$0xf]
    %v2998 = vld [vmem:[%s15 + $0x84] sm:$0xf]
    %v2999 = vld [vmem:[%s15 + $0x88] sm:$0xf]
    %v3000 = vld [vmem:[%s15 + $0x8c] sm:$0xf]
    %v3001 = vld [vmem:[%s15 + $0x90] sm:$0xf]
    %v3002 = vld [vmem:[%s15 + $0x94] sm:$0xf]
    %v3003 = vld [vmem:[%s15 + $0x98] sm:$0xf]
    %v3004 = vld [vmem:[%s15 + $0x9c] sm:$0xf]
    %v3005 = vld [vmem:[%s15 + $0xa0] sm:$0xf]
    %v3006 = vld [vmem:[%s15 + $0xa4] sm:$0xf]
    %v3007 = vld [vmem:[%s15 + $0xa8] sm:$0xf]
    %v3008 = vld [vmem:[%s15 + $0xac] sm:$0xf]
    %v3009 = vld [vmem:[%s15 + $0xb0] sm:$0xf]
    %v3010 = vld [vmem:[%s15 + $0xb4] sm:$0xf]
    %v3011 = vld [vmem:[%s15 + $0xb8] sm:$0xf]
    %v3012 = vld [vmem:[%s15 + $0xbc] sm:$0xf]
    %v3013 = vld [vmem:[%s15 + $0xc0] sm:$0xf]
    %v3014 = vld [vmem:[%s15 + $0xc4] sm:$0xf]
    %v3015 = vld [vmem:[%s15 + $0xc8] sm:$0xf]
    %v3016 = vld [vmem:[%s15 + $0xcc] sm:$0xf]
    %v3017 = vld [vmem:[%s15 + $0xd0] sm:$0xf]
    %v3018 = vld [vmem:[%s15 + $0xd4] sm:$0xf]
    %v3019 = vld [vmem:[%s15 + $0xd8] sm:$0xf]
    %v3020 = vld [vmem:[%s15 + $0xdc] sm:$0xf]
    %v3021 = vld [vmem:[%s15 + $0xe0] sm:$0xf]
    %v3022 = vld [vmem:[%s15 + $0xe4] sm:$0xf]
    %v3023 = vld [vmem:[%s15 + $0xe8] sm:$0xf]
    %v3024 = vld [vmem:[%s15 + $0xec] sm:$0xf]
    %v3025 = vld [vmem:[%s15 + $0xf0] sm:$0xf]
    %v3026 = vld [vmem:[%s15 + $0xf4] sm:$0xf]
    %v3027 = vld [vmem:[%s15 + $0xf8] sm:$0xf]
    %v3028 = vld [vmem:[%s15 + $0xfc] sm:$0xf]
    %v3029 = vld [vmem:[%s15 + $0x100] sm:$0xf]
    %v3030 = vld [vmem:[%s15 + $0x104] sm:$0xf]
    %v3031 = vld [vmem:[%s15 + $0x108] sm:$0xf]
    %v3032 = vld [vmem:[%s15 + $0x10c] sm:$0xf]
    %v3033 = vld [vmem:[%s15 + $0x110] sm:$0xf]
    %v3034 = vld [vmem:[%s15 + $0x114] sm:$0xf]
    %v3035 = vld [vmem:[%s15 + $0x118] sm:$0xf]
    %v3036 = vld [vmem:[%s15 + $0x11c] sm:$0xf]
    %v3037 = vld [vmem:[%s15 + $0x120] sm:$0xf]
    %v3038 = vld [vmem:[%s15 + $0x124] sm:$0xf]
    %v3039 = vld [vmem:[%s15 + $0x128] sm:$0xf]
    %v3040 = vld [vmem:[%s15 + $0x12c] sm:$0xf]
    %v3041 = vld [vmem:[%s15 + $0x130] sm:$0xf]
    %v3042 = vld [vmem:[%s15 + $0x134] sm:$0xf]
    %v3043 = vld [vmem:[%s15 + $0x138] sm:$0xf]
    %v3044 = vld [vmem:[%s15 + $0x13c] sm:$0xf]
    %v3045 = vld [vmem:[%s15 + $0x140] sm:$0xf]
    %v3046 = vld [vmem:[%s15 + $0x144] sm:$0xf]
    %v3047 = vld [vmem:[%s15 + $0x148] sm:$0xf]
    %v3048 = vld [vmem:[%s15 + $0x14c] sm:$0xf]
    %v3049 = vld [vmem:[%s15 + $0x150] sm:$0xf]
    %v3050 = vld [vmem:[%s15 + $0x154] sm:$0xf]
    %v3051 = vld [vmem:[%s15 + $0x158] sm:$0xf]
    %v3052 = vld [vmem:[%s15 + $0x15c] sm:$0xf]
    %v3053 = vld [vmem:[%s15 + $0x160] sm:$0xf]
    %v3054 = vld [vmem:[%s15 + $0x164] sm:$0xf]
    %v3055 = vld [vmem:[%s15 + $0x168] sm:$0xf]
    %v3056 = vld [vmem:[%s15 + $0x16c] sm:$0xf]
    %v3057 = vld [vmem:[%s15 + $0x170] sm:$0xf]
    %v3058 = vld [vmem:[%s15 + $0x174] sm:$0xf]
    %v3059 = vld [vmem:[%s15 + $0x178] sm:$0xf]
    %v3060 = vld [vmem:[%s15 + $0x17c] sm:$0xf]
    %v3061 = vld [vmem:[%s15 + $0x180] sm:$0xf]
    %v3062 = vld [vmem:[%s15 + $0x184] sm:$0xf]
    %v3063 = vld [vmem:[%s15 + $0x188] sm:$0xf]
    %v3064 = vld [vmem:[%s15 + $0x18c] sm:$0xf]
    %v3065 = vld [vmem:[%s15 + $0x190] sm:$0xf]
    %v3066 = vld [vmem:[%s15 + $0x194] sm:$0xf]
    %v3067 = vld [vmem:[%s15 + $0x198] sm:$0xf]
    %v3068 = vld [vmem:[%s15 + $0x19c] sm:$0xf]
    %v3069 = vld [vmem:[%s15 + $0x1a0] sm:$0xf]
    %v3070 = vld [vmem:[%s15 + $0x1a4] sm:$0xf]
    %v3071 = vld [vmem:[%s15 + $0x1a8] sm:$0xf]
    %v3072 = vld [vmem:[%s15 + $0x1ac] sm:$0xf]
    %v3073 = vld [vmem:[%s15 + $0x1b0] sm:$0xf]
    %v3074 = vld [vmem:[%s15 + $0x1b4] sm:$0xf]
    %v3075 = vld [vmem:[%s15 + $0x1b8] sm:$0xf]
    %v3076 = vld [vmem:[%s15 + $0x1bc] sm:$0xf]
    %v3077 = vld [vmem:[%s15 + $0x1c0] sm:$0xf]
    %v3078 = vld [vmem:[%s15 + $0x1c4] sm:$0xf]
    %v3079 = vld [vmem:[%s15 + $0x1c8] sm:$0xf]
    %v3080 = vld [vmem:[%s15 + $0x1cc] sm:$0xf]
    %v3081 = vld [vmem:[%s15 + $0x1d0] sm:$0xf]
    %v3082 = vld [vmem:[%s15 + $0x1d4] sm:$0xf]
    %v3083 = vld [vmem:[%s15 + $0x1d8] sm:$0xf]
    %v3084 = vld [vmem:[%s15 + $0x1dc] sm:$0xf]
    %v3085 = vld [vmem:[%s15 + $0x1e0] sm:$0xf]
    %v3086 = vld [vmem:[%s15 + $0x1e4] sm:$0xf]
    %v3087 = vld [vmem:[%s15 + $0x1e8] sm:$0xf]
    %v3088 = vld [vmem:[%s15 + $0x1ec] sm:$0xf]
    %v3089 = vld [vmem:[%s15 + $0x1f0] sm:$0xf]
    %v3090 = vld [vmem:[%s15 + $0x1f4] sm:$0xf]
    %v3091 = vld [vmem:[%s15 + $0x1f8] sm:$0xf]
    %v3092 = vld [vmem:[%s15 + $0x1fc] sm:$0xf]
    %v3093 = vld [vmem:[%s15 + $0x200] sm:$0xf]
    %v3094 = vld [vmem:[%s15 + $0x204] sm:$0xf]
    %v3095 = vld [vmem:[%s15 + $0x208] sm:$0xf]
    %v3096 = vld [vmem:[%s15 + $0x20c] sm:$0xf]
    %v3097 = vld [vmem:[%s15 + $0x210] sm:$0xf]
    %v3098 = vld [vmem:[%s15 + $0x214] sm:$0xf]
    %v3099 = vld [vmem:[%s15 + $0x218] sm:$0xf]
    %v3100 = vld [vmem:[%s15 + $0x21c] sm:$0xf]
    %v3101 = vld [vmem:[%s15 + $0x220] sm:$0xf]
    %v3102 = vld [vmem:[%s15 + $0x224] sm:$0xf]
    %v3103 = vld [vmem:[%s15 + $0x228] sm:$0xf]
    %v3104 = vld [vmem:[%s15 + $0x22c] sm:$0xf]
    %v3105 = vld [vmem:[%s15 + $0x230] sm:$0xf]
    %v3106 = vld [vmem:[%s15 + $0x234] sm:$0xf]
    %v3107 = vld [vmem:[%s15 + $0x238] sm:$0xf]
    %v3108 = vld [vmem:[%s15 + $0x23c] sm:$0xf]
    %v3109 = vld [vmem:[%s15 + $0x240] sm:$0xf]
    %v3110 = vld [vmem:[%s15 + $0x244] sm:$0xf]
    %v3111 = vld [vmem:[%s15 + $0x248] sm:$0xf]
    %v3112 = vld [vmem:[%s15 + $0x24c] sm:$0xf]
    %v3113 = vld [vmem:[%s15 + $0x250] sm:$0xf]
    %v3114 = vld [vmem:[%s15 + $0x254] sm:$0xf]
    %v3115 = vld [vmem:[%s15 + $0x258] sm:$0xf]
    %v3116 = vld [vmem:[%s15 + $0x25c] sm:$0xf]
    %v3117 = vld [vmem:[%s15 + $0x260] sm:$0xf]
    %v3118 = vld [vmem:[%s15 + $0x264] sm:$0xf]
    %v3119 = vld [vmem:[%s15 + $0x268] sm:$0xf]
    %v3120 = vld [vmem:[%s15 + $0x26c] sm:$0xf]
    %v3121 = vld [vmem:[%s15 + $0x270] sm:$0xf]
    %v3122 = vld [vmem:[%s15 + $0x274] sm:$0xf]
    %v3123 = vld [vmem:[%s15 + $0x278] sm:$0xf]
    %v3124 = vld [vmem:[%s15 + $0x27c] sm:$0xf]
    %v3125 = vld [vmem:[%s15 + $0x280] sm:$0xf]
    %v3126 = vld [vmem:[%s15 + $0x284] sm:$0xf]
    %v3127 = vld [vmem:[%s15 + $0x288] sm:$0xf]
    %v3128 = vld [vmem:[%s15 + $0x28c] sm:$0xf]
    %v3129 = vld [vmem:[%s15 + $0x290] sm:$0xf]
    %v3130 = vld [vmem:[%s15 + $0x294] sm:$0xf]
    %v3131 = vld [vmem:[%s15 + $0x298] sm:$0xf]
    %v3132 = vld [vmem:[%s15 + $0x29c] sm:$0xf]
    %v3133 = vld [vmem:[%s15 + $0x2a0] sm:$0xf]
    %v3134 = vld [vmem:[%s15 + $0x2a4] sm:$0xf]
    %v3135 = vld [vmem:[%s15 + $0x2a8] sm:$0xf]
    %v3136 = vld [vmem:[%s15 + $0x2ac] sm:$0xf]
    %v3137 = vld [vmem:[%s15 + $0x2b0] sm:$0xf]
    %v3138 = vld [vmem:[%s15 + $0x2b4] sm:$0xf]
    %v3139 = vld [vmem:[%s15 + $0x2b8] sm:$0xf]
    %v3140 = vld [vmem:[%s15 + $0x2bc] sm:$0xf]
    %v3141 = vld [vmem:[%s15 + $0x2c0] sm:$0xf]
    %v3142 = vld [vmem:[%s15 + $0x2c4] sm:$0xf]
    %v3143 = vld [vmem:[%s15 + $0x2c8] sm:$0xf]
    %v3144 = vld [vmem:[%s15 + $0x2cc] sm:$0xf]
    %v3145 = vld [vmem:[%s15 + $0x2d0] sm:$0xf]
    %v3146 = vld [vmem:[%s15 + $0x2d4] sm:$0xf]
    %v3147 = vld [vmem:[%s15 + $0x2d8] sm:$0xf]
    %v3148 = vld [vmem:[%s15 + $0x2dc] sm:$0xf]
    %v3149 = vld [vmem:[%s15 + $0x2e0] sm:$0xf]
    %v3150 = vld [vmem:[%s15 + $0x2e4] sm:$0xf]
    %v3151 = vld [vmem:[%s15 + $0x2e8] sm:$0xf]
    %v3152 = vld [vmem:[%s15 + $0x2ec] sm:$0xf]
    %v3153 = vld [vmem:[%s15 + $0x2f0] sm:$0xf]
    %v3154 = vld [vmem:[%s15 + $0x2f4] sm:$0xf]
    %v3155 = vld [vmem:[%s15 + $0x2f8] sm:$0xf]
    %v3156 = vld [vmem:[%s15 + $0x2fc] sm:$0xf]
    %v3157 = vld [vmem:[%s15 + $0x300] sm:$0xf]
    %v3158 = vld [vmem:[%s15 + $0x304] sm:$0xf]
    %v3159 = vld [vmem:[%s15 + $0x308] sm:$0xf]
    %v3160 = vld [vmem:[%s15 + $0x30c] sm:$0xf]
    %v3161 = vld [vmem:[%s15 + $0x310] sm:$0xf]
    %v3162 = vld [vmem:[%s15 + $0x314] sm:$0xf]
    %v3163 = vld [vmem:[%s15 + $0x318] sm:$0xf]
    %v3164 = vld [vmem:[%s15 + $0x31c] sm:$0xf]
    %v3165 = vld [vmem:[%s15 + $0x320] sm:$0xf]
    %v3166 = vld [vmem:[%s15 + $0x324] sm:$0xf]
    %v3167 = vld [vmem:[%s15 + $0x328] sm:$0xf]
    %v3168 = vld [vmem:[%s15 + $0x32c] sm:$0xf]
    %v3169 = vld [vmem:[%s15 + $0x330] sm:$0xf]
    %v3170 = vld [vmem:[%s15 + $0x334] sm:$0xf]
    %v3171 = vld [vmem:[%s15 + $0x338] sm:$0xf]
    %v3172 = vld [vmem:[%s15 + $0x33c] sm:$0xf]
    %v3173 = vld [vmem:[%s15 + $0x340] sm:$0xf]
    %v3174 = vld [vmem:[%s15 + $0x344] sm:$0xf]
    %v3175 = vld [vmem:[%s15 + $0x348] sm:$0xf]
    %v3176 = vld [vmem:[%s15 + $0x34c] sm:$0xf]
    %v3177 = vld [vmem:[%s15 + $0x350] sm:$0xf]
    %v3178 = vld [vmem:[%s15 + $0x354] sm:$0xf]
    %v3179 = vld [vmem:[%s15 + $0x358] sm:$0xf]
    %v3180 = vld [vmem:[%s15 + $0x35c] sm:$0xf]
    %v3181 = vld [vmem:[%s15 + $0x360] sm:$0xf]
    %v3182 = vld [vmem:[%s15 + $0x364] sm:$0xf]
    %v3183 = vld [vmem:[%s15 + $0x368] sm:$0xf]
    %v3184 = vld [vmem:[%s15 + $0x36c] sm:$0xf]
    %v3185 = vld [vmem:[%s15 + $0x370] sm:$0xf]
    %v3186 = vld [vmem:[%s15 + $0x374] sm:$0xf]
    %v3187 = vld [vmem:[%s15 + $0x378] sm:$0xf]
    %v3188 = vld [vmem:[%s15 + $0x37c] sm:$0xf]
    %v3189 = vld [vmem:[%s15 + $0x380] sm:$0xf]
    %v3190 = vld [vmem:[%s15 + $0x384] sm:$0xf]
    %v3191 = vld [vmem:[%s15 + $0x388] sm:$0xf]
    %v3192 = vld [vmem:[%s15 + $0x38c] sm:$0xf]
    %v3193 = vld [vmem:[%s15 + $0x390] sm:$0xf]
    %v3194 = vld [vmem:[%s15 + $0x394] sm:$0xf]
    %v3195 = vld [vmem:[%s15 + $0x398] sm:$0xf]
    %v3196 = vld [vmem:[%s15 + $0x39c] sm:$0xf]
    %v3197 = vld [vmem:[%s15 + $0x3a0] sm:$0xf]
    %v3198 = vld [vmem:[%s15 + $0x3a4] sm:$0xf]
    %v3199 = vld [vmem:[%s15 + $0x3a8] sm:$0xf]
    %v3200 = vld [vmem:[%s15 + $0x3ac] sm:$0xf]
    %v3201 = vld [vmem:[%s15 + $0x3b0] sm:$0xf]
    %v3202 = vld [vmem:[%s15 + $0x3b4] sm:$0xf]
    %v3203 = vld [vmem:[%s15 + $0x3b8] sm:$0xf]
    %v3204 = vld [vmem:[%s15 + $0x3bc] sm:$0xf]
    %v3205 = vld [vmem:[%s15 + $0x3c0] sm:$0xf]
    %v3206 = vld [vmem:[%s15 + $0x3c4] sm:$0xf]
    %v3207 = vld [vmem:[%s15 + $0x3c8] sm:$0xf]
    %v3208 = vld [vmem:[%s15 + $0x3cc] sm:$0xf]
    %v3209 = vld [vmem:[%s15 + $0x3d0] sm:$0xf]
    %v3210 = vld [vmem:[%s15 + $0x3d4] sm:$0xf]
    %v3211 = vld [vmem:[%s15 + $0x3d8] sm:$0xf]
    %v3212 = vld [vmem:[%s15 + $0x3dc] sm:$0xf]
    %v3213 = vld [vmem:[%s15 + $0x3e0] sm:$0xf]
    %v3214 = vld [vmem:[%s15 + $0x3e4] sm:$0xf]
    %v3215 = vld [vmem:[%s15 + $0x3e8] sm:$0xf]
    %v3216 = vld [vmem:[%s15 + $0x3ec] sm:$0xf]
    %v3217 = vld [vmem:[%s15 + $0x3f0] sm:$0xf]
    %v3218 = vld [vmem:[%s15 + $0x3f4] sm:$0xf]
    %v3219 = vld [vmem:[%s15 + $0x3f8] sm:$0xf]
    %v3220 = vld [vmem:[%s15 + $0x3fc] sm:$0xf]
    %v3221 = vld [vmem:[%s15 + $0x400] sm:$0xf]
    %v3222 = vld [vmem:[%s15 + $0x404] sm:$0xf]
    %v3223 = vld [vmem:[%s15 + $0x408] sm:$0xf]
    %v3224 = vld [vmem:[%s15 + $0x40c] sm:$0xf]
    %v3225 = vld [vmem:[%s15 + $0x410] sm:$0xf]
    %v3226 = vld [vmem:[%s15 + $0x414] sm:$0xf]
    %v3227 = vld [vmem:[%s15 + $0x418] sm:$0xf]
    %v3228 = vld [vmem:[%s15 + $0x41c] sm:$0xf]
    %v3229 = vld [vmem:[%s15 + $0x420] sm:$0xf]
    %v3230 = vld [vmem:[%s15 + $0x424] sm:$0xf]
    %v3231 = vld [vmem:[%s15 + $0x428] sm:$0xf]
    %v3232 = vld [vmem:[%s15 + $0x42c] sm:$0xf]
    %v3233 = vld [vmem:[%s15 + $0x430] sm:$0xf]
    %v3234 = vld [vmem:[%s15 + $0x434] sm:$0xf]
    %v3235 = vld [vmem:[%s15 + $0x438] sm:$0xf]
    %v3236 = vld [vmem:[%s15 + $0x43c] sm:$0xf]
    %v3237 = vld [vmem:[%s15 + $0x440] sm:$0xf]
    %v3238 = vld [vmem:[%s15 + $0x444] sm:$0xf]
    %v3239 = vld [vmem:[%s15 + $0x448] sm:$0xf]
    %v3240 = vld [vmem:[%s15 + $0x44c] sm:$0xf]
    %v3241 = vld [vmem:[%s15 + $0x450] sm:$0xf]
    %v3242 = vld [vmem:[%s15 + $0x454] sm:$0xf]
    %v3243 = vld [vmem:[%s15 + $0x458] sm:$0xf]
    %v3244 = vld [vmem:[%s15 + $0x45c] sm:$0xf]
    %v3245 = vld [vmem:[%s15 + $0x460] sm:$0xf]
    %v3246 = vld [vmem:[%s15 + $0x464] sm:$0xf]
    %v3247 = vld [vmem:[%s15 + $0x468] sm:$0xf]
    %v3248 = vld [vmem:[%s15 + $0x46c] sm:$0xf]
    %v3249 = vld [vmem:[%s15 + $0x470] sm:$0xf]
    %v3250 = vld [vmem:[%s15 + $0x474] sm:$0xf]
    %v3251 = vld [vmem:[%s15 + $0x478] sm:$0xf]
    %v3252 = vld [vmem:[%s15 + $0x47c] sm:$0xf]
    %v3253 = vld [vmem:[%s15 + $0x480] sm:$0xf]
    %v3254 = vld [vmem:[%s15 + $0x484] sm:$0xf]
    %v3255 = vld [vmem:[%s15 + $0x488] sm:$0xf]
    %v3256 = vld [vmem:[%s15 + $0x48c] sm:$0xf]
    %v3257 = vld [vmem:[%s15 + $0x490] sm:$0xf]
    %v3258 = vld [vmem:[%s15 + $0x494] sm:$0xf]
    %v3259 = vld [vmem:[%s15 + $0x498] sm:$0xf]
    %v3260 = vld [vmem:[%s15 + $0x49c] sm:$0xf]
    %v3261 = vld [vmem:[%s15 + $0x4a0] sm:$0xf]
    %v3262 = vld [vmem:[%s15 + $0x4a4] sm:$0xf]
    %v3263 = vld [vmem:[%s15 + $0x4a8] sm:$0xf]
    %v3264 = vld [vmem:[%s15 + $0x4ac] sm:$0xf]
    %v3265 = vld [vmem:[%s15 + $0x4b0] sm:$0xf]
    %v3266 = vld [vmem:[%s15 + $0x4b4] sm:$0xf]
    %v3267 = vld [vmem:[%s15 + $0x4b8] sm:$0xf]
    %v3268 = vld [vmem:[%s15 + $0x4bc] sm:$0xf]
    %v3269 = vld [vmem:[%s15 + $0x4c0] sm:$0xf]
    %v3270 = vld [vmem:[%s15 + $0x4c4] sm:$0xf]
    %v3271 = vld [vmem:[%s15 + $0x4c8] sm:$0xf]
    %v3272 = vld [vmem:[%s15 + $0x4cc] sm:$0xf]
    %v3273 = vld [vmem:[%s15 + $0x4d0] sm:$0xf]
    %v3274 = vld [vmem:[%s15 + $0x4d4] sm:$0xf]
    %v3275 = vld [vmem:[%s15 + $0x4d8] sm:$0xf]
    %v3276 = vld [vmem:[%s15 + $0x4dc] sm:$0xf]
    %v3277 = vld [vmem:[%s15 + $0x4e0] sm:$0xf]
    %v3278 = vld [vmem:[%s15 + $0x4e4] sm:$0xf]
    %v3279 = vld [vmem:[%s15 + $0x4e8] sm:$0xf]
    %v3280 = vld [vmem:[%s15 + $0x4ec] sm:$0xf]
    %v3281 = vld [vmem:[%s15 + $0x4f0] sm:$0xf]
    %v3282 = vld [vmem:[%s15 + $0x4f4] sm:$0xf]
    %v3283 = vld [vmem:[%s15 + $0x4f8] sm:$0xf]
    %v3284 = vld [vmem:[%s15 + $0x4fc] sm:$0xf]
    %v3285 = vld [vmem:[%s15 + $0x500] sm:$0xf]
    %v3286 = vld [vmem:[%s15 + $0x504] sm:$0xf]
    %v3287 = vld [vmem:[%s15 + $0x508] sm:$0xf]
    %v3288 = vld [vmem:[%s15 + $0x50c] sm:$0xf]
    %v3289 = vld [vmem:[%s15 + $0x510] sm:$0xf]
    %v3290 = vld [vmem:[%s15 + $0x514] sm:$0xf]
    %v3291 = vld [vmem:[%s15 + $0x518] sm:$0xf]
    %v3292 = vld [vmem:[%s15 + $0x51c] sm:$0xf]
    %v3293 = vld [vmem:[%s15 + $0x520] sm:$0xf]
    %v3294 = vld [vmem:[%s15 + $0x524] sm:$0xf]
    %v3295 = vld [vmem:[%s15 + $0x528] sm:$0xf]
    %v3296 = vld [vmem:[%s15 + $0x52c] sm:$0xf]
    %v3297 = vld [vmem:[%s15 + $0x530] sm:$0xf]
    %v3298 = vld [vmem:[%s15 + $0x534] sm:$0xf]
    %v3299 = vld [vmem:[%s15 + $0x538] sm:$0xf]
    %v3300 = vld [vmem:[%s15 + $0x53c] sm:$0xf]
    %v3301 = vld [vmem:[%s15 + $0x540] sm:$0xf]
    %v3302 = vld [vmem:[%s15 + $0x544] sm:$0xf]
    %v3303 = vld [vmem:[%s15 + $0x548] sm:$0xf]
    %v3304 = vld [vmem:[%s15 + $0x54c] sm:$0xf]
    %v3305 = vld [vmem:[%s15 + $0x550] sm:$0xf]
    %v3306 = vld [vmem:[%s15 + $0x554] sm:$0xf]
    %v3307 = vld [vmem:[%s15 + $0x558] sm:$0xf]
    %v3308 = vld [vmem:[%s15 + $0x55c] sm:$0xf]
    %v3309 = vld [vmem:[%s15 + $0x560] sm:$0xf]
    %v3310 = vld [vmem:[%s15 + $0x564] sm:$0xf]
    %v3311 = vld [vmem:[%s15 + $0x568] sm:$0xf]
    %v3312 = vld [vmem:[%s15 + $0x56c] sm:$0xf]
    %v3313 = vld [vmem:[%s15 + $0x570] sm:$0xf]
    %v3314 = vld [vmem:[%s15 + $0x574] sm:$0xf]
    %v3315 = vld [vmem:[%s15 + $0x578] sm:$0xf]
    %v3316 = vld [vmem:[%s15 + $0x57c] sm:$0xf]
    %v3317 = vld [vmem:[%s15 + $0x580] sm:$0xf]
    %v3318 = vld [vmem:[%s15 + $0x584] sm:$0xf]
    %v3319 = vld [vmem:[%s15 + $0x588] sm:$0xf]
    %v3320 = vld [vmem:[%s15 + $0x58c] sm:$0xf]
    %v3321 = vld [vmem:[%s15 + $0x590] sm:$0xf]
    %v3322 = vld [vmem:[%s15 + $0x594] sm:$0xf]
    %v3323 = vld [vmem:[%s15 + $0x598] sm:$0xf]
    %v3324 = vld [vmem:[%s15 + $0x59c] sm:$0xf]
    %v3325 = vld [vmem:[%s15 + $0x5a0] sm:$0xf]
    %v3326 = vld [vmem:[%s15 + $0x5a4] sm:$0xf]
    %v3327 = vld [vmem:[%s15 + $0x5a8] sm:$0xf]
    %v3328 = vld [vmem:[%s15 + $0x5ac] sm:$0xf]
    %v3329 = vld [vmem:[%s15 + $0x5b0] sm:$0xf]
    %v3330 = vld [vmem:[%s15 + $0x5b4] sm:$0xf]
    %v3331 = vld [vmem:[%s15 + $0x5b8] sm:$0xf]
    %v3332 = vld [vmem:[%s15 + $0x5bc] sm:$0xf]
    %v3333 = vld [vmem:[%s15 + $0x5c0] sm:$0xf]
    %v3334 = vld [vmem:[%s15 + $0x5c4] sm:$0xf]
    %v3335 = vld [vmem:[%s15 + $0x5c8] sm:$0xf]
    %v3336 = vld [vmem:[%s15 + $0x5cc] sm:$0xf]
    %v3337 = vld [vmem:[%s15 + $0x5d0] sm:$0xf]
    %v3338 = vld [vmem:[%s15 + $0x5d4] sm:$0xf]
    %v3339 = vld [vmem:[%s15 + $0x5d8] sm:$0xf]
    %v3340 = vld [vmem:[%s15 + $0x5dc] sm:$0xf]
    %v3341 = vld [vmem:[%s15 + $0x5e0] sm:$0xf]
    %v3342 = vld [vmem:[%s15 + $0x5e4] sm:$0xf]
    %v3343 = vld [vmem:[%s15 + $0x5e8] sm:$0xf]
    %v3344 = vld [vmem:[%s15 + $0x5ec] sm:$0xf]
    %v3345 = vld [vmem:[%s15 + $0x5f0] sm:$0xf]
    %v3346 = vld [vmem:[%s15 + $0x5f4] sm:$0xf]
    %v3347 = vld [vmem:[%s15 + $0x5f8] sm:$0xf]
    %v3348 = vld [vmem:[%s15 + $0x5fc] sm:$0xf]
    %v3349 = vld [vmem:[%s16] sm:$0x1]
    %v3351 = vlaneseq
    %v3352 = vshrl.u32 %v3351, 7
    %v3353 = vsub.s32 0, %v3352
    %v3354 = vrot.slane %v3349, %v3353
    %v3740 = vunpack.c.l.b16 %v2965
    %v3741 = vunpack.c.l.b16 %v2966
    %v3742 = vunpack.c.l.b16 %v2967
    %v3743 = vunpack.c.l.b16 %v2968
    %v3744 = vunpack.c.l.b16 %v2969
    %v3745 = vunpack.c.l.b16 %v2970
    %v3746 = vunpack.c.l.b16 %v2971
    %v3747 = vunpack.c.l.b16 %v2972
    %v3748 = vunpack.c.l.b16 %v2973
    %v3749 = vunpack.c.l.b16 %v2974
    %v3750 = vunpack.c.l.b16 %v2975
    %v3751 = vunpack.c.l.b16 %v2976
    %v3752 = vunpack.c.l.b16 %v2977
    %v3753 = vunpack.c.l.b16 %v2978
    %v3754 = vunpack.c.l.b16 %v2979
    %v3755 = vunpack.c.l.b16 %v2980
    %v3756 = vunpack.c.l.b16 %v2981
    %v3757 = vunpack.c.l.b16 %v2982
    %v3758 = vunpack.c.l.b16 %v2983
    %v3759 = vunpack.c.l.b16 %v2984
    %v3760 = vunpack.c.l.b16 %v2985
    %v3761 = vunpack.c.l.b16 %v2986
    %v3762 = vunpack.c.l.b16 %v2987
    %v3763 = vunpack.c.l.b16 %v2988
    %v3764 = vunpack.c.l.b16 %v2989
    %v3765 = vunpack.c.l.b16 %v2990
    %v3766 = vunpack.c.l.b16 %v2991
    %v3767 = vunpack.c.l.b16 %v2992
    %v3768 = vunpack.c.l.b16 %v2993
    %v3769 = vunpack.c.l.b16 %v2994
    %v3770 = vunpack.c.l.b16 %v2995
    %v3771 = vunpack.c.l.b16 %v2996
    %v3772 = vunpack.c.l.b16 %v2997
    %v3773 = vunpack.c.l.b16 %v2998
    %v3774 = vunpack.c.l.b16 %v2999
    %v3775 = vunpack.c.l.b16 %v3000
    %v3776 = vunpack.c.l.b16 %v3001
    %v3777 = vunpack.c.l.b16 %v3002
    %v3778 = vunpack.c.l.b16 %v3003
    %v3779 = vunpack.c.l.b16 %v3004
    %v3780 = vunpack.c.l.b16 %v3005
    %v3781 = vunpack.c.l.b16 %v3006
    %v3782 = vunpack.c.l.b16 %v3007
    %v3783 = vunpack.c.l.b16 %v3008
    %v3784 = vunpack.c.l.b16 %v3009
    %v3785 = vunpack.c.l.b16 %v3010
    %v3786 = vunpack.c.l.b16 %v3011
    %v3787 = vunpack.c.l.b16 %v3012
    %v3788 = vunpack.c.l.b16 %v3013
    %v3789 = vunpack.c.l.b16 %v3014
    %v3790 = vunpack.c.l.b16 %v3015
    %v3791 = vunpack.c.l.b16 %v3016
    %v3792 = vunpack.c.l.b16 %v3017
    %v3793 = vunpack.c.l.b16 %v3018
    %v3794 = vunpack.c.l.b16 %v3019
    %v3795 = vunpack.c.l.b16 %v3020
    %v3796 = vunpack.c.l.b16 %v3021
    %v3797 = vunpack.c.l.b16 %v3022
    %v3798 = vunpack.c.l.b16 %v3023
    %v3799 = vunpack.c.l.b16 %v3024
    %v3800 = vunpack.c.l.b16 %v3025
    %v3801 = vunpack.c.l.b16 %v3026
    %v3802 = vunpack.c.l.b16 %v3027
    %v3803 = vunpack.c.l.b16 %v3028
    %v3804 = vunpack.c.l.b16 %v3029
    %v3805 = vunpack.c.l.b16 %v3030
    %v3806 = vunpack.c.l.b16 %v3031
    %v3807 = vunpack.c.l.b16 %v3032
    %v3808 = vunpack.c.l.b16 %v3033
    %v3809 = vunpack.c.l.b16 %v3034
    %v3810 = vunpack.c.l.b16 %v3035
    %v3811 = vunpack.c.l.b16 %v3036
    %v3812 = vunpack.c.l.b16 %v3037
    %v3813 = vunpack.c.l.b16 %v3038
    %v3814 = vunpack.c.l.b16 %v3039
    %v3815 = vunpack.c.l.b16 %v3040
    %v3816 = vunpack.c.l.b16 %v3041
    %v3817 = vunpack.c.l.b16 %v3042
    %v3818 = vunpack.c.l.b16 %v3043
    %v3819 = vunpack.c.l.b16 %v3044
    %v3820 = vunpack.c.l.b16 %v3045
    %v3821 = vunpack.c.l.b16 %v3046
    %v3822 = vunpack.c.l.b16 %v3047
    %v3823 = vunpack.c.l.b16 %v3048
    %v3824 = vunpack.c.l.b16 %v3049
    %v3825 = vunpack.c.l.b16 %v3050
    %v3826 = vunpack.c.l.b16 %v3051
    %v3827 = vunpack.c.l.b16 %v3052
    %v3828 = vunpack.c.l.b16 %v3053
    %v3829 = vunpack.c.l.b16 %v3054
    %v3830 = vunpack.c.l.b16 %v3055
    %v3831 = vunpack.c.l.b16 %v3056
    %v3832 = vunpack.c.l.b16 %v3057
    %v3833 = vunpack.c.l.b16 %v3058
    %v3834 = vunpack.c.l.b16 %v3059
    %v3835 = vunpack.c.l.b16 %v3060
    %v3836 = vunpack.c.l.b16 %v3061
    %v3837 = vunpack.c.l.b16 %v3062
    %v3838 = vunpack.c.l.b16 %v3063
    %v3839 = vunpack.c.l.b16 %v3064
    %v3840 = vunpack.c.l.b16 %v3065
    %v3841 = vunpack.c.l.b16 %v3066
    %v3842 = vunpack.c.l.b16 %v3067
    %v3843 = vunpack.c.l.b16 %v3068
    %v3844 = vunpack.c.l.b16 %v3069
    %v3845 = vunpack.c.l.b16 %v3070
    %v3846 = vunpack.c.l.b16 %v3071
    %v3847 = vunpack.c.l.b16 %v3072
    %v3848 = vunpack.c.l.b16 %v3073
    %v3849 = vunpack.c.l.b16 %v3074
    %v3850 = vunpack.c.l.b16 %v3075
    %v3851 = vunpack.c.l.b16 %v3076
    %v3852 = vunpack.c.l.b16 %v3077
    %v3853 = vunpack.c.l.b16 %v3078
    %v3854 = vunpack.c.l.b16 %v3079
    %v3855 = vunpack.c.l.b16 %v3080
    %v3856 = vunpack.c.l.b16 %v3081
    %v3857 = vunpack.c.l.b16 %v3082
    %v3858 = vunpack.c.l.b16 %v3083
    %v3859 = vunpack.c.l.b16 %v3084
    %v3860 = vunpack.c.l.b16 %v3085
    %v3861 = vunpack.c.l.b16 %v3086
    %v3862 = vunpack.c.l.b16 %v3087
    %v3863 = vunpack.c.l.b16 %v3088
    %v3864 = vunpack.c.l.b16 %v3089
    %v3865 = vunpack.c.l.b16 %v3090
    %v3866 = vunpack.c.l.b16 %v3091
    %v3867 = vunpack.c.l.b16 %v3092
    %v3868 = vunpack.c.l.b16 %v3093
    %v3869 = vunpack.c.l.b16 %v3094
    %v3870 = vunpack.c.l.b16 %v3095
    %v3871 = vunpack.c.l.b16 %v3096
    %v3872 = vunpack.c.l.b16 %v3097
    %v3873 = vunpack.c.l.b16 %v3098
    %v3874 = vunpack.c.l.b16 %v3099
    %v3875 = vunpack.c.l.b16 %v3100
    %v3876 = vunpack.c.l.b16 %v3101
    %v3877 = vunpack.c.l.b16 %v3102
    %v3878 = vunpack.c.l.b16 %v3103
    %v3879 = vunpack.c.l.b16 %v3104
    %v3880 = vunpack.c.l.b16 %v3105
    %v3881 = vunpack.c.l.b16 %v3106
    %v3882 = vunpack.c.l.b16 %v3107
    %v3883 = vunpack.c.l.b16 %v3108
    %v3884 = vunpack.c.l.b16 %v3109
    %v3885 = vunpack.c.l.b16 %v3110
    %v3886 = vunpack.c.l.b16 %v3111
    %v3887 = vunpack.c.l.b16 %v3112
    %v3888 = vunpack.c.l.b16 %v3113
    %v3889 = vunpack.c.l.b16 %v3114
    %v3890 = vunpack.c.l.b16 %v3115
    %v3891 = vunpack.c.l.b16 %v3116
    %v3892 = vunpack.c.l.b16 %v3117
    %v3893 = vunpack.c.l.b16 %v3118
    %v3894 = vunpack.c.l.b16 %v3119
    %v3895 = vunpack.c.l.b16 %v3120
    %v3896 = vunpack.c.l.b16 %v3121
    %v3897 = vunpack.c.l.b16 %v3122
    %v3898 = vunpack.c.l.b16 %v3123
    %v3899 = vunpack.c.l.b16 %v3124
    %v3900 = vunpack.c.l.b16 %v3125
    %v3901 = vunpack.c.l.b16 %v3126
    %v3902 = vunpack.c.l.b16 %v3127
    %v3903 = vunpack.c.l.b16 %v3128
    %v3904 = vunpack.c.l.b16 %v3129
    %v3905 = vunpack.c.l.b16 %v3130
    %v3906 = vunpack.c.l.b16 %v3131
    %v3907 = vunpack.c.l.b16 %v3132
    %v3908 = vunpack.c.l.b16 %v3133
    %v3909 = vunpack.c.l.b16 %v3134
    %v3910 = vunpack.c.l.b16 %v3135
    %v3911 = vunpack.c.l.b16 %v3136
    %v3912 = vunpack.c.l.b16 %v3137
    %v3913 = vunpack.c.l.b16 %v3138
    %v3914 = vunpack.c.l.b16 %v3139
    %v3915 = vunpack.c.l.b16 %v3140
    %v3916 = vunpack.c.l.b16 %v3141
    %v3917 = vunpack.c.l.b16 %v3142
    %v3918 = vunpack.c.l.b16 %v3143
    %v3919 = vunpack.c.l.b16 %v3144
    %v3920 = vunpack.c.l.b16 %v3145
    %v3921 = vunpack.c.l.b16 %v3146
    %v3922 = vunpack.c.l.b16 %v3147
    %v3923 = vunpack.c.l.b16 %v3148
    %v3924 = vunpack.c.l.b16 %v3149
    %v3925 = vunpack.c.l.b16 %v3150
    %v3926 = vunpack.c.l.b16 %v3151
    %v3927 = vunpack.c.l.b16 %v3152
    %v3928 = vunpack.c.l.b16 %v3153
    %v3929 = vunpack.c.l.b16 %v3154
    %v3930 = vunpack.c.l.b16 %v3155
    %v3931 = vunpack.c.l.b16 %v3156
    %v3932 = vunpack.c.l.b16 %v3157
    %v3933 = vunpack.c.l.b16 %v3158
    %v3934 = vunpack.c.l.b16 %v3159
    %v3935 = vunpack.c.l.b16 %v3160
    %v3936 = vunpack.c.l.b16 %v3161
    %v3937 = vunpack.c.l.b16 %v3162
    %v3938 = vunpack.c.l.b16 %v3163
    %v3939 = vunpack.c.l.b16 %v3164
    %v3940 = vunpack.c.l.b16 %v3165
    %v3941 = vunpack.c.l.b16 %v3166
    %v3942 = vunpack.c.l.b16 %v3167
    %v3943 = vunpack.c.l.b16 %v3168
    %v3944 = vunpack.c.l.b16 %v3169
    %v3945 = vunpack.c.l.b16 %v3170
    %v3946 = vunpack.c.l.b16 %v3171
    %v3947 = vunpack.c.l.b16 %v3172
    %v3948 = vunpack.c.l.b16 %v3173
    %v3949 = vunpack.c.l.b16 %v3174
    %v3950 = vunpack.c.l.b16 %v3175
    %v3951 = vunpack.c.l.b16 %v3176
    %v3952 = vunpack.c.l.b16 %v3177
    %v3953 = vunpack.c.l.b16 %v3178
    %v3954 = vunpack.c.l.b16 %v3179
    %v3955 = vunpack.c.l.b16 %v3180
    %v3956 = vunpack.c.l.b16 %v3181
    %v3957 = vunpack.c.l.b16 %v3182
    %v3958 = vunpack.c.l.b16 %v3183
    %v3959 = vunpack.c.l.b16 %v3184
    %v3960 = vunpack.c.l.b16 %v3185
    %v3961 = vunpack.c.l.b16 %v3186
    %v3962 = vunpack.c.l.b16 %v3187
    %v3963 = vunpack.c.l.b16 %v3188
    %v3964 = vunpack.c.l.b16 %v3189
    %v3965 = vunpack.c.l.b16 %v3190
    %v3966 = vunpack.c.l.b16 %v3191
    %v3967 = vunpack.c.l.b16 %v3192
    %v3968 = vunpack.c.l.b16 %v3193
    %v3969 = vunpack.c.l.b16 %v3194
    %v3970 = vunpack.c.l.b16 %v3195
    %v3971 = vunpack.c.l.b16 %v3196
    %v3972 = vunpack.c.l.b16 %v3197
    %v3973 = vunpack.c.l.b16 %v3198
    %v3974 = vunpack.c.l.b16 %v3199
    %v3975 = vunpack.c.l.b16 %v3200
    %v3976 = vunpack.c.l.b16 %v3201
    %v3977 = vunpack.c.l.b16 %v3202
    %v3978 = vunpack.c.l.b16 %v3203
    %v3979 = vunpack.c.l.b16 %v3204
    %v3980 = vunpack.c.l.b16 %v3205
    %v3981 = vunpack.c.l.b16 %v3206
    %v3982 = vunpack.c.l.b16 %v3207
    %v3983 = vunpack.c.l.b16 %v3208
    %v3984 = vunpack.c.l.b16 %v3209
    %v3985 = vunpack.c.l.b16 %v3210
    %v3986 = vunpack.c.l.b16 %v3211
    %v3987 = vunpack.c.l.b16 %v3212
    %v3988 = vunpack.c.l.b16 %v3213
    %v3989 = vunpack.c.l.b16 %v3214
    %v3990 = vunpack.c.l.b16 %v3215
    %v3991 = vunpack.c.l.b16 %v3216
    %v3992 = vunpack.c.l.b16 %v3217
    %v3993 = vunpack.c.l.b16 %v3218
    %v3994 = vunpack.c.l.b16 %v3219
    %v3995 = vunpack.c.l.b16 %v3220
    %v3996 = vunpack.c.l.b16 %v3221
    %v3997 = vunpack.c.l.b16 %v3222
    %v3998 = vunpack.c.l.b16 %v3223
    %v3999 = vunpack.c.l.b16 %v3224
    %v4000 = vunpack.c.l.b16 %v3225
    %v4001 = vunpack.c.l.b16 %v3226
    %v4002 = vunpack.c.l.b16 %v3227
    %v4003 = vunpack.c.l.b16 %v3228
    %v4004 = vunpack.c.l.b16 %v3229
    %v4005 = vunpack.c.l.b16 %v3230
    %v4006 = vunpack.c.l.b16 %v3231
    %v4007 = vunpack.c.l.b16 %v3232
    %v4008 = vunpack.c.l.b16 %v3233
    %v4009 = vunpack.c.l.b16 %v3234
    %v4010 = vunpack.c.l.b16 %v3235
    %v4011 = vunpack.c.l.b16 %v3236
    %v4012 = vunpack.c.l.b16 %v3237
    %v4013 = vunpack.c.l.b16 %v3238
    %v4014 = vunpack.c.l.b16 %v3239
    %v4015 = vunpack.c.l.b16 %v3240
    %v4016 = vunpack.c.l.b16 %v3241
    %v4017 = vunpack.c.l.b16 %v3242
    %v4018 = vunpack.c.l.b16 %v3243
    %v4019 = vunpack.c.l.b16 %v3244
    %v4020 = vunpack.c.l.b16 %v3245
    %v4021 = vunpack.c.l.b16 %v3246
    %v4022 = vunpack.c.l.b16 %v3247
    %v4023 = vunpack.c.l.b16 %v3248
    %v4024 = vunpack.c.l.b16 %v3249
    %v4025 = vunpack.c.l.b16 %v3250
    %v4026 = vunpack.c.l.b16 %v3251
    %v4027 = vunpack.c.l.b16 %v3252
    %v4028 = vunpack.c.l.b16 %v3253
    %v4029 = vunpack.c.l.b16 %v3254
    %v4030 = vunpack.c.l.b16 %v3255
    %v4031 = vunpack.c.l.b16 %v3256
    %v4032 = vunpack.c.l.b16 %v3257
    %v4033 = vunpack.c.l.b16 %v3258
    %v4034 = vunpack.c.l.b16 %v3259
    %v4035 = vunpack.c.l.b16 %v3260
    %v4036 = vunpack.c.l.b16 %v3261
    %v4037 = vunpack.c.l.b16 %v3262
    %v4038 = vunpack.c.l.b16 %v3263
    %v4039 = vunpack.c.l.b16 %v3264
    %v4040 = vunpack.c.l.b16 %v3265
    %v4041 = vunpack.c.l.b16 %v3266
    %v4042 = vunpack.c.l.b16 %v3267
    %v4043 = vunpack.c.l.b16 %v3268
    %v4044 = vunpack.c.l.b16 %v3269
    %v4045 = vunpack.c.l.b16 %v3270
    %v4046 = vunpack.c.l.b16 %v3271
    %v4047 = vunpack.c.l.b16 %v3272
    %v4048 = vunpack.c.l.b16 %v3273
    %v4049 = vunpack.c.l.b16 %v3274
    %v4050 = vunpack.c.l.b16 %v3275
    %v4051 = vunpack.c.l.b16 %v3276
    %v4052 = vunpack.c.l.b16 %v3277
    %v4053 = vunpack.c.l.b16 %v3278
    %v4054 = vunpack.c.l.b16 %v3279
    %v4055 = vunpack.c.l.b16 %v3280
    %v4056 = vunpack.c.l.b16 %v3281
    %v4057 = vunpack.c.l.b16 %v3282
    %v4058 = vunpack.c.l.b16 %v3283
    %v4059 = vunpack.c.l.b16 %v3284
    %v4060 = vunpack.c.l.b16 %v3285
    %v4061 = vunpack.c.l.b16 %v3286
    %v4062 = vunpack.c.l.b16 %v3287
    %v4063 = vunpack.c.l.b16 %v3288
    %v4064 = vunpack.c.l.b16 %v3289
    %v4065 = vunpack.c.l.b16 %v3290
    %v4066 = vunpack.c.l.b16 %v3291
    %v4067 = vunpack.c.l.b16 %v3292
    %v4068 = vunpack.c.l.b16 %v3293
    %v4069 = vunpack.c.l.b16 %v3294
    %v4070 = vunpack.c.l.b16 %v3295
    %v4071 = vunpack.c.l.b16 %v3296
    %v4072 = vunpack.c.l.b16 %v3297
    %v4073 = vunpack.c.l.b16 %v3298
    %v4074 = vunpack.c.l.b16 %v3299
    %v4075 = vunpack.c.l.b16 %v3300
    %v4076 = vunpack.c.l.b16 %v3301
    %v4077 = vunpack.c.l.b16 %v3302
    %v4078 = vunpack.c.l.b16 %v3303
    %v4079 = vunpack.c.l.b16 %v3304
    %v4080 = vunpack.c.l.b16 %v3305
    %v4081 = vunpack.c.l.b16 %v3306
    %v4082 = vunpack.c.l.b16 %v3307
    %v4083 = vunpack.c.l.b16 %v3308
    %v4084 = vunpack.c.l.b16 %v3309
    %v4085 = vunpack.c.l.b16 %v3310
    %v4086 = vunpack.c.l.b16 %v3311
    %v4087 = vunpack.c.l.b16 %v3312
    %v4088 = vunpack.c.l.b16 %v3313
    %v4089 = vunpack.c.l.b16 %v3314
    %v4090 = vunpack.c.l.b16 %v3315
    %v4091 = vunpack.c.l.b16 %v3316
    %v4092 = vunpack.c.l.b16 %v3317
    %v4093 = vunpack.c.l.b16 %v3318
    %v4094 = vunpack.c.l.b16 %v3319
    %v4095 = vunpack.c.l.b16 %v3320
    %v4096 = vunpack.c.l.b16 %v3321
    %v4097 = vunpack.c.l.b16 %v3322
    %v4098 = vunpack.c.l.b16 %v3323
    %v4099 = vunpack.c.l.b16 %v3324
    %v4100 = vunpack.c.l.b16 %v3325
    %v4101 = vunpack.c.l.b16 %v3326
    %v4102 = vunpack.c.l.b16 %v3327
    %v4103 = vunpack.c.l.b16 %v3328
    %v4104 = vunpack.c.l.b16 %v3329
    %v4105 = vunpack.c.l.b16 %v3330
    %v4106 = vunpack.c.l.b16 %v3331
    %v4107 = vunpack.c.l.b16 %v3332
    %v4108 = vunpack.c.l.b16 %v3333
    %v4109 = vunpack.c.l.b16 %v3334
    %v4110 = vunpack.c.l.b16 %v3335
    %v4111 = vunpack.c.l.b16 %v3336
    %v4112 = vunpack.c.l.b16 %v3337
    %v4113 = vunpack.c.l.b16 %v3338
    %v4114 = vunpack.c.l.b16 %v3339
    %v4115 = vunpack.c.l.b16 %v3340
    %v4116 = vunpack.c.l.b16 %v3341
    %v4117 = vunpack.c.l.b16 %v3342
    %v4118 = vunpack.c.l.b16 %v3343
    %v4119 = vunpack.c.l.b16 %v3344
    %v4120 = vunpack.c.l.b16 %v3345
    %v4121 = vunpack.c.l.b16 %v3346
    %v4122 = vunpack.c.l.b16 %v3347
    %v4123 = vunpack.c.l.b16 %v3348
    %v4124 = vpack.c.b16 %v3741, %v3740
    %v4125 = vpack.c.b16 %v3743, %v3742
    %v4126 = vpack.c.b16 %v3745, %v3744
    %v4127 = vpack.c.b16 %v3747, %v3746
    %v4128 = vpack.c.b16 %v3749, %v3748
    %v4129 = vpack.c.b16 %v3751, %v3750
    %v4130 = vpack.c.b16 %v3753, %v3752
    %v4131 = vpack.c.b16 %v3755, %v3754
    %v4132 = vpack.c.b16 %v3757, %v3756
    %v4133 = vpack.c.b16 %v3759, %v3758
    %v4134 = vpack.c.b16 %v3761, %v3760
    %v4135 = vpack.c.b16 %v3763, %v3762
    %v4136 = vpack.c.b16 %v3765, %v3764
    %v4137 = vpack.c.b16 %v3767, %v3766
    %v4138 = vpack.c.b16 %v3769, %v3768
    %v4139 = vpack.c.b16 %v3771, %v3770
    %v4140 = vpack.c.b16 %v3773, %v3772
    %v4141 = vpack.c.b16 %v3775, %v3774
    %v4142 = vpack.c.b16 %v3777, %v3776
    %v4143 = vpack.c.b16 %v3779, %v3778
    %v4144 = vpack.c.b16 %v3781, %v3780
    %v4145 = vpack.c.b16 %v3783, %v3782
    %v4146 = vpack.c.b16 %v3785, %v3784
    %v4147 = vpack.c.b16 %v3787, %v3786
    %v4148 = vpack.c.b16 %v3789, %v3788
    %v4149 = vpack.c.b16 %v3791, %v3790
    %v4150 = vpack.c.b16 %v3793, %v3792
    %v4151 = vpack.c.b16 %v3795, %v3794
    %v4152 = vpack.c.b16 %v3797, %v3796
    %v4153 = vpack.c.b16 %v3799, %v3798
    %v4154 = vpack.c.b16 %v3801, %v3800
    %v4155 = vpack.c.b16 %v3803, %v3802
    %v4156 = vpack.c.b16 %v3805, %v3804
    %v4157 = vpack.c.b16 %v3807, %v3806
    %v4158 = vpack.c.b16 %v3809, %v3808
    %v4159 = vpack.c.b16 %v3811, %v3810
    %v4160 = vpack.c.b16 %v3813, %v3812
    %v4161 = vpack.c.b16 %v3815, %v3814
    %v4162 = vpack.c.b16 %v3817, %v3816
    %v4163 = vpack.c.b16 %v3819, %v3818
    %v4164 = vpack.c.b16 %v3821, %v3820
    %v4165 = vpack.c.b16 %v3823, %v3822
    %v4166 = vpack.c.b16 %v3825, %v3824
    %v4167 = vpack.c.b16 %v3827, %v3826
    %v4168 = vpack.c.b16 %v3829, %v3828
    %v4169 = vpack.c.b16 %v3831, %v3830
    %v4170 = vpack.c.b16 %v3833, %v3832
    %v4171 = vpack.c.b16 %v3835, %v3834
    %v4172 = vpack.c.b16 %v3837, %v3836
    %v4173 = vpack.c.b16 %v3839, %v3838
    %v4174 = vpack.c.b16 %v3841, %v3840
    %v4175 = vpack.c.b16 %v3843, %v3842
    %v4176 = vpack.c.b16 %v3845, %v3844
    %v4177 = vpack.c.b16 %v3847, %v3846
    %v4178 = vpack.c.b16 %v3849, %v3848
    %v4179 = vpack.c.b16 %v3851, %v3850
    %v4180 = vpack.c.b16 %v3853, %v3852
    %v4181 = vpack.c.b16 %v3855, %v3854
    %v4182 = vpack.c.b16 %v3857, %v3856
    %v4183 = vpack.c.b16 %v3859, %v3858
    %v4184 = vpack.c.b16 %v3861, %v3860
    %v4185 = vpack.c.b16 %v3863, %v3862
    %v4186 = vpack.c.b16 %v3865, %v3864
    %v4187 = vpack.c.b16 %v3867, %v3866
    %v4188 = vpack.c.b16 %v3869, %v3868
    %v4189 = vpack.c.b16 %v3871, %v3870
    %v4190 = vpack.c.b16 %v3873, %v3872
    %v4191 = vpack.c.b16 %v3875, %v3874
    %v4192 = vpack.c.b16 %v3877, %v3876
    %v4193 = vpack.c.b16 %v3879, %v3878
    %v4194 = vpack.c.b16 %v3881, %v3880
    %v4195 = vpack.c.b16 %v3883, %v3882
    %v4196 = vpack.c.b16 %v3885, %v3884
    %v4197 = vpack.c.b16 %v3887, %v3886
    %v4198 = vpack.c.b16 %v3889, %v3888
    %v4199 = vpack.c.b16 %v3891, %v3890
    %v4200 = vpack.c.b16 %v3893, %v3892
    %v4201 = vpack.c.b16 %v3895, %v3894
    %v4202 = vpack.c.b16 %v3897, %v3896
    %v4203 = vpack.c.b16 %v3899, %v3898
    %v4204 = vpack.c.b16 %v3901, %v3900
    %v4205 = vpack.c.b16 %v3903, %v3902
    %v4206 = vpack.c.b16 %v3905, %v3904
    %v4207 = vpack.c.b16 %v3907, %v3906
    %v4208 = vpack.c.b16 %v3909, %v3908
    %v4209 = vpack.c.b16 %v3911, %v3910
    %v4210 = vpack.c.b16 %v3913, %v3912
    %v4211 = vpack.c.b16 %v3915, %v3914
    %v4212 = vpack.c.b16 %v3917, %v3916
    %v4213 = vpack.c.b16 %v3919, %v3918
    %v4214 = vpack.c.b16 %v3921, %v3920
    %v4215 = vpack.c.b16 %v3923, %v3922
    %v4216 = vpack.c.b16 %v3925, %v3924
    %v4217 = vpack.c.b16 %v3927, %v3926
    %v4218 = vpack.c.b16 %v3929, %v3928
    %v4219 = vpack.c.b16 %v3931, %v3930
    %v4220 = vpack.c.b16 %v3933, %v3932
    %v4221 = vpack.c.b16 %v3935, %v3934
    %v4222 = vpack.c.b16 %v3937, %v3936
    %v4223 = vpack.c.b16 %v3939, %v3938
    %v4224 = vpack.c.b16 %v3941, %v3940
    %v4225 = vpack.c.b16 %v3943, %v3942
    %v4226 = vpack.c.b16 %v3945, %v3944
    %v4227 = vpack.c.b16 %v3947, %v3946
    %v4228 = vpack.c.b16 %v3949, %v3948
    %v4229 = vpack.c.b16 %v3951, %v3950
    %v4230 = vpack.c.b16 %v3953, %v3952
    %v4231 = vpack.c.b16 %v3955, %v3954
    %v4232 = vpack.c.b16 %v3957, %v3956
    %v4233 = vpack.c.b16 %v3959, %v3958
    %v4234 = vpack.c.b16 %v3961, %v3960
    %v4235 = vpack.c.b16 %v3963, %v3962
    %v4236 = vpack.c.b16 %v3965, %v3964
    %v4237 = vpack.c.b16 %v3967, %v3966
    %v4238 = vpack.c.b16 %v3969, %v3968
    %v4239 = vpack.c.b16 %v3971, %v3970
    %v4240 = vpack.c.b16 %v3973, %v3972
    %v4241 = vpack.c.b16 %v3975, %v3974
    %v4242 = vpack.c.b16 %v3977, %v3976
    %v4243 = vpack.c.b16 %v3979, %v3978
    %v4244 = vpack.c.b16 %v3981, %v3980
    %v4245 = vpack.c.b16 %v3983, %v3982
    %v4246 = vpack.c.b16 %v3985, %v3984
    %v4247 = vpack.c.b16 %v3987, %v3986
    %v4248 = vpack.c.b16 %v3989, %v3988
    %v4249 = vpack.c.b16 %v3991, %v3990
    %v4250 = vpack.c.b16 %v3993, %v3992
    %v4251 = vpack.c.b16 %v3995, %v3994
    %v4252 = vpack.c.b16 %v3997, %v3996
    %v4253 = vpack.c.b16 %v3999, %v3998
    %v4254 = vpack.c.b16 %v4001, %v4000
    %v4255 = vpack.c.b16 %v4003, %v4002
    %v4256 = vpack.c.b16 %v4005, %v4004
    %v4257 = vpack.c.b16 %v4007, %v4006
    %v4258 = vpack.c.b16 %v4009, %v4008
    %v4259 = vpack.c.b16 %v4011, %v4010
    %v4260 = vpack.c.b16 %v4013, %v4012
    %v4261 = vpack.c.b16 %v4015, %v4014
    %v4262 = vpack.c.b16 %v4017, %v4016
    %v4263 = vpack.c.b16 %v4019, %v4018
    %v4264 = vpack.c.b16 %v4021, %v4020
    %v4265 = vpack.c.b16 %v4023, %v4022
    %v4266 = vpack.c.b16 %v4025, %v4024
    %v4267 = vpack.c.b16 %v4027, %v4026
    %v4268 = vpack.c.b16 %v4029, %v4028
    %v4269 = vpack.c.b16 %v4031, %v4030
    %v4270 = vpack.c.b16 %v4033, %v4032
    %v4271 = vpack.c.b16 %v4035, %v4034
    %v4272 = vpack.c.b16 %v4037, %v4036
    %v4273 = vpack.c.b16 %v4039, %v4038
    %v4274 = vpack.c.b16 %v4041, %v4040
    %v4275 = vpack.c.b16 %v4043, %v4042
    %v4276 = vpack.c.b16 %v4045, %v4044
    %v4277 = vpack.c.b16 %v4047, %v4046
    %v4278 = vpack.c.b16 %v4049, %v4048
    %v4279 = vpack.c.b16 %v4051, %v4050
    %v4280 = vpack.c.b16 %v4053, %v4052
    %v4281 = vpack.c.b16 %v4055, %v4054
    %v4282 = vpack.c.b16 %v4057, %v4056
    %v4283 = vpack.c.b16 %v4059, %v4058
    %v4284 = vpack.c.b16 %v4061, %v4060
    %v4285 = vpack.c.b16 %v4063, %v4062
    %v4286 = vpack.c.b16 %v4065, %v4064
    %v4287 = vpack.c.b16 %v4067, %v4066
    %v4288 = vpack.c.b16 %v4069, %v4068
    %v4289 = vpack.c.b16 %v4071, %v4070
    %v4290 = vpack.c.b16 %v4073, %v4072
    %v4291 = vpack.c.b16 %v4075, %v4074
    %v4292 = vpack.c.b16 %v4077, %v4076
    %v4293 = vpack.c.b16 %v4079, %v4078
    %v4294 = vpack.c.b16 %v4081, %v4080
    %v4295 = vpack.c.b16 %v4083, %v4082
    %v4296 = vpack.c.b16 %v4085, %v4084
    %v4297 = vpack.c.b16 %v4087, %v4086
    %v4298 = vpack.c.b16 %v4089, %v4088
    %v4299 = vpack.c.b16 %v4091, %v4090
    %v4300 = vpack.c.b16 %v4093, %v4092
    %v4301 = vpack.c.b16 %v4095, %v4094
    %v4302 = vpack.c.b16 %v4097, %v4096
    %v4303 = vpack.c.b16 %v4099, %v4098
    %v4304 = vpack.c.b16 %v4101, %v4100
    %v4305 = vpack.c.b16 %v4103, %v4102
    %v4306 = vpack.c.b16 %v4105, %v4104
    %v4307 = vpack.c.b16 %v4107, %v4106
    %v4308 = vpack.c.b16 %v4109, %v4108
    %v4309 = vpack.c.b16 %v4111, %v4110
    %v4310 = vpack.c.b16 %v4113, %v4112
    %v4311 = vpack.c.b16 %v4115, %v4114
    %v4312 = vpack.c.b16 %v4117, %v4116
    %v4313 = vpack.c.b16 %v4119, %v4118
    %v4314 = vpack.c.b16 %v4121, %v4120
    %v4315 = vpack.c.b16 %v4123, %v4122
    %4508 = vmatprep.subr.bf16.mxu0 0
    %4509 = vmatpush1.bf16.msra.mxu0 %v4124
    %4510 = vmatprep.subr.bf16.mxu0 0
    %4511 = vmatpush1.bf16.msra.mxu0 %v4125
    %4512 = vmatprep.subr.bf16.mxu0 0
    %4513 = vmatpush1.bf16.msra.mxu0 %v4126
    %4514 = vmatprep.subr.bf16.mxu0 0
    %4515 = vmatpush1.bf16.msra.mxu0 %v4127
    %4516 = vmatprep.subr.bf16.mxu0 0
    %4517 = vmatpush1.bf16.msra.mxu0 %v4128
    %4518 = vmatprep.subr.bf16.mxu0 0
    %4519 = vmatpush1.bf16.msra.mxu0 %v4129
    %4520 = vmatprep.subr.bf16.mxu0 0
    %4521 = vmatpush1.bf16.msra.mxu0 %v4130
    %4522 = vmatprep.subr.bf16.mxu0 0
    %4523 = vmatpush1.bf16.msra.mxu0 %v4131
    %4524 = vmatprep.subr.bf16.mxu0 0
    %4525 = vmatpush1.bf16.msra.mxu0 %v4132
    %4526 = vmatprep.subr.bf16.mxu0 0
    %4527 = vmatpush1.bf16.msra.mxu0 %v4133
    %4528 = vmatprep.subr.bf16.mxu0 0
    %4529 = vmatpush1.bf16.msra.mxu0 %v4134
    %4530 = vmatprep.subr.bf16.mxu0 0
    %4531 = vmatpush1.bf16.msra.mxu0 %v4135
    %4532 = vmatprep.subr.bf16.mxu0 0
    %4533 = vmatpush1.bf16.msra.mxu0 %v4136
    %4534 = vmatprep.subr.bf16.mxu0 0
    %4535 = vmatpush1.bf16.msra.mxu0 %v4137
    %4536 = vmatprep.subr.bf16.mxu0 0
    %4537 = vmatpush1.bf16.msra.mxu0 %v4138
    %4538 = vmatprep.subr.bf16.mxu0 0
    %4539 = vmatpush1.bf16.msra.mxu0 %v4139
    %4540 = vmatprep.mubr.bf16.mxu0 %v2942
    %4541 = vmatmul.mubr.bf16.gmra.mrb[0].mxu0 %v2941
    %v4542 = vpop.f32.mrb[0].mxu0
    %v4543 = vadd.f32 %v3354, %v4542
    %v4544 = vpop.f32.mrb[0].mxu0
    %v4545 = vpop.f32.mrb[0].mxu0
    %v4546 = vadd.f32 %v3354, %v4545
    %v4547 = vpop.f32.mrb[0].mxu0
    %4548 = vdwg.mxu0
    %4549 = vmatprep.subr.bf16.mxu0 0
    %4550 = vmatpush1.bf16.msra.mxu0 %v4140
    %4551 = vmatprep.subr.bf16.mxu0 0
    %4552 = vmatpush1.bf16.msra.mxu0 %v4141
    %4553 = vmatprep.subr.bf16.mxu0 0
    %4554 = vmatpush1.bf16.msra.mxu0 %v4142
    %4555 = vmatprep.subr.bf16.mxu0 0
    %4556 = vmatpush1.bf16.msra.mxu0 %v4143
    %4557 = vmatprep.subr.bf16.mxu0 0
    %4558 = vmatpush1.bf16.msra.mxu0 %v4144
    %4559 = vmatprep.subr.bf16.mxu0 0
    %4560 = vmatpush1.bf16.msra.mxu0 %v4145
    %4561 = vmatprep.subr.bf16.mxu0 0
    %4562 = vmatpush1.bf16.msra.mxu0 %v4146
    %4563 = vmatprep.subr.bf16.mxu0 0
    %4564 = vmatpush1.bf16.msra.mxu0 %v4147
    %4565 = vmatprep.subr.bf16.mxu0 0
    %4566 = vmatpush1.bf16.msra.mxu0 %v4148
    %4567 = vmatprep.subr.bf16.mxu0 0
    %4568 = vmatpush1.bf16.msra.mxu0 %v4149
    %4569 = vmatprep.subr.bf16.mxu0 0
    %4570 = vmatpush1.bf16.msra.mxu0 %v4150
    %4571 = vmatprep.subr.bf16.mxu0 0
    %4572 = vmatpush1.bf16.msra.mxu0 %v4151
    %4573 = vmatprep.subr.bf16.mxu0 0
    %4574 = vmatpush1.bf16.msra.mxu0 %v4152
    %4575 = vmatprep.subr.bf16.mxu0 0
    %4576 = vmatpush1.bf16.msra.mxu0 %v4153
    %4577 = vmatprep.subr.bf16.mxu0 0
    %4578 = vmatpush1.bf16.msra.mxu0 %v4154
    %4579 = vmatprep.subr.bf16.mxu0 0
    %4580 = vmatpush1.bf16.msra.mxu0 %v4155
    %4581 = vmatprep.mubr.bf16.mxu0 %v2944
    %4582 = vmatmul.mubr.bf16.gmra.mrb[0].mxu0 %v2943
    %v4583 = vpop.f32.mrb[0].mxu0
    %v4584 = vadd.f32 %v4543, %v4583
    %v4585 = vpop.f32.mrb[0].mxu0
    %v4586 = vpop.f32.mrb[0].mxu0
    %v4587 = vadd.f32 %v4546, %v4586
    %v4588 = vpop.f32.mrb[0].mxu0
    %4589 = vdwg.mxu0
    %4590 = vmatprep.subr.bf16.mxu0 0
    %4591 = vmatpush1.bf16.msra.mxu0 %v4156
    %4592 = vmatprep.subr.bf16.mxu0 0
    %4593 = vmatpush1.bf16.msra.mxu0 %v4157
    %4594 = vmatprep.subr.bf16.mxu0 0
    %4595 = vmatpush1.bf16.msra.mxu0 %v4158
    %4596 = vmatprep.subr.bf16.mxu0 0
    %4597 = vmatpush1.bf16.msra.mxu0 %v4159
    %4598 = vmatprep.subr.bf16.mxu0 0
    %4599 = vmatpush1.bf16.msra.mxu0 %v4160
    %4600 = vmatprep.subr.bf16.mxu0 0
    %4601 = vmatpush1.bf16.msra.mxu0 %v4161
    %4602 = vmatprep.subr.bf16.mxu0 0
    %4603 = vmatpush1.bf16.msra.mxu0 %v4162
    %4604 = vmatprep.subr.bf16.mxu0 0
    %4605 = vmatpush1.bf16.msra.mxu0 %v4163
    %4606 = vmatprep.subr.bf16.mxu0 0
    %4607 = vmatpush1.bf16.msra.mxu0 %v4164
    %4608 = vmatprep.subr.bf16.mxu0 0
    %4609 = vmatpush1.bf16.msra.mxu0 %v4165
    %4610 = vmatprep.subr.bf16.mxu0 0
    %4611 = vmatpush1.bf16.msra.mxu0 %v4166
    %4612 = vmatprep.subr.bf16.mxu0 0
    %4613 = vmatpush1.bf16.msra.mxu0 %v4167
    %4614 = vmatprep.subr.bf16.mxu0 0
    %4615 = vmatpush1.bf16.msra.mxu0 %v4168
    %4616 = vmatprep.subr.bf16.mxu0 0
    %4617 = vmatpush1.bf16.msra.mxu0 %v4169
    %4618 = vmatprep.subr.bf16.mxu0 0
    %4619 = vmatpush1.bf16.msra.mxu0 %v4170
    %4620 = vmatprep.subr.bf16.mxu0 0
    %4621 = vmatpush1.bf16.msra.mxu0 %v4171
    %4622 = vmatprep.mubr.bf16.mxu0 %v2946
    %4623 = vmatmul.mubr.bf16.gmra.mrb[0].mxu0 %v2945
    %v4624 = vpop.f32.mrb[0].mxu0
    %v4625 = vadd.f32 %v4584, %v4624
    %v4626 = vpop.f32.mrb[0].mxu0
    %v4627 = vpop.f32.mrb[0].mxu0
    %v4628 = vadd.f32 %v4587, %v4627
    %v4629 = vpop.f32.mrb[0].mxu0
    %4630 = vdwg.mxu0
    %4631 = vmatprep.subr.bf16.mxu0 0
    %4632 = vmatpush1.bf16.msra.mxu0 %v4172
    %4633 = vmatprep.subr.bf16.mxu0 0
    %4634 = vmatpush1.bf16.msra.mxu0 %v4173
    %4635 = vmatprep.subr.bf16.mxu0 0
    %4636 = vmatpush1.bf16.msra.mxu0 %v4174
    %4637 = vmatprep.subr.bf16.mxu0 0
    %4638 = vmatpush1.bf16.msra.mxu0 %v4175
    %4639 = vmatprep.subr.bf16.mxu0 0
    %4640 = vmatpush1.bf16.msra.mxu0 %v4176
    %4641 = vmatprep.subr.bf16.mxu0 0
    %4642 = vmatpush1.bf16.msra.mxu0 %v4177
    %4643 = vmatprep.subr.bf16.mxu0 0
    %4644 = vmatpush1.bf16.msra.mxu0 %v4178
    %4645 = vmatprep.subr.bf16.mxu0 0
    %4646 = vmatpush1.bf16.msra.mxu0 %v4179
    %4647 = vmatprep.subr.bf16.mxu0 0
    %4648 = vmatpush1.bf16.msra.mxu0 %v4180
    %4649 = vmatprep.subr.bf16.mxu0 0
    %4650 = vmatpush1.bf16.msra.mxu0 %v4181
    %4651 = vmatprep.subr.bf16.mxu0 0
    %4652 = vmatpush1.bf16.msra.mxu0 %v4182
    %4653 = vmatprep.subr.bf16.mxu0 0
    %4654 = vmatpush1.bf16.msra.mxu0 %v4183
    %4655 = vmatprep.subr.bf16.mxu0 0
    %4656 = vmatpush1.bf16.msra.mxu0 %v4184
    %4657 = vmatprep.subr.bf16.mxu0 0
    %4658 = vmatpush1.bf16.msra.mxu0 %v4185
    %4659 = vmatprep.subr.bf16.mxu0 0
    %4660 = vmatpush1.bf16.msra.mxu0 %v4186
    %4661 = vmatprep.subr.bf16.mxu0 0
    %4662 = vmatpush1.bf16.msra.mxu0 %v4187
    %4663 = vmatprep.mubr.bf16.mxu0 %v2948
    %4664 = vmatmul.mubr.bf16.gmra.mrb[0].mxu0 %v2947
    %v4665 = vpop.f32.mrb[0].mxu0
    %v4666 = vadd.f32 %v4625, %v4665
    %v4667 = vpop.f32.mrb[0].mxu0
    %v4668 = vpop.f32.mrb[0].mxu0
    %v4669 = vadd.f32 %v4628, %v4668
    %v4670 = vpop.f32.mrb[0].mxu0
    %4671 = vdwg.mxu0
    %4672 = vmatprep.subr.bf16.mxu0 0
    %4673 = vmatpush1.bf16.msra.mxu0 %v4188
    %4674 = vmatprep.subr.bf16.mxu0 0
    %4675 = vmatpush1.bf16.msra.mxu0 %v4189
    %4676 = vmatprep.subr.bf16.mxu0 0
    %4677 = vmatpush1.bf16.msra.mxu0 %v4190
    %4678 = vmatprep.subr.bf16.mxu0 0
    %4679 = vmatpush1.bf16.msra.mxu0 %v4191
    %4680 = vmatprep.subr.bf16.mxu0 0
    %4681 = vmatpush1.bf16.msra.mxu0 %v4192
    %4682 = vmatprep.subr.bf16.mxu0 0
    %4683 = vmatpush1.bf16.msra.mxu0 %v4193
    %4684 = vmatprep.subr.bf16.mxu0 0
    %4685 = vmatpush1.bf16.msra.mxu0 %v4194
    %4686 = vmatprep.subr.bf16.mxu0 0
    %4687 = vmatpush1.bf16.msra.mxu0 %v4195
    %4688 = vmatprep.subr.bf16.mxu0 0
    %4689 = vmatpush1.bf16.msra.mxu0 %v4196
    %4690 = vmatprep.subr.bf16.mxu0 0
    %4691 = vmatpush1.bf16.msra.mxu0 %v4197
    %4692 = vmatprep.subr.bf16.mxu0 0
    %4693 = vmatpush1.bf16.msra.mxu0 %v4198
    %4694 = vmatprep.subr.bf16.mxu0 0
    %4695 = vmatpush1.bf16.msra.mxu0 %v4199
    %4696 = vmatprep.subr.bf16.mxu0 0
    %4697 = vmatpush1.bf16.msra.mxu0 %v4200
    %4698 = vmatprep.subr.bf16.mxu0 0
    %4699 = vmatpush1.bf16.msra.mxu0 %v4201
    %4700 = vmatprep.subr.bf16.mxu0 0
    %4701 = vmatpush1.bf16.msra.mxu0 %v4202
    %4702 = vmatprep.subr.bf16.mxu0 0
    %4703 = vmatpush1.bf16.msra.mxu0 %v4203
    %4704 = vmatprep.mubr.bf16.mxu0 %v2950
    %4705 = vmatmul.mubr.bf16.gmra.mrb[0].mxu0 %v2949
    %v4706 = vpop.f32.mrb[0].mxu0
    %v4707 = vadd.f32 %v4666, %v4706
    %v4708 = vpop.f32.mrb[0].mxu0
    %v4709 = vpop.f32.mrb[0].mxu0
    %v4710 = vadd.f32 %v4669, %v4709
    %v4711 = vpop.f32.mrb[0].mxu0
    %4712 = vdwg.mxu0
    %4713 = vmatprep.subr.bf16.mxu0 0
    %4714 = vmatpush1.bf16.msra.mxu0 %v4204
    %4715 = vmatprep.subr.bf16.mxu0 0
    %4716 = vmatpush1.bf16.msra.mxu0 %v4205
    %4717 = vmatprep.subr.bf16.mxu0 0
    %4718 = vmatpush1.bf16.msra.mxu0 %v4206
    %4719 = vmatprep.subr.bf16.mxu0 0
    %4720 = vmatpush1.bf16.msra.mxu0 %v4207
    %4721 = vmatprep.subr.bf16.mxu0 0
    %4722 = vmatpush1.bf16.msra.mxu0 %v4208
    %4723 = vmatprep.subr.bf16.mxu0 0
    %4724 = vmatpush1.bf16.msra.mxu0 %v4209
    %4725 = vmatprep.subr.bf16.mxu0 0
    %4726 = vmatpush1.bf16.msra.mxu0 %v4210
    %4727 = vmatprep.subr.bf16.mxu0 0
    %4728 = vmatpush1.bf16.msra.mxu0 %v4211
    %4729 = vmatprep.subr.bf16.mxu0 0
    %4730 = vmatpush1.bf16.msra.mxu0 %v4212
    %4731 = vmatprep.subr.bf16.mxu0 0
    %4732 = vmatpush1.bf16.msra.mxu0 %v4213
    %4733 = vmatprep.subr.bf16.mxu0 0
    %4734 = vmatpush1.bf16.msra.mxu0 %v4214
    %4735 = vmatprep.subr.bf16.mxu0 0
    %4736 = vmatpush1.bf16.msra.mxu0 %v4215
    %4737 = vmatprep.subr.bf16.mxu0 0
    %4738 = vmatpush1.bf16.msra.mxu0 %v4216
    %4739 = vmatprep.subr.bf16.mxu0 0
    %4740 = vmatpush1.bf16.msra.mxu0 %v4217
    %4741 = vmatprep.subr.bf16.mxu0 0
    %4742 = vmatpush1.bf16.msra.mxu0 %v4218
    %4743 = vmatprep.subr.bf16.mxu0 0
    %4744 = vmatpush1.bf16.msra.mxu0 %v4219
    %4745 = vmatprep.mubr.bf16.mxu0 %v2952
    %4746 = vmatmul.mubr.bf16.gmra.mrb[0].mxu0 %v2951
    %v4747 = vpop.f32.mrb[0].mxu0
    %v4748 = vadd.f32 %v4707, %v4747
    %v4749 = vpop.f32.mrb[0].mxu0
    %v4750 = vpop.f32.mrb[0].mxu0
    %v4751 = vadd.f32 %v4710, %v4750
    %v4752 = vpop.f32.mrb[0].mxu0
    %4753 = vdwg.mxu0
    %4754 = vmatprep.subr.bf16.mxu0 0
    %4755 = vmatpush1.bf16.msra.mxu0 %v4220
    %4756 = vmatprep.subr.bf16.mxu0 0
    %4757 = vmatpush1.bf16.msra.mxu0 %v4221
    %4758 = vmatprep.subr.bf16.mxu0 0
    %4759 = vmatpush1.bf16.msra.mxu0 %v4222
    %4760 = vmatprep.subr.bf16.mxu0 0
    %4761 = vmatpush1.bf16.msra.mxu0 %v4223
    %4762 = vmatprep.subr.bf16.mxu0 0
    %4763 = vmatpush1.bf16.msra.mxu0 %v4224
    %4764 = vmatprep.subr.bf16.mxu0 0
    %4765 = vmatpush1.bf16.msra.mxu0 %v4225
    %4766 = vmatprep.subr.bf16.mxu0 0
    %4767 = vmatpush1.bf16.msra.mxu0 %v4226
    %4768 = vmatprep.subr.bf16.mxu0 0
    %4769 = vmatpush1.bf16.msra.mxu0 %v4227
    %4770 = vmatprep.subr.bf16.mxu0 0
    %4771 = vmatpush1.bf16.msra.mxu0 %v4228
    %4772 = vmatprep.subr.bf16.mxu0 0
    %4773 = vmatpush1.bf16.msra.mxu0 %v4229
    %4774 = vmatprep.subr.bf16.mxu0 0
    %4775 = vmatpush1.bf16.msra.mxu0 %v4230
    %4776 = vmatprep.subr.bf16.mxu0 0
    %4777 = vmatpush1.bf16.msra.mxu0 %v4231
    %4778 = vmatprep.subr.bf16.mxu0 0
    %4779 = vmatpush1.bf16.msra.mxu0 %v4232
    %4780 = vmatprep.subr.bf16.mxu0 0
    %4781 = vmatpush1.bf16.msra.mxu0 %v4233
    %4782 = vmatprep.subr.bf16.mxu0 0
    %4783 = vmatpush1.bf16.msra.mxu0 %v4234
    %4784 = vmatprep.subr.bf16.mxu0 0
    %4785 = vmatpush1.bf16.msra.mxu0 %v4235
    %4786 = vmatprep.mubr.bf16.mxu0 %v2954
    %4787 = vmatmul.mubr.bf16.gmra.mrb[0].mxu0 %v2953
    %v4788 = vpop.f32.mrb[0].mxu0
    %v4789 = vadd.f32 %v4748, %v4788
    %v4790 = vpop.f32.mrb[0].mxu0
    %v4791 = vpop.f32.mrb[0].mxu0
    %v4792 = vadd.f32 %v4751, %v4791
    %v4793 = vpop.f32.mrb[0].mxu0
    %4794 = vdwg.mxu0
    %4795 = vmatprep.subr.bf16.mxu0 0
    %4796 = vmatpush1.bf16.msra.mxu0 %v4236
    %4797 = vmatprep.subr.bf16.mxu0 0
    %4798 = vmatpush1.bf16.msra.mxu0 %v4237
    %4799 = vmatprep.subr.bf16.mxu0 0
    %4800 = vmatpush1.bf16.msra.mxu0 %v4238
    %4801 = vmatprep.subr.bf16.mxu0 0
    %4802 = vmatpush1.bf16.msra.mxu0 %v4239
    %4803 = vmatprep.subr.bf16.mxu0 0
    %4804 = vmatpush1.bf16.msra.mxu0 %v4240
    %4805 = vmatprep.subr.bf16.mxu0 0
    %4806 = vmatpush1.bf16.msra.mxu0 %v4241
    %4807 = vmatprep.subr.bf16.mxu0 0
    %4808 = vmatpush1.bf16.msra.mxu0 %v4242
    %4809 = vmatprep.subr.bf16.mxu0 0
    %4810 = vmatpush1.bf16.msra.mxu0 %v4243
    %4811 = vmatprep.subr.bf16.mxu0 0
    %4812 = vmatpush1.bf16.msra.mxu0 %v4244
    %4813 = vmatprep.subr.bf16.mxu0 0
    %4814 = vmatpush1.bf16.msra.mxu0 %v4245
    %4815 = vmatprep.subr.bf16.mxu0 0
    %4816 = vmatpush1.bf16.msra.mxu0 %v4246
    %4817 = vmatprep.subr.bf16.mxu0 0
    %4818 = vmatpush1.bf16.msra.mxu0 %v4247
    %4819 = vmatprep.subr.bf16.mxu0 0
    %4820 = vmatpush1.bf16.msra.mxu0 %v4248
    %4821 = vmatprep.subr.bf16.mxu0 0
    %4822 = vmatpush1.bf16.msra.mxu0 %v4249
    %4823 = vmatprep.subr.bf16.mxu0 0
    %4824 = vmatpush1.bf16.msra.mxu0 %v4250
    %4825 = vmatprep.subr.bf16.mxu0 0
    %4826 = vmatpush1.bf16.msra.mxu0 %v4251
    %4827 = vmatprep.mubr.bf16.mxu0 %v2956
    %4828 = vmatmul.mubr.bf16.gmra.mrb[0].mxu0 %v2955
    %v4829 = vpop.f32.mrb[0].mxu0
    %v4830 = vadd.f32 %v4789, %v4829
    %v4831 = vpop.f32.mrb[0].mxu0
    %v4832 = vpop.f32.mrb[0].mxu0
    %v4833 = vadd.f32 %v4792, %v4832
    %v4834 = vpop.f32.mrb[0].mxu0
    %4835 = vdwg.mxu0
    %4836 = vmatprep.subr.bf16.mxu0 0
    %4837 = vmatpush1.bf16.msra.mxu0 %v4252
    %4838 = vmatprep.subr.bf16.mxu0 0
    %4839 = vmatpush1.bf16.msra.mxu0 %v4253
    %4840 = vmatprep.subr.bf16.mxu0 0
    %4841 = vmatpush1.bf16.msra.mxu0 %v4254
    %4842 = vmatprep.subr.bf16.mxu0 0
    %4843 = vmatpush1.bf16.msra.mxu0 %v4255
    %4844 = vmatprep.subr.bf16.mxu0 0
    %4845 = vmatpush1.bf16.msra.mxu0 %v4256
    %4846 = vmatprep.subr.bf16.mxu0 0
    %4847 = vmatpush1.bf16.msra.mxu0 %v4257
    %4848 = vmatprep.subr.bf16.mxu0 0
    %4849 = vmatpush1.bf16.msra.mxu0 %v4258
    %4850 = vmatprep.subr.bf16.mxu0 0
    %4851 = vmatpush1.bf16.msra.mxu0 %v4259
    %4852 = vmatprep.subr.bf16.mxu0 0
    %4853 = vmatpush1.bf16.msra.mxu0 %v4260
    %4854 = vmatprep.subr.bf16.mxu0 0
    %4855 = vmatpush1.bf16.msra.mxu0 %v4261
    %4856 = vmatprep.subr.bf16.mxu0 0
    %4857 = vmatpush1.bf16.msra.mxu0 %v4262
    %4858 = vmatprep.subr.bf16.mxu0 0
    %4859 = vmatpush1.bf16.msra.mxu0 %v4263
    %4860 = vmatprep.subr.bf16.mxu0 0
    %4861 = vmatpush1.bf16.msra.mxu0 %v4264
    %4862 = vmatprep.subr.bf16.mxu0 0
    %4863 = vmatpush1.bf16.msra.mxu0 %v4265
    %4864 = vmatprep.subr.bf16.mxu0 0
    %4865 = vmatpush1.bf16.msra.mxu0 %v4266
    %4866 = vmatprep.subr.bf16.mxu0 0
    %4867 = vmatpush1.bf16.msra.mxu0 %v4267
    %4868 = vmatprep.mubr.bf16.mxu0 %v2958
    %4869 = vmatmul.mubr.bf16.gmra.mrb[0].mxu0 %v2957
    %v4870 = vpop.f32.mrb[0].mxu0
    %v4871 = vadd.f32 %v4830, %v4870
    %v4872 = vpop.f32.mrb[0].mxu0
    %v4873 = vpop.f32.mrb[0].mxu0
    %v4874 = vadd.f32 %v4833, %v4873
    %v4875 = vpop.f32.mrb[0].mxu0
    %4876 = vdwg.mxu0
    %4877 = vmatprep.subr.bf16.mxu0 0
    %4878 = vmatpush1.bf16.msra.mxu0 %v4268
    %4879 = vmatprep.subr.bf16.mxu0 0
    %4880 = vmatpush1.bf16.msra.mxu0 %v4269
    %4881 = vmatprep.subr.bf16.mxu0 0
    %4882 = vmatpush1.bf16.msra.mxu0 %v4270
    %4883 = vmatprep.subr.bf16.mxu0 0
    %4884 = vmatpush1.bf16.msra.mxu0 %v4271
    %4885 = vmatprep.subr.bf16.mxu0 0
    %4886 = vmatpush1.bf16.msra.mxu0 %v4272
    %4887 = vmatprep.subr.bf16.mxu0 0
    %4888 = vmatpush1.bf16.msra.mxu0 %v4273
    %4889 = vmatprep.subr.bf16.mxu0 0
    %4890 = vmatpush1.bf16.msra.mxu0 %v4274
    %4891 = vmatprep.subr.bf16.mxu0 0
    %4892 = vmatpush1.bf16.msra.mxu0 %v4275
    %4893 = vmatprep.subr.bf16.mxu0 0
    %4894 = vmatpush1.bf16.msra.mxu0 %v4276
    %4895 = vmatprep.subr.bf16.mxu0 0
    %4896 = vmatpush1.bf16.msra.mxu0 %v4277
    %4897 = vmatprep.subr.bf16.mxu0 0
    %4898 = vmatpush1.bf16.msra.mxu0 %v4278
    %4899 = vmatprep.subr.bf16.mxu0 0
    %4900 = vmatpush1.bf16.msra.mxu0 %v4279
    %4901 = vmatprep.subr.bf16.mxu0 0
    %4902 = vmatpush1.bf16.msra.mxu0 %v4280
    %4903 = vmatprep.subr.bf16.mxu0 0
    %4904 = vmatpush1.bf16.msra.mxu0 %v4281
    %4905 = vmatprep.subr.bf16.mxu0 0
    %4906 = vmatpush1.bf16.msra.mxu0 %v4282
    %4907 = vmatprep.subr.bf16.mxu0 0
    %4908 = vmatpush1.bf16.msra.mxu0 %v4283
    %4909 = vmatprep.mubr.bf16.mxu0 %v2960
    %4910 = vmatmul.mubr.bf16.gmra.mrb[0].mxu0 %v2959
    %v4911 = vpop.f32.mrb[0].mxu0
    %v4912 = vadd.f32 %v4871, %v4911
    %v4913 = vpop.f32.mrb[0].mxu0
    %v4914 = vpop.f32.mrb[0].mxu0
    %v4915 = vadd.f32 %v4874, %v4914
    %v4916 = vpop.f32.mrb[0].mxu0
    %4917 = vdwg.mxu0
    %4918 = vmatprep.subr.bf16.mxu0 0
    %4919 = vmatpush1.bf16.msra.mxu0 %v4284
    %4920 = vmatprep.subr.bf16.mxu0 0
    %4921 = vmatpush1.bf16.msra.mxu0 %v4285
    %4922 = vmatprep.subr.bf16.mxu0 0
    %4923 = vmatpush1.bf16.msra.mxu0 %v4286
    %4924 = vmatprep.subr.bf16.mxu0 0
    %4925 = vmatpush1.bf16.msra.mxu0 %v4287
    %4926 = vmatprep.subr.bf16.mxu0 0
    %4927 = vmatpush1.bf16.msra.mxu0 %v4288
    %4928 = vmatprep.subr.bf16.mxu0 0
    %4929 = vmatpush1.bf16.msra.mxu0 %v4289
    %4930 = vmatprep.subr.bf16.mxu0 0
    %4931 = vmatpush1.bf16.msra.mxu0 %v4290
    %4932 = vmatprep.subr.bf16.mxu0 0
    %4933 = vmatpush1.bf16.msra.mxu0 %v4291
    %4934 = vmatprep.subr.bf16.mxu0 0
    %4935 = vmatpush1.bf16.msra.mxu0 %v4292
    %4936 = vmatprep.subr.bf16.mxu0 0
    %4937 = vmatpush1.bf16.msra.mxu0 %v4293
    %4938 = vmatprep.subr.bf16.mxu0 0
    %4939 = vmatpush1.bf16.msra.mxu0 %v4294
    %4940 = vmatprep.subr.bf16.mxu0 0
    %4941 = vmatpush1.bf16.msra.mxu0 %v4295
    %4942 = vmatprep.subr.bf16.mxu0 0
    %4943 = vmatpush1.bf16.msra.mxu0 %v4296
    %4944 = vmatprep.subr.bf16.mxu0 0
    %4945 = vmatpush1.bf16.msra.mxu0 %v4297
    %4946 = vmatprep.subr.bf16.mxu0 0
    %4947 = vmatpush1.bf16.msra.mxu0 %v4298
    %4948 = vmatprep.subr.bf16.mxu0 0
    %4949 = vmatpush1.bf16.msra.mxu0 %v4299
    %4950 = vmatprep.mubr.bf16.mxu0 %v2962
    %4951 = vmatmul.mubr.bf16.gmra.mrb[0].mxu0 %v2961
    %v4952 = vpop.f32.mrb[0].mxu0
    %v4953 = vadd.f32 %v4912, %v4952
    %v4954 = vpop.f32.mrb[0].mxu0
    %v4955 = vpop.f32.mrb[0].mxu0
    %v4956 = vadd.f32 %v4915, %v4955
    %v4957 = vpop.f32.mrb[0].mxu0
    %4958 = vdwg.mxu0
    %4959 = vmatprep.subr.bf16.mxu0 0
    %4960 = vmatpush1.bf16.msra.mxu0 %v4300
    %4961 = vmatprep.subr.bf16.mxu0 0
    %4962 = vmatpush1.bf16.msra.mxu0 %v4301
    %4963 = vmatprep.subr.bf16.mxu0 0
    %4964 = vmatpush1.bf16.msra.mxu0 %v4302
    %4965 = vmatprep.subr.bf16.mxu0 0
    %4966 = vmatpush1.bf16.msra.mxu0 %v4303
    %4967 = vmatprep.subr.bf16.mxu0 0
    %4968 = vmatpush1.bf16.msra.mxu0 %v4304
    %4969 = vmatprep.subr.bf16.mxu0 0
    %4970 = vmatpush1.bf16.msra.mxu0 %v4305
    %4971 = vmatprep.subr.bf16.mxu0 0
    %4972 = vmatpush1.bf16.msra.mxu0 %v4306
    %4973 = vmatprep.subr.bf16.mxu0 0
    %4974 = vmatpush1.bf16.msra.mxu0 %v4307
    %4975 = vmatprep.subr.bf16.mxu0 0
    %4976 = vmatpush1.bf16.msra.mxu0 %v4308
    %4977 = vmatprep.subr.bf16.mxu0 0
    %4978 = vmatpush1.bf16.msra.mxu0 %v4309
    %4979 = vmatprep.subr.bf16.mxu0 0
    %4980 = vmatpush1.bf16.msra.mxu0 %v4310
    %4981 = vmatprep.subr.bf16.mxu0 0
    %4982 = vmatpush1.bf16.msra.mxu0 %v4311
    %4983 = vmatprep.subr.bf16.mxu0 0
    %4984 = vmatpush1.bf16.msra.mxu0 %v4312
    %4985 = vmatprep.subr.bf16.mxu0 0
    %4986 = vmatpush1.bf16.msra.mxu0 %v4313
    %4987 = vmatprep.subr.bf16.mxu0 0
    %4988 = vmatpush1.bf16.msra.mxu0 %v4314
    %4989 = vmatprep.subr.bf16.mxu0 0
    %4990 = vmatpush1.bf16.msra.mxu0 %v4315
    %4991 = vmatprep.mubr.bf16.mxu0 %v2964
    %4992 = vmatmul.mubr.bf16.gmra.mrb[0].mxu0 %v2963
    %v4993 = vpop.f32.mrb[0].mxu0
    %v4994 = vadd.f32 %v4953, %v4993
    %v4995 = vpop.f32.mrb[0].mxu0
    %v4996 = vpop.f32.mrb[0].mxu0
    %v4997 = vadd.f32 %v4956, %v4996
    %v4998 = vpop.f32.mrb[0].mxu0
    %4999 = vdwg.mxu0
    %v5000 = vadd.f32 %v1433, %v4994
    %v5001 = vadd.f32 %v1434, %v4997
    %5002 = vst.msk [vmem:[#allocation2] sm:$0xff] %vm62, %v5000
    %5003 = vst.msk [vmem:[#allocation2 + $0x8] sm:$0xff] %vm62, %v5001
    // Predicated region
    $region70: #{tpu_custom_call.1} parent=1 // pred_check
      _
    $region71: #{tpu_custom_call.1} parent=1 // pred_check_branch
      %5005 = sbr.rel (0) target = $region73
    $region72: #{tpu_custom_call.1} parent=1 // pred_region
      %s5007 = ssub.s32 256, 256
      %5008 = vsyncadd [#allocation3], %s5007
      %s5009 = sshll.u32 [#allocation2], 4
      %s5010 = int_to_ptr.vmem [resolvable:$true] %s5009
      %5015 = dma.vmem_to_hbm [thread:$0]  %s5010, 256, %s17, [#allocation3], 128, 128, 8
    $region73: #{tpu_custom_call.1} parent=1 // pred_fallthru
      _
    // Predicated region
    $region74: #{tpu_custom_call.1} parent=1 // pred_check
      _
    $region75: #{tpu_custom_call.1} parent=1 // pred_check_branch
      %5017 = sbr.rel (0) target = $region77
    $region76: #{tpu_custom_call.1} parent=1 // pred_region
      %5018 = dma.done [#allocation3], 256
    $region77: #{tpu_custom_call.1} parent=1 // pred_fallthru
      _
    %5019 = vsyncpa [#allocation3], 1

</llo_original>
